<compile_context>
chip_gen: v7x
topology: tpu7x:2x2x1
jax: 0.10.0
libtpu: 0.0.40
codegen_flags: <defaults>
</compile_context>

<pallas_src>
import functools
import math

import jax
import jax.numpy as jnp
from jax import lax
from jax.experimental import pallas as pl
from jax.experimental.pallas import tpu as pltpu

_VMEM_LIMIT = 32 * 1024 * 1024  # safe on v5e/v6e/v7x; re-derive tiles for v7x (64 MiB phys)


def _pick_nb_tile(nb_pad):
    # nb_pad is a multiple of 16.  Largest multiple-of-16 divisor (<= 512) keeps
    # the per-tile footprint (x block x2 buffers + gi + hs scratch) far below the
    # scoped VMEM limit while keeping M = T*nb_tile large for the MXU.
    for cand in (512, 256, 128, 64, 32, 16):
        if cand <= nb_pad and nb_pad % cand == 0:
            return cand
    return nb_pad


# ----------------- fused GRU + attention pooling (traced helper) -------------
def _gru_attention(x2, wih, bi, whh, bhn, w1, w2, w3, b123, w0row, b0,
                   gi_ref, hs_ref, *, seq_len, act):
    """Single-layer unidirectional GRU (PyTorch gate order [r, z, n]) followed by
    the word/user attention pooling of the reference module.

    x2:      (T*N, I) time-major flattened input (bf16), N % 8 == 0.
    gi_ref:  VMEM scratch (T*N, 3H) f32   (hoisted input projection)
    hs_ref:  VMEM scratch (T*N, H)  f32   (all hidden states, streamed per step)
    Returns the pooled context (N, H) f32.
    """
    f32, bf16 = jnp.float32, jnp.bfloat16
    n = x2.shape[0] // seq_len
    h_dim = whh.shape[0]
    hh2 = 2 * h_dim

    # (a) Hoisted input projection for ALL timesteps: ONE (T*N, I)x(I, 3H) matmul.
    #     bi already holds b_ih (+ b_hh folded in for the r/z gates).
    gi_ref[...] = jnp.dot(x2, wih, preferred_element_type=f32) + bi

    # (b) t = 0 with h_{-1} = 0: no hidden matmul needed.
    g = gi_ref[0:n, :]
    rz = jax.nn.sigmoid(g[:, :hh2])                 # packed r|z sigmoid (one 2H op)
    r, z = rz[:, :h_dim], rz[:, h_dim:]
    h = (1.0 - z) * jnp.tanh(g[:, hh2:] + r * bhn)
    hs_ref[0:n, :] = h

    # (c) Recurrence: ONE packed (N,H)x(H,3H) hidden matmul per step; each h_t is
    #     streamed to VMEM so only the carry stays live in vregs.
    #     (Static trip count; for very long sequences switch to lax.fori_loop
    #      over the same pl.ds windows.)
    for t in range(1, seq_len):
        lo = t * n
        g = gi_ref[lo:lo + n, :]
        gh = jnp.dot(h.astype(bf16), whh, preferred_element_type=f32)   # (N, 3H)
        rz = jax.nn.sigmoid(g[:, :hh2] + gh[:, :hh2])                   # packed r|z
        r, z = rz[:, :h_dim], rz[:, h_dim:]
        c = jnp.tanh(g[:, hh2:] + r * (gh[:, hh2:] + bhn))
        h = (1.0 - z) * c + z * h
        hs_ref[lo:lo + n, :] = h
    h_last = h

    # (d) Batched attention: ONE (T*N,H)x(H,H) matmul for W1 h_t over all t,
    #     one broadcast-add of `base`, one activation, one lane reduce.
    hs_all = hs_ref[...]                                                # (T*N, H)
    proj = jnp.dot(hs_all.astype(bf16), w1, preferred_element_type=f32)  # (T*N, H)

    tot = hs_ref[0:n, :]
    for t in range(1, seq_len):
        tot = tot + hs_ref[t * n:(t + 1) * n, :]
    mean = tot * (1.0 / seq_len)

    base = (jnp.dot(h_last.astype(bf16), w2, preferred_element_type=f32)
            + jnp.dot(mean.astype(bf16), w3, preferred_element_type=f32)
            + b123)                                                     # (N, H)

    zt = proj.reshape(seq_len, n, h_dim) + base[None, :, :]             # aligned split
    if act == "leaky_relu":
        a = jnp.where(zt >= 0, zt, 0.01 * zt)                           # torch default slope
    else:  # "sigmoid"
        a = jax.nn.sigmoid(zt)
    s3 = (jnp.sum(a * w0row[None, :, :], axis=-1, keepdims=True)
          + b0[None, :, :])                                             # (T, N, 1)

    # softmax over the T axis + weighted pooling (cheap unrolled VPU combines).
    m = s3[0]
    for t in range(1, seq_len):
        m = jnp.maximum(m, s3[t])
    e = jnp.exp(s3 - m)                                                 # (T, N, 1)
    denom = e[0]
    for t in range(1, seq_len):
        denom = denom + e[t]
    w = e * pl.reciprocal(denom, approx=True)                           # EUP reciprocal

    pooled = w[0] * hs_ref[0:n, :]
    for t in range(1, seq_len):
        pooled = pooled + w[t] * hs_ref[t * n:(t + 1) * n, :]
    return pooled                                                       # (N, H) f32


# ------------------------------- kernels --------------------------------------
def _word_branch_kernel(x_ref, wih_ref, bi_ref, whh_ref, bhn_ref,
                        w1_ref, w2_ref, w3_ref, b123_ref, w0_ref, b0_ref,
                        out_ref, gi_ref, hs_ref, *, seq_len):
    pooled = _gru_attention(
        x_ref[...], wih_ref[...], bi_ref[...], whh_ref[...], bhn_ref[...],
        w1_ref[...], w2_ref[...], w3_ref[...], b123_ref[...], w0_ref[...],
        b0_ref[...], gi_ref, hs_ref, seq_len=seq_len, act="leaky_relu")
    out_ref[...] = pooled.astype(out_ref.dtype)          # bf16 writeback


def _user_branch_kernel(x_ref, wih_ref, bi_ref, whh_ref, bhn_ref,
                        w1_ref, w2_ref, w3_ref, b123_ref, w0_ref, b0_ref,
                        cand_ref, wc_ref, bc_ref, out_ref, gi_ref, hs_ref, *,
                        seq_len, n_real, n_cand):
    # news-level GRU over the clicked history + sigmoid user attention
    user = _gru_attention(
        x_ref[...], wih_ref[...], bi_ref[...], whh_ref[...], bhn_ref[...],
        w1_ref[...], w2_ref[...], w3_ref[...], b123_ref[...], w0_ref[...],
        b0_ref[...], gi_ref, hs_ref, seq_len=seq_len, act="sigmoid")    # (B_pad, U)
    u = user[0:n_real, :]                                               # (B, U)

    # candidate head: sigmoid(candi_l1(cand_feat)) . user_history_embedding
    # cand_ref is candidate-major: row index = c * B + b.
    cproj = jax.nn.sigmoid(
        jnp.dot(cand_ref[...], wc_ref[...], preferred_element_type=jnp.float32)
        + bc_ref[...])                                                  # (Hc*B, U)

    lane = lax.broadcasted_iota(jnp.int32, (1, n_cand), 1)              # (1, Hc)
    out = jnp.zeros((n_real, n_cand), jnp.float32)
    for c in range(n_cand):                                             # static, small
        col = jnp.sum(cproj[c * n_real:(c + 1) * n_real, :] * u,
                      axis=-1, keepdims=True)                           # (B, 1)
        out = out + jnp.where(lane == c, col, 0.0)                      # place in lane c
    out_ref[...] = out.astype(out_ref.dtype)                            # ONE (B, Hc) store


# --------------------------- pallas_call wrappers ------------------------------
def _run_word_branch(x2, gp, ap, *, seq_len, nb_tile):
    rows, i_dim = x2.shape
    ntiles = rows // (seq_len * nb_tile)
    h_dim = gp["whh"].shape[0]
    weights = (gp["wih"], gp["bi"], gp["whh"], gp["bhn"],
               ap["w1"], ap["w2"], ap["w3"], ap["b123"], ap["w0"], ap["b0"])

    def full_spec(a):
        return pl.BlockSpec(a.shape, lambda j: (0,) * a.ndim)

    kern = functools.partial(_word_branch_kernel, seq_len=seq_len)
    return pl.pallas_call(
        kern,
        out_shape=jax.ShapeDtypeStruct((ntiles * nb_tile, h_dim), jnp.bfloat16),
        grid_spec=pltpu.PrefetchScalarGridSpec(
            num_scalar_prefetch=0,
            grid=(ntiles,),
            in_specs=[pl.BlockSpec((seq_len * nb_tile, i_dim), lambda j: (j, 0))]
                     + [full_spec(w) for w in weights],
            out_specs=pl.BlockSpec((nb_tile, h_dim), lambda j: (j, 0)),
            scratch_shapes=[pltpu.VMEM((seq_len * nb_tile, 3 * h_dim), jnp.float32),
                            pltpu.VMEM((seq_len * nb_tile, h_dim), jnp.float32)]),
        compiler_params=pltpu.CompilerParams(
            dimension_semantics=("parallel",),       # shard tiles across TCs (v7x)
            vmem_limit_bytes=_VMEM_LIMIT),
    )(x2, *weights)


def _run_user_branch(x2, cand2, gp, ap, wc, bc, *, seq_len, n_real, n_cand):
    n_pad = x2.shape[0] // seq_len
    u_dim = gp["whh"].shape[0]
    kern = functools.partial(_user_branch_kernel, seq_len=seq_len,
                             n_real=n_real, n_cand=n_cand)
    return pl.pallas_call(
        kern,
        out_shape=jax.ShapeDtypeStruct((n_real, n_cand), jnp.float32),
        scratch_shapes=[pltpu.VMEM((seq_len * n_pad, 3 * u_dim), jnp.float32),
                        pltpu.VMEM((seq_len * n_pad, u_dim), jnp.float32)],
        compiler_params=pltpu.CompilerParams(vmem_limit_bytes=_VMEM_LIMIT),
    )(x2, gp["wih"], gp["bi"], gp["whh"], gp["bhn"],
      ap["w1"], ap["w2"], ap["w3"], ap["b123"], ap["w0"], ap["b0"],
      cand2, wc, bc)


# ------------------------- parameter preprocessing -----------------------------
def _prep_gru(p):
    """Fold b_hh (r/z) into the hoisted bias, keep w_hh PACKED as one (H, 3H)
    bf16 operand, cast MXU operands to bf16."""
    h = p["w_hh"].shape[0]
    b_ih, b_hh = p["b_ih"], p["b_hh"]
    bi = jnp.concatenate([b_ih[:2 * h] + b_hh[:2 * h], b_ih[2 * h:]])
    return dict(
        wih=p["w_ih"].astype(jnp.bfloat16),
        bi=bi.reshape(1, 3 * h).astype(jnp.float32),
        whh=p["w_hh"].astype(jnp.bfloat16),
        bhn=b_hh[2 * h:3 * h].reshape(1, h).astype(jnp.float32),
    )


def _prep_attn(p):
    d = p["w1"].shape[0]
    return dict(
        w1=p["w1"].astype(jnp.bfloat16),
        w2=p["w2"].astype(jnp.bfloat16),
        w3=p["w3"].astype(jnp.bfloat16),
        b123=(p["b1"] + p["b2"] + p["b3"]).reshape(1, d).astype(jnp.float32),
        w0=p["w0"].reshape(1, d).astype(jnp.float32),
        b0=p["b0"].reshape(1, 1).astype(jnp.float32),
    )


# --------------------------------- forward -------------------------------------
def double_gru_forward(params, clicked, clicked_sub, candidates, candi_sub):
    word_tab = params["word_emb"]
    sub_tab = params["sub_emb"]
    B, Hn, T = clicked.shape
    _, Hc, _ = candidates.shape
    D = params["word_rnn"]["w_hh"].shape[0]

    word_gp = _prep_gru(params["word_rnn"])
    news_gp = _prep_gru(params["news_rnn"])
    word_ap = _prep_attn(params["word_attn"])
    user_ap = _prep_attn(params["user_attn"])
    wc = params["candi_l1_w"].astype(jnp.bfloat16)
    bc = params["candi_l1_b"].reshape(1, -1).astype(jnp.float32)

    # ---- merged word branch: clicked + candidate titles in ONE batch ----
    NB = B * (Hn + Hc)
    NB_pad = -(-NB // 16) * 16                           # 16-align for bf16 tiling
    tok = jnp.concatenate([clicked, candidates], axis=1).reshape(NB, T)
    tok = jnp.pad(tok, ((0, NB_pad - NB), (0, 0)))       # pad seqs with token 0 -> zero emb
    nb_tile = _pick_nb_tile(NB_pad)
    ntiles = NB_pad // nb_tile
    # rows ordered (tile j, time t, seq-within-tile n): each grid step gets a
    # contiguous time-major (T*nb_tile, I) slab -> no in-kernel transposes of x.
    tok_rows = tok.reshape(ntiles, nb_tile, T).transpose(0, 2, 1).reshape(-1)
    # TODO(synk): F.dropout(p=0.2) on word embeddings omitted (inference semantics);
    # the embedding gather stays wrapper-side (in-kernel gather would remove one
    # HBM round trip of x_word).
    x_word = jnp.take(word_tab, tok_rows, axis=0).astype(jnp.bfloat16)  # (NB_pad*T, I)

    pooled = _run_word_branch(x_word, word_gp, word_ap,
                              seq_len=T, nb_tile=nb_tile)               # (NB_pad, D) bf16
    pooled = pooled[:NB].reshape(B, Hn + Hc, D)
    clicked_enc = pooled[:, :Hn, :]                                     # (B, Hn, D)
    cand_enc = pooled[:, Hn:, :]                                        # (B, Hc, D)

    # ---- fused news GRU + user attention + candidate scoring ----
    B_pad = -(-B // 8) * 8                               # 8-align the user batch
    sc_clicked = jnp.take(sub_tab, clicked_sub[:, :, 0], axis=0).astype(jnp.bfloat16)
    news_in = jnp.concatenate([clicked_enc, sc_clicked], axis=2)        # (B, Hn, D+sc)
    news_in = jnp.pad(news_in, ((0, B_pad - B), (0, 0), (0, 0)))
    news_tm = jnp.transpose(news_in, (1, 0, 2)).reshape(Hn * B_pad, -1)  # time-major bf16

    sc_cand = jnp.take(sub_tab, candi_sub[:, :, 0], axis=0).astype(jnp.bfloat16)
    cand_cm = jnp.transpose(jnp.concatenate([cand_enc, sc_cand], axis=2),
                            (1, 0, 2)).reshape(Hc * B, -1)               # candidate-major

    final = _run_user_branch(news_tm, cand_cm, news_gp, user_ap, wc, bc,
                             seq_len=Hn, n_real=B, n_cand=Hc)            # (B, Hc)
    # torch's trailing .squeeze() is a no-op for B, Hc > 1; keep explicit (B, Hc).
    return final


# ------------------------------- parameters -------------------------------------
def init_params(key, *, word_num, word_emb_size, news_emb_size, user_emb_size,
                sc_num, sc_emb):
    keys = list(jax.random.split(key, 32))
    kit = iter(keys)

    def u(shape, fan):
        bound = 1.0 / math.sqrt(fan)
        return jax.random.uniform(next(kit), shape, jnp.float32, -bound, bound)

    word_emb = 0.1 * jax.random.normal(next(kit), (word_num, word_emb_size), jnp.float32)
    word_emb = word_emb.at[0].set(0.0)          # padding_idx = 0
    sub_emb = 0.1 * jax.random.normal(next(kit), (sc_num, sc_emb), jnp.float32)
    sub_emb = sub_emb.at[0].set(0.0)            # padding_idx = 0

    D = news_emb_size            # layer_size = 1 (bidirectional=False)
    U = user_emb_size
    input_size = D + sc_emb

    return dict(
        word_emb=word_emb,
        sub_emb=sub_emb,
        word_rnn=dict(w_ih=u((word_emb_size, 3 * D), D), w_hh=u((D, 3 * D), D),
                      b_ih=u((3 * D,), D), b_hh=u((3 * D,), D)),
        news_rnn=dict(w_ih=u((input_size, 3 * U), U), w_hh=u((U, 3 * U), U),
                      b_ih=u((3 * U,), U), b_hh=u((3 * U,), U)),
        word_attn=dict(w1=u((D, D), D), b1=u((D,), D),
                       w2=u((D, D), D), b2=u((D,), D),
                       w3=u((D, D), D), b3=u((D,), D),
                       w0=u((D, 1), D), b0=u((1,), D)),
        user_attn=dict(w1=u((U, U), U), b1=u((U,), U),
                       w2=u((U, U), U), b2=u((U,), U),
                       w3=u((U, U), U), b3=u((U,), U),
                       w0=u((U, 1), U), b0=u((1,), U)),
        candi_l1_w=u((input_size, U), input_size),
        candi_l1_b=u((U,), input_size),
    )


if __name__ == "__main__":
    # Module config (bidirectional=False -> layer_size = 1)
    WORD_NUM, WORD_EMB = 50, 32
    NEWS_EMB, USER_EMB = 32, 32
    SC_NUM, SC_EMB = 10, 8

    B, HIST, TITLE = 2, 4, 8     # batch, clicked-history length, title length
    NCAND = 4                    # candidates per user (shares batch dim B)

    root = jax.random.PRNGKey(0)
    kp, k1, k2, k3, k4 = jax.random.split(root, 5)

    params = init_params(kp, word_num=WORD_NUM, word_emb_size=WORD_EMB,
                         news_emb_size=NEWS_EMB, user_emb_size=USER_EMB,
                         sc_num=SC_NUM, sc_emb=SC_EMB)

    clicked = jax.random.randint(k1, (B, HIST, TITLE), 0, WORD_NUM, jnp.int32)
    clicked_sub = jax.random.randint(k2, (B, HIST, 2), 0, SC_NUM, jnp.int32)
    candidates = jax.random.randint(k3, (B, NCAND, TITLE), 0, WORD_NUM, jnp.int32)
    candi_sub = jax.random.randint(k4, (B, NCAND, 2), 0, SC_NUM, jnp.int32)

    fwd = jax.jit(double_gru_forward)
    out = jax.block_until_ready(fwd(params, clicked, clicked_sub, candidates, candi_sub))

    assert out.shape == (B, NCAND), out.shape
    assert bool(jnp.all(jnp.isfinite(out)))
    print("KERNEL_OK")
</pallas_src>

<mosaic_0001>
module attributes {stable_mosaic.version = 11 : i64} {
  func.func @_user_branch_kernel(%arg0: memref<32x40xbf16, #tpu.memory_space<vmem>>, %arg1: memref<40x96xbf16, #tpu.memory_space<vmem>>, %arg2: memref<1x96xf32, #tpu.memory_space<vmem>>, %arg3: memref<32x96xbf16, #tpu.memory_space<vmem>>, %arg4: memref<1x32xf32, #tpu.memory_space<vmem>>, %arg5: memref<32x32xbf16, #tpu.memory_space<vmem>>, %arg6: memref<32x32xbf16, #tpu.memory_space<vmem>>, %arg7: memref<32x32xbf16, #tpu.memory_space<vmem>>, %arg8: memref<1x32xf32, #tpu.memory_space<vmem>>, %arg9: memref<1x32xf32, #tpu.memory_space<vmem>>, %arg10: memref<1x1xf32, #tpu.memory_space<vmem>>, %arg11: memref<8x40xbf16, #tpu.memory_space<vmem>>, %arg12: memref<40x32xbf16, #tpu.memory_space<vmem>>, %arg13: memref<1x32xf32, #tpu.memory_space<vmem>>, %arg14: memref<2x4xf32, #tpu.memory_space<vmem>>, %arg15: memref<32x96xf32, #tpu.memory_space<vmem>>, %arg16: memref<32x32xf32, #tpu.memory_space<vmem>>) attributes {dimension_semantics = [], scalar_prefetch = 0 : i64, scratch_operands = 2 : i64, tpu.core_type = #tpu.core_type<tc>} {
    %c0 = arith.constant 0 : index
    %c0_0 = arith.constant 0 : index
    %0 = vector.load %arg0[%c0, %c0_0] : memref<32x40xbf16, #tpu.memory_space<vmem>>, vector<32x40xbf16>
    %c0_1 = arith.constant 0 : index
    %c0_2 = arith.constant 0 : index
    %1 = vector.load %arg1[%c0_1, %c0_2] : memref<40x96xbf16, #tpu.memory_space<vmem>>, vector<40x96xbf16>
    %c0_3 = arith.constant 0 : index
    %c0_4 = arith.constant 0 : index
    %2 = vector.load %arg2[%c0_3, %c0_4] : memref<1x96xf32, #tpu.memory_space<vmem>>, vector<1x96xf32>
    %c0_5 = arith.constant 0 : index
    %c0_6 = arith.constant 0 : index
    %3 = vector.load %arg3[%c0_5, %c0_6] : memref<32x96xbf16, #tpu.memory_space<vmem>>, vector<32x96xbf16>
    %c0_7 = arith.constant 0 : index
    %c0_8 = arith.constant 0 : index
    %4 = vector.load %arg4[%c0_7, %c0_8] : memref<1x32xf32, #tpu.memory_space<vmem>>, vector<1x32xf32>
    %c0_9 = arith.constant 0 : index
    %c0_10 = arith.constant 0 : index
    %5 = vector.load %arg5[%c0_9, %c0_10] : memref<32x32xbf16, #tpu.memory_space<vmem>>, vector<32x32xbf16>
    %c0_11 = arith.constant 0 : index
    %c0_12 = arith.constant 0 : index
    %6 = vector.load %arg6[%c0_11, %c0_12] : memref<32x32xbf16, #tpu.memory_space<vmem>>, vector<32x32xbf16>
    %c0_13 = arith.constant 0 : index
    %c0_14 = arith.constant 0 : index
    %7 = vector.load %arg7[%c0_13, %c0_14] : memref<32x32xbf16, #tpu.memory_space<vmem>>, vector<32x32xbf16>
    %c0_15 = arith.constant 0 : index
    %c0_16 = arith.constant 0 : index
    %8 = vector.load %arg8[%c0_15, %c0_16] : memref<1x32xf32, #tpu.memory_space<vmem>>, vector<1x32xf32>
    %c0_17 = arith.constant 0 : index
    %c0_18 = arith.constant 0 : index
    %9 = vector.load %arg9[%c0_17, %c0_18] : memref<1x32xf32, #tpu.memory_space<vmem>>, vector<1x32xf32>
    %c0_19 = arith.constant 0 : index
    %c0_20 = arith.constant 0 : index
    %10 = vector.load %arg10[%c0_19, %c0_20] : memref<1x1xf32, #tpu.memory_space<vmem>>, vector<1x1xf32>
    %cst = arith.constant dense<0.000000e+00> : vector<32x96xf32>
    %11 = tpu.matmul %0, %1, %cst {dimension_numbers = #tpu.dot_dimension_numbers<[1], [0], [0], [1], [0, 0, 1, 1], [], []>} : vector<32x40xbf16>, vector<40x96xbf16>, vector<32x96xf32> -> vector<32x96xf32>
    %12 = vector.broadcast %2 : vector<1x96xf32> to vector<32x96xf32>
    %13 = arith.addf %11, %12 : vector<32x96xf32>
    %c0_21 = arith.constant 0 : index
    %c0_22 = arith.constant 0 : index
    %14 = vector.load %arg15[%c0_21, %c0_22] : memref<32x96xf32, #tpu.memory_space<vmem>>, vector<32x96xf32>
    tpu.vector_store %arg15[%c0_21, %c0_22], %13 {strides = array<i32>} : memref<32x96xf32, #tpu.memory_space<vmem>>, vector<32x96xf32>,
    %c0_23 = arith.constant 0 : index
    %c0_24 = arith.constant 0 : index
    %15 = vector.load %arg15[%c0_23, %c0_24] : memref<32x96xf32, #tpu.memory_space<vmem>>, vector<8x96xf32>
    %16 = vector.extract_strided_slice %15 {offsets = [0, 0], sizes = [8, 64], strides = [1, 1]} : vector<8x96xf32> to vector<8x64xf32>
    %17 = arith.negf %16 : vector<8x64xf32>
    %18 = math.exp %17 : vector<8x64xf32>
    %cst_25 = arith.constant 1.000000e+00 : f32
    %19 = vector.broadcast %cst_25 : f32 to vector<8x64xf32>
    %20 = arith.addf %19, %18 : vector<8x64xf32>
    %21 = arith.divf %19, %20 : vector<8x64xf32>
    %22 = vector.extract_strided_slice %21 {offsets = [0, 0], sizes = [8, 32], strides = [1, 1]} : vector<8x64xf32> to vector<8x32xf32>
    %23 = vector.extract_strided_slice %21 {offsets = [0, 32], sizes = [8, 32], strides = [1, 1]} : vector<8x64xf32> to vector<8x32xf32>
    %cst_26 = arith.constant 1.000000e+00 : f32
    %24 = vector.broadcast %cst_26 : f32 to vector<8x32xf32>
    %25 = arith.subf %24, %23 : vector<8x32xf32>
    %26 = vector.extract_strided_slice %15 {offsets = [0, 64], sizes = [8, 32], strides = [1, 1]} : vector<8x96xf32> to vector<8x32xf32>
    %27 = vector.broadcast %4 : vector<1x32xf32> to vector<8x32xf32>
    %28 = arith.mulf %22, %27 : vector<8x32xf32>
    %29 = arith.addf %26, %28 : vector<8x32xf32>
    %30 = math.tanh %29 : vector<8x32xf32>
    %31 = arith.mulf %25, %30 : vector<8x32xf32>
    %c0_27 = arith.constant 0 : index
    %c0_28 = arith.constant 0 : index
    %32 = vector.load %arg16[%c0_27, %c0_28] : memref<32x32xf32, #tpu.memory_space<vmem>>, vector<8x32xf32>
    tpu.vector_store %arg16[%c0_27, %c0_28], %31 {strides = array<i32>} : memref<32x32xf32, #tpu.memory_space<vmem>>, vector<8x32xf32>,
    %c8 = arith.constant 8 : index
    %c0_29 = arith.constant 0 : index
    %33 = vector.load %arg15[%c8, %c0_29] : memref<32x96xf32, #tpu.memory_space<vmem>>, vector<8x96xf32>
    %34 = arith.truncf %31 : vector<8x32xf32> to vector<8x32xbf16>
    %cst_30 = arith.constant dense<0.000000e+00> : vector<8x96xf32>
    %35 = tpu.matmul %34, %3, %cst_30 {dimension_numbers = #tpu.dot_dimension_numbers<[1], [0], [0], [1], [0, 0, 1, 1], [], []>} : vector<8x32xbf16>, vector<32x96xbf16>, vector<8x96xf32> -> vector<8x96xf32>
    %36 = vector.extract_strided_slice %33 {offsets = [0, 0], sizes = [8, 64], strides = [1, 1]} : vector<8x96xf32> to vector<8x64xf32>
    %37 = vector.extract_strided_slice %35 {offsets = [0, 0], sizes = [8, 64], strides = [1, 1]} : vector<8x96xf32> to vector<8x64xf32>
    %38 = arith.addf %36, %37 : vector<8x64xf32>
    %39 = arith.negf %38 : vector<8x64xf32>
    %40 = math.exp %39 : vector<8x64xf32>
    %cst_31 = arith.constant 1.000000e+00 : f32
    %41 = vector.broadcast %cst_31 : f32 to vector<8x64xf32>
    %42 = arith.addf %41, %40 : vector<8x64xf32>
    %43 = arith.divf %41, %42 : vector<8x64xf32>
    %44 = vector.extract_strided_slice %43 {offsets = [0, 0], sizes = [8, 32], strides = [1, 1]} : vector<8x64xf32> to vector<8x32xf32>
    %45 = vector.extract_strided_slice %43 {offsets = [0, 32], sizes = [8, 32], strides = [1, 1]} : vector<8x64xf32> to vector<8x32xf32>
    %46 = vector.extract_strided_slice %33 {offsets = [0, 64], sizes = [8, 32], strides = [1, 1]} : vector<8x96xf32> to vector<8x32xf32>
    %47 = vector.extract_strided_slice %35 {offsets = [0, 64], sizes = [8, 32], strides = [1, 1]} : vector<8x96xf32> to vector<8x32xf32>
    %48 = vector.broadcast %4 : vector<1x32xf32> to vector<8x32xf32>
    %49 = arith.addf %47, %48 : vector<8x32xf32>
    %50 = arith.mulf %44, %49 : vector<8x32xf32>
    %51 = arith.addf %46, %50 : vector<8x32xf32>
    %52 = math.tanh %51 : vector<8x32xf32>
    %cst_32 = arith.constant 1.000000e+00 : f32
    %53 = vector.broadcast %cst_32 : f32 to vector<8x32xf32>
    %54 = arith.subf %53, %45 : vector<8x32xf32>
    %55 = arith.mulf %54, %52 : vector<8x32xf32>
    %56 = arith.mulf %45, %31 : vector<8x32xf32>
    %57 = arith.addf %55, %56 : vector<8x32xf32>
    %c8_33 = arith.constant 8 : index
    %c0_34 = arith.constant 0 : index
    %58 = vector.load %arg16[%c8_33, %c0_34] : memref<32x32xf32, #tpu.memory_space<vmem>>, vector<8x32xf32>
    tpu.vector_store %arg16[%c8_33, %c0_34], %57 {strides = array<i32>} : memref<32x32xf32, #tpu.memory_space<vmem>>, vector<8x32xf32>,
    %c16 = arith.constant 16 : index
    %c0_35 = arith.constant 0 : index
    %59 = vector.load %arg15[%c16, %c0_35] : memref<32x96xf32, #tpu.memory_space<vmem>>, vector<8x96xf32>
    %60 = arith.truncf %57 : vector<8x32xf32> to vector<8x32xbf16>
    %cst_36 = arith.constant dense<0.000000e+00> : vector<8x96xf32>
    %61 = tpu.matmul %60, %3, %cst_36 {dimension_numbers = #tpu.dot_dimension_numbers<[1], [0], [0], [1], [0, 0, 1, 1], [], []>} : vector<8x32xbf16>, vector<32x96xbf16>, vector<8x96xf32> -> vector<8x96xf32>
    %62 = vector.extract_strided_slice %59 {offsets = [0, 0], sizes = [8, 64], strides = [1, 1]} : vector<8x96xf32> to vector<8x64xf32>
    %63 = vector.extract_strided_slice %61 {offsets = [0, 0], sizes = [8, 64], strides = [1, 1]} : vector<8x96xf32> to vector<8x64xf32>
    %64 = arith.addf %62, %63 : vector<8x64xf32>
    %65 = arith.negf %64 : vector<8x64xf32>
    %66 = math.exp %65 : vector<8x64xf32>
    %cst_37 = arith.constant 1.000000e+00 : f32
    %67 = vector.broadcast %cst_37 : f32 to vector<8x64xf32>
    %68 = arith.addf %67, %66 : vector<8x64xf32>
    %69 = arith.divf %67, %68 : vector<8x64xf32>
    %70 = vector.extract_strided_slice %69 {offsets = [0, 0], sizes = [8, 32], strides = [1, 1]} : vector<8x64xf32> to vector<8x32xf32>
    %71 = vector.extract_strided_slice %69 {offsets = [0, 32], sizes = [8, 32], strides = [1, 1]} : vector<8x64xf32> to vector<8x32xf32>
    %72 = vector.extract_strided_slice %59 {offsets = [0, 64], sizes = [8, 32], strides = [1, 1]} : vector<8x96xf32> to vector<8x32xf32>
    %73 = vector.extract_strided_slice %61 {offsets = [0, 64], sizes = [8, 32], strides = [1, 1]} : vector<8x96xf32> to vector<8x32xf32>
    %74 = vector.broadcast %4 : vector<1x32xf32> to vector<8x32xf32>
    %75 = arith.addf %73, %74 : vector<8x32xf32>
    %76 = arith.mulf %70, %75 : vector<8x32xf32>
    %77 = arith.addf %72, %76 : vector<8x32xf32>
    %78 = math.tanh %77 : vector<8x32xf32>
    %cst_38 = arith.constant 1.000000e+00 : f32
    %79 = vector.broadcast %cst_38 : f32 to vector<8x32xf32>
    %80 = arith.subf %79, %71 : vector<8x32xf32>
    %81 = arith.mulf %80, %78 : vector<8x32xf32>
    %82 = arith.mulf %71, %57 : vector<8x32xf32>
    %83 = arith.addf %81, %82 : vector<8x32xf32>
    %c16_39 = arith.constant 16 : index
    %c0_40 = arith.constant 0 : index
    %84 = vector.load %arg16[%c16_39, %c0_40] : memref<32x32xf32, #tpu.memory_space<vmem>>, vector<8x32xf32>
    tpu.vector_store %arg16[%c16_39, %c0_40], %83 {strides = array<i32>} : memref<32x32xf32, #tpu.memory_space<vmem>>, vector<8x32xf32>,
    %c24 = arith.constant 24 : index
    %c0_41 = arith.constant 0 : index
    %85 = vector.load %arg15[%c24, %c0_41] : memref<32x96xf32, #tpu.memory_space<vmem>>, vector<8x96xf32>
    %86 = arith.truncf %83 : vector<8x32xf32> to vector<8x32xbf16>
    %cst_42 = arith.constant dense<0.000000e+00> : vector<8x96xf32>
    %87 = tpu.matmul %86, %3, %cst_42 {dimension_numbers = #tpu.dot_dimension_numbers<[1], [0], [0], [1], [0, 0, 1, 1], [], []>} : vector<8x32xbf16>, vector<32x96xbf16>, vector<8x96xf32> -> vector<8x96xf32>
    %88 = vector.extract_strided_slice %85 {offsets = [0, 0], sizes = [8, 64], strides = [1, 1]} : vector<8x96xf32> to vector<8x64xf32>
    %89 = vector.extract_strided_slice %87 {offsets = [0, 0], sizes = [8, 64], strides = [1, 1]} : vector<8x96xf32> to vector<8x64xf32>
    %90 = arith.addf %88, %89 : vector<8x64xf32>
    %91 = arith.negf %90 : vector<8x64xf32>
    %92 = math.exp %91 : vector<8x64xf32>
    %cst_43 = arith.constant 1.000000e+00 : f32
    %93 = vector.broadcast %cst_43 : f32 to vector<8x64xf32>
    %94 = arith.addf %93, %92 : vector<8x64xf32>
    %95 = arith.divf %93, %94 : vector<8x64xf32>
    %96 = vector.extract_strided_slice %95 {offsets = [0, 0], sizes = [8, 32], strides = [1, 1]} : vector<8x64xf32> to vector<8x32xf32>
    %97 = vector.extract_strided_slice %95 {offsets = [0, 32], sizes = [8, 32], strides = [1, 1]} : vector<8x64xf32> to vector<8x32xf32>
    %98 = vector.extract_strided_slice %85 {offsets = [0, 64], sizes = [8, 32], strides = [1, 1]} : vector<8x96xf32> to vector<8x32xf32>
    %99 = vector.extract_strided_slice %87 {offsets = [0, 64], sizes = [8, 32], strides = [1, 1]} : vector<8x96xf32> to vector<8x32xf32>
    %100 = vector.broadcast %4 : vector<1x32xf32> to vector<8x32xf32>
    %101 = arith.addf %99, %100 : vector<8x32xf32>
    %102 = arith.mulf %96, %101 : vector<8x32xf32>
    %103 = arith.addf %98, %102 : vector<8x32xf32>
    %104 = math.tanh %103 : vector<8x32xf32>
    %cst_44 = arith.constant 1.000000e+00 : f32
    %105 = vector.broadcast %cst_44 : f32 to vector<8x32xf32>
    %106 = arith.subf %105, %97 : vector<8x32xf32>
    %107 = arith.mulf %106, %104 : vector<8x32xf32>
    %108 = arith.mulf %97, %83 : vector<8x32xf32>
    %109 = arith.addf %107, %108 : vector<8x32xf32>
    %c24_45 = arith.constant 24 : index
    %c0_46 = arith.constant 0 : index
    %110 = vector.load %arg16[%c24_45, %c0_46] : memref<32x32xf32, #tpu.memory_space<vmem>>, vector<8x32xf32>
    tpu.vector_store %arg16[%c24_45, %c0_46], %109 {strides = array<i32>} : memref<32x32xf32, #tpu.memory_space<vmem>>, vector<8x32xf32>,
    %c0_47 = arith.constant 0 : index
    %c0_48 = arith.constant 0 : index
    %111 = vector.load %arg16[%c0_47, %c0_48] : memref<32x32xf32, #tpu.memory_space<vmem>>, vector<32x32xf32>
    %112 = arith.truncf %111 : vector<32x32xf32> to vector<32x32xbf16>
    %cst_49 = arith.constant dense<0.000000e+00> : vector<32x32xf32>
    %113 = tpu.matmul %112, %5, %cst_49 {dimension_numbers = #tpu.dot_dimension_numbers<[1], [0], [0], [1], [0, 0, 1, 1], [], []>} : vector<32x32xbf16>, vector<32x32xbf16>, vector<32x32xf32> -> vector<32x32xf32>
    %c0_50 = arith.constant 0 : index
    %c0_51 = arith.constant 0 : index
    %114 = vector.load %arg16[%c0_50, %c0_51] : memref<32x32xf32, #tpu.memory_space<vmem>>, vector<8x32xf32>
    %c8_52 = arith.constant 8 : index
    %c0_53 = arith.constant 0 : index
    %115 = vector.load %arg16[%c8_52, %c0_53] : memref<32x32xf32, #tpu.memory_space<vmem>>, vector<8x32xf32>
    %116 = arith.addf %114, %115 : vector<8x32xf32>
    %c16_54 = arith.constant 16 : index
    %c0_55 = arith.constant 0 : index
    %117 = vector.load %arg16[%c16_54, %c0_55] : memref<32x32xf32, #tpu.memory_space<vmem>>, vector<8x32xf32>
    %118 = arith.addf %116, %117 : vector<8x32xf32>
    %c24_56 = arith.constant 24 : index
    %c0_57 = arith.constant 0 : index
    %119 = vector.load %arg16[%c24_56, %c0_57] : memref<32x32xf32, #tpu.memory_space<vmem>>, vector<8x32xf32>
    %120 = arith.addf %118, %119 : vector<8x32xf32>
    %cst_58 = arith.constant 2.500000e-01 : f32
    %121 = vector.broadcast %cst_58 : f32 to vector<8x32xf32>
    %122 = arith.mulf %120, %121 : vector<8x32xf32>
    %123 = arith.truncf %109 : vector<8x32xf32> to vector<8x32xbf16>
    %cst_59 = arith.constant dense<0.000000e+00> : vector<8x32xf32>
    %124 = tpu.matmul %123, %6, %cst_59 {dimension_numbers = #tpu.dot_dimension_numbers<[1], [0], [0], [1], [0, 0, 1, 1], [], []>} : vector<8x32xbf16>, vector<32x32xbf16>, vector<8x32xf32> -> vector<8x32xf32>
    %125 = arith.truncf %122 : vector<8x32xf32> to vector<8x32xbf16>
    %cst_60 = arith.constant dense<0.000000e+00> : vector<8x32xf32>
    %126 = tpu.matmul %125, %7, %cst_60 {dimension_numbers = #tpu.dot_dimension_numbers<[1], [0], [0], [1], [0, 0, 1, 1], [], []>} : vector<8x32xbf16>, vector<32x32xbf16>, vector<8x32xf32> -> vector<8x32xf32>
    %127 = arith.addf %124, %126 : vector<8x32xf32>
    %128 = vector.broadcast %8 : vector<1x32xf32> to vector<8x32xf32>
    %129 = arith.addf %127, %128 : vector<8x32xf32>
    %130 = vector.shape_cast %113 : vector<32x32xf32> to vector<4x8x32xf32>
    %131 = vector.shape_cast %129 : vector<8x32xf32> to vector<1x8x32xf32>
    %132 = vector.broadcast %131 : vector<1x8x32xf32> to vector<4x8x32xf32>
    %133 = arith.addf %130, %132 : vector<4x8x32xf32>
    %134 = arith.negf %133 : vector<4x8x32xf32>
    %135 = math.exp %134 : vector<4x8x32xf32>
    %cst_61 = arith.constant 1.000000e+00 : f32
    %136 = vector.broadcast %cst_61 : f32 to vector<4x8x32xf32>
    %137 = arith.addf %136, %135 : vector<4x8x32xf32>
    %138 = arith.divf %136, %137 : vector<4x8x32xf32>
    %139 = vector.shape_cast %9 : vector<1x32xf32> to vector<1x1x32xf32>
    %140 = vector.broadcast %139 : vector<1x1x32xf32> to vector<4x8x32xf32>
    %141 = arith.mulf %138, %140 : vector<4x8x32xf32>
    %cst_62 = arith.constant dense<0.000000e+00> : vector<4x8xf32>
    %142 = vector.multi_reduction <add>, %141, %cst_62 [2] : vector<4x8x32xf32> to vector<4x8xf32>
    %143 = vector.shape_cast %142 : vector<4x8xf32> to vector<4x8x1xf32>
    %144 = vector.shape_cast %10 : vector<1x1xf32> to vector<1x1x1xf32>
    %145 = vector.broadcast %144 : vector<1x1x1xf32> to vector<4x8x1xf32>
    %146 = arith.addf %143, %145 : vector<4x8x1xf32>
    %147 = vector.extract_strided_slice %146 {offsets = [0, 0, 0], sizes = [1, 8, 1], strides = [1, 1, 1]} : vector<4x8x1xf32> to vector<1x8x1xf32>
    %148 = vector.shape_cast %147 : vector<1x8x1xf32> to vector<8x1xf32>
    %149 = vector.extract_strided_slice %146 {offsets = [1, 0, 0], sizes = [1, 8, 1], strides = [1, 1, 1]} : vector<4x8x1xf32> to vector<1x8x1xf32>
    %150 = vector.shape_cast %149 : vector<1x8x1xf32> to vector<8x1xf32>
    %151 = arith.maximumf %148, %150 : vector<8x1xf32>
    %152 = vector.extract_strided_slice %146 {offsets = [2, 0, 0], sizes = [1, 8, 1], strides = [1, 1, 1]} : vector<4x8x1xf32> to vector<1x8x1xf32>
    %153 = vector.shape_cast %152 : vector<1x8x1xf32> to vector<8x1xf32>
    %154 = arith.maximumf %151, %153 : vector<8x1xf32>
    %155 = vector.extract_strided_slice %146 {offsets = [3, 0, 0], sizes = [1, 8, 1], strides = [1, 1, 1]} : vector<4x8x1xf32> to vector<1x8x1xf32>
    %156 = vector.shape_cast %155 : vector<1x8x1xf32> to vector<8x1xf32>
    %157 = arith.maximumf %154, %156 : vector<8x1xf32>
    %158 = vector.shape_cast %157 : vector<8x1xf32> to vector<1x8x1xf32>
    %159 = vector.broadcast %158 : vector<1x8x1xf32> to vector<4x8x1xf32>
    %160 = arith.subf %146, %159 : vector<4x8x1xf32>
    %161 = math.exp %160 : vector<4x8x1xf32>
    %162 = vector.extract_strided_slice %161 {offsets = [0, 0, 0], sizes = [1, 8, 1], strides = [1, 1, 1]} : vector<4x8x1xf32> to vector<1x8x1xf32>
    %163 = vector.shape_cast %162 : vector<1x8x1xf32> to vector<8x1xf32>
    %164 = vector.extract_strided_slice %161 {offsets = [1, 0, 0], sizes = [1, 8, 1], strides = [1, 1, 1]} : vector<4x8x1xf32> to vector<1x8x1xf32>
    %165 = vector.shape_cast %164 : vector<1x8x1xf32> to vector<8x1xf32>
    %166 = arith.addf %163, %165 : vector<8x1xf32>
    %167 = vector.extract_strided_slice %161 {offsets = [2, 0, 0], sizes = [1, 8, 1], strides = [1, 1, 1]} : vector<4x8x1xf32> to vector<1x8x1xf32>
    %168 = vector.shape_cast %167 : vector<1x8x1xf32> to vector<8x1xf32>
    %169 = arith.addf %166, %168 : vector<8x1xf32>
    %170 = vector.extract_strided_slice %161 {offsets = [3, 0, 0], sizes = [1, 8, 1], strides = [1, 1, 1]} : vector<4x8x1xf32> to vector<1x8x1xf32>
    %171 = vector.shape_cast %170 : vector<1x8x1xf32> to vector<8x1xf32>
    %172 = arith.addf %169, %171 : vector<8x1xf32>
    %173 = tpu.reciprocal %172 {approx = true} : vector<8x1xf32> -> vector<8x1xf32>
    %174 = vector.shape_cast %173 : vector<8x1xf32> to vector<1x8x1xf32>
    %175 = vector.broadcast %174 : vector<1x8x1xf32> to vector<4x8x1xf32>
    %176 = arith.mulf %161, %175 : vector<4x8x1xf32>
    %177 = vector.extract_strided_slice %176 {offsets = [0, 0, 0], sizes = [1, 8, 1], strides = [1, 1, 1]} : vector<4x8x1xf32> to vector<1x8x1xf32>
    %178 = vector.shape_cast %177 : vector<1x8x1xf32> to vector<8x1xf32>
    %c0_63 = arith.constant 0 : index
    %c0_64 = arith.constant 0 : index
    %179 = vector.load %arg16[%c0_63, %c0_64] : memref<32x32xf32, #tpu.memory_space<vmem>>, vector<8x32xf32>
    %180 = vector.broadcast %178 : vector<8x1xf32> to vector<8x32xf32>
    %181 = arith.mulf %180, %179 : vector<8x32xf32>
    %182 = vector.extract_strided_slice %176 {offsets = [1, 0, 0], sizes = [1, 8, 1], strides = [1, 1, 1]} : vector<4x8x1xf32> to vector<1x8x1xf32>
    %183 = vector.shape_cast %182 : vector<1x8x1xf32> to vector<8x1xf32>
    %c8_65 = arith.constant 8 : index
    %c0_66 = arith.constant 0 : index
    %184 = vector.load %arg16[%c8_65, %c0_66] : memref<32x32xf32, #tpu.memory_space<vmem>>, vector<8x32xf32>
    %185 = vector.broadcast %183 : vector<8x1xf32> to vector<8x32xf32>
    %186 = arith.mulf %185, %184 : vector<8x32xf32>
    %187 = arith.addf %181, %186 : vector<8x32xf32>
    %188 = vector.extract_strided_slice %176 {offsets = [2, 0, 0], sizes = [1, 8, 1], strides = [1, 1, 1]} : vector<4x8x1xf32> to vector<1x8x1xf32>
    %189 = vector.shape_cast %188 : vector<1x8x1xf32> to vector<8x1xf32>
    %c16_67 = arith.constant 16 : index
    %c0_68 = arith.constant 0 : index
    %190 = vector.load %arg16[%c16_67, %c0_68] : memref<32x32xf32, #tpu.memory_space<vmem>>, vector<8x32xf32>
    %191 = vector.broadcast %189 : vector<8x1xf32> to vector<8x32xf32>
    %192 = arith.mulf %191, %190 : vector<8x32xf32>
    %193 = arith.addf %187, %192 : vector<8x32xf32>
    %194 = vector.extract_strided_slice %176 {offsets = [3, 0, 0], sizes = [1, 8, 1], strides = [1, 1, 1]} : vector<4x8x1xf32> to vector<1x8x1xf32>
    %195 = vector.shape_cast %194 : vector<1x8x1xf32> to vector<8x1xf32>
    %c24_69 = arith.constant 24 : index
    %c0_70 = arith.constant 0 : index
    %196 = vector.load %arg16[%c24_69, %c0_70] : memref<32x32xf32, #tpu.memory_space<vmem>>, vector<8x32xf32>
    %197 = vector.broadcast %195 : vector<8x1xf32> to vector<8x32xf32>
    %198 = arith.mulf %197, %196 : vector<8x32xf32>
    %199 = arith.addf %193, %198 : vector<8x32xf32>
    %200 = vector.extract_strided_slice %199 {offsets = [0, 0], sizes = [2, 32], strides = [1, 1]} : vector<8x32xf32> to vector<2x32xf32>
    %c0_71 = arith.constant 0 : index
    %c0_72 = arith.constant 0 : index
    %201 = vector.load %arg11[%c0_71, %c0_72] : memref<8x40xbf16, #tpu.memory_space<vmem>>, vector<8x40xbf16>
    %c0_73 = arith.constant 0 : index
    %c0_74 = arith.constant 0 : index
    %202 = vector.load %arg12[%c0_73, %c0_74] : memref<40x32xbf16, #tpu.memory_space<vmem>>, vector<40x32xbf16>
    %cst_75 = arith.constant dense<0.000000e+00> : vector<8x32xf32>
    %203 = tpu.matmul %201, %202, %cst_75 {dimension_numbers = #tpu.dot_dimension_numbers<[1], [0], [0], [1], [0, 0, 1, 1], [], []>} : vector<8x40xbf16>, vector<40x32xbf16>, vector<8x32xf32> -> vector<8x32xf32>
    %c0_76 = arith.constant 0 : index
    %c0_77 = arith.constant 0 : index
    %204 = vector.load %arg13[%c0_76, %c0_77] : memref<1x32xf32, #tpu.memory_space<vmem>>, vector<1x32xf32>
    %205 = vector.broadcast %204 : vector<1x32xf32> to vector<8x32xf32>
    %206 = arith.addf %203, %205 : vector<8x32xf32>
    %207 = arith.negf %206 : vector<8x32xf32>
    %208 = math.exp %207 : vector<8x32xf32>
    %cst_78 = arith.constant 1.000000e+00 : f32
    %209 = vector.broadcast %cst_78 : f32 to vector<8x32xf32>
    %210 = arith.addf %209, %208 : vector<8x32xf32>
    %211 = arith.divf %209, %210 : vector<8x32xf32>
    %212 = tpu.iota {dimensions = array<i32: 1>} : vector<1x4xi32>
    %cst_79 = arith.constant 0.000000e+00 : f32
    %213 = vector.broadcast %cst_79 : f32 to vector<2x4xf32>
    %214 = vector.extract_strided_slice %211 {offsets = [0, 0], sizes = [2, 32], strides = [1, 1]} : vector<8x32xf32> to vector<2x32xf32>
    %215 = arith.mulf %214, %200 : vector<2x32xf32>
    %cst_80 = arith.constant dense<0.000000e+00> : vector<2xf32>
    %216 = vector.multi_reduction <add>, %215, %cst_80 [1] : vector<2x32xf32> to vector<2xf32>
    %217 = vector.shape_cast %216 : vector<2xf32> to vector<2x1xf32>
    %c0_i32 = arith.constant 0 : i32
    %218 = vector.broadcast %c0_i32 : i32 to vector<1x4xi32>
    %219 = arith.cmpi eq, %212, %218 : vector<1x4xi32>
    %cst_81 = arith.constant 0.000000e+00 : f32
    %220 = vector.shape_cast %219 : vector<1x4xi1> to vector<1x4xi1>
    %221 = vector.broadcast %220 : vector<1x4xi1> to vector<2x4xi1>
    %222 = vector.shape_cast %217 : vector<2x1xf32> to vector<2x1xf32>
    %223 = vector.broadcast %222 : vector<2x1xf32> to vector<2x4xf32>
    %224 = vector.broadcast %cst_81 : f32 to vector<2x4xf32>
    %225 = arith.select %221, %223, %224 : vector<2x4xi1>, vector<2x4xf32>
    %226 = arith.addf %213, %225 : vector<2x4xf32>
    %227 = vector.extract_strided_slice %211 {offsets = [2, 0], sizes = [2, 32], strides = [1, 1]} : vector<8x32xf32> to vector<2x32xf32>
    %228 = arith.mulf %227, %200 : vector<2x32xf32>
    %cst_82 = arith.constant dense<0.000000e+00> : vector<2xf32>
    %229 = vector.multi_reduction <add>, %228, %cst_82 [1] : vector<2x32xf32> to vector<2xf32>
    %230 = vector.shape_cast %229 : vector<2xf32> to vector<2x1xf32>
    %c1_i32 = arith.constant 1 : i32
    %231 = vector.broadcast %c1_i32 : i32 to vector<1x4xi32>
    %232 = arith.cmpi eq, %212, %231 : vector<1x4xi32>
    %cst_83 = arith.constant 0.000000e+00 : f32
    %233 = vector.shape_cast %232 : vector<1x4xi1> to vector<1x4xi1>
    %234 = vector.broadcast %233 : vector<1x4xi1> to vector<2x4xi1>
    %235 = vector.shape_cast %230 : vector<2x1xf32> to vector<2x1xf32>
    %236 = vector.broadcast %235 : vector<2x1xf32> to vector<2x4xf32>
    %237 = vector.broadcast %cst_83 : f32 to vector<2x4xf32>
    %238 = arith.select %234, %236, %237 : vector<2x4xi1>, vector<2x4xf32>
    %239 = arith.addf %226, %238 : vector<2x4xf32>
    %240 = vector.extract_strided_slice %211 {offsets = [4, 0], sizes = [2, 32], strides = [1, 1]} : vector<8x32xf32> to vector<2x32xf32>
    %241 = arith.mulf %240, %200 : vector<2x32xf32>
    %cst_84 = arith.constant dense<0.000000e+00> : vector<2xf32>
    %242 = vector.multi_reduction <add>, %241, %cst_84 [1] : vector<2x32xf32> to vector<2xf32>
    %243 = vector.shape_cast %242 : vector<2xf32> to vector<2x1xf32>
    %c2_i32 = arith.constant 2 : i32
    %244 = vector.broadcast %c2_i32 : i32 to vector<1x4xi32>
    %245 = arith.cmpi eq, %212, %244 : vector<1x4xi32>
    %cst_85 = arith.constant 0.000000e+00 : f32
    %246 = vector.shape_cast %245 : vector<1x4xi1> to vector<1x4xi1>
    %247 = vector.broadcast %246 : vector<1x4xi1> to vector<2x4xi1>
    %248 = vector.shape_cast %243 : vector<2x1xf32> to vector<2x1xf32>
    %249 = vector.broadcast %248 : vector<2x1xf32> to vector<2x4xf32>
    %250 = vector.broadcast %cst_85 : f32 to vector<2x4xf32>
    %251 = arith.select %247, %249, %250 : vector<2x4xi1>, vector<2x4xf32>
    %252 = arith.addf %239, %251 : vector<2x4xf32>
    %253 = vector.extract_strided_slice %211 {offsets = [6, 0], sizes = [2, 32], strides = [1, 1]} : vector<8x32xf32> to vector<2x32xf32>
    %254 = arith.mulf %253, %200 : vector<2x32xf32>
    %cst_86 = arith.constant dense<0.000000e+00> : vector<2xf32>
    %255 = vector.multi_reduction <add>, %254, %cst_86 [1] : vector<2x32xf32> to vector<2xf32>
    %256 = vector.shape_cast %255 : vector<2xf32> to vector<2x1xf32>
    %c3_i32 = arith.constant 3 : i32
    %257 = vector.broadcast %c3_i32 : i32 to vector<1x4xi32>
    %258 = arith.cmpi eq, %212, %257 : vector<1x4xi32>
    %cst_87 = arith.constant 0.000000e+00 : f32
    %259 = vector.shape_cast %258 : vector<1x4xi1> to vector<1x4xi1>
    %260 = vector.broadcast %259 : vector<1x4xi1> to vector<2x4xi1>
    %261 = vector.shape_cast %256 : vector<2x1xf32> to vector<2x1xf32>
    %262 = vector.broadcast %261 : vector<2x1xf32> to vector<2x4xf32>
    %263 = vector.broadcast %cst_87 : f32 to vector<2x4xf32>
    %264 = arith.select %260, %262, %263 : vector<2x4xi1>, vector<2x4xf32>
    %265 = arith.addf %252, %264 : vector<2x4xf32>
    %c0_88 = arith.constant 0 : index
    %c0_89 = arith.constant 0 : index
    %266 = vector.load %arg14[%c0_88, %c0_89] : memref<2x4xf32, #tpu.memory_space<vmem>>, vector<2x4xf32>
    tpu.vector_store %arg14[%c0_88, %c0_89], %265 {strides = array<i32>} : memref<2x4xf32, #tpu.memory_space<vmem>>, vector<2x4xf32>,
    return
  }
}

module attributes {stable_mosaic.version = 11 : i64} {
  func.func @_word_branch_kernel(%arg0: i32, %arg1: memref<128x32xbf16, #tpu.memory_space<vmem>>, %arg2: memref<32x96xbf16, #tpu.memory_space<vmem>>, %arg3: memref<1x96xf32, #tpu.memory_space<vmem>>, %arg4: memref<32x96xbf16, #tpu.memory_space<vmem>>, %arg5: memref<1x32xf32, #tpu.memory_space<vmem>>, %arg6: memref<32x32xbf16, #tpu.memory_space<vmem>>, %arg7: memref<32x32xbf16, #tpu.memory_space<vmem>>, %arg8: memref<32x32xbf16, #tpu.memory_space<vmem>>, %arg9: memref<1x32xf32, #tpu.memory_space<vmem>>, %arg10: memref<1x32xf32, #tpu.memory_space<vmem>>, %arg11: memref<1x1xf32, #tpu.memory_space<vmem>>, %arg12: memref<16x32xbf16, #tpu.memory_space<vmem>>, %arg13: memref<128x96xf32, #tpu.memory_space<vmem>>, %arg14: memref<128x32xf32, #tpu.memory_space<vmem>>) attributes {dimension_semantics = [#tpu.dimension_semantics<parallel>], iteration_bounds = array<i64: 1>, scalar_prefetch = 0 : i64, scratch_operands = 2 : i64, tpu.core_type = #tpu.core_type<tc>, window_params = [{transform_indices = @transform_0, window_bounds = array<i64: 128, 32>}, {pipeline_mode = #tpu.pipeline_mode<synchronous>, transform_indices = @transform_1, window_bounds = array<i64: 32, 96>}, {pipeline_mode = #tpu.pipeline_mode<synchronous>, transform_indices = @transform_2, window_bounds = array<i64: 1, 96>}, {pipeline_mode = #tpu.pipeline_mode<synchronous>, transform_indices = @transform_3, window_bounds = array<i64: 32, 96>}, {pipeline_mode = #tpu.pipeline_mode<synchronous>, transform_indices = @transform_4, window_bounds = array<i64: 1, 32>}, {pipeline_mode = #tpu.pipeline_mode<synchronous>, transform_indices = @transform_5, window_bounds = array<i64: 32, 32>}, {pipeline_mode = #tpu.pipeline_mode<synchronous>, transform_indices = @transform_6, window_bounds = array<i64: 32, 32>}, {pipeline_mode = #tpu.pipeline_mode<synchronous>, transform_indices = @transform_7, window_bounds = array<i64: 32, 32>}, {pipeline_mode = #tpu.pipeline_mode<synchronous>, transform_indices = @transform_8, window_bounds = array<i64: 1, 32>}, {pipeline_mode = #tpu.pipeline_mode<synchronous>, transform_indices = @transform_9, window_bounds = array<i64: 1, 32>}, {pipeline_mode = #tpu.pipeline_mode<synchronous>, transform_indices = @transform_10, window_bounds = array<i64: 1, 1>}, {transform_indices = @transform_11, window_bounds = array<i64: 16, 32>}]} {
    %c0 = arith.constant 0 : index
    %c0_0 = arith.constant 0 : index
    %0 = vector.load %arg1[%c0, %c0_0] : memref<128x32xbf16, #tpu.memory_space<vmem>>, vector<128x32xbf16>
    %c0_1 = arith.constant 0 : index
    %c0_2 = arith.constant 0 : index
    %1 = vector.load %arg2[%c0_1, %c0_2] : memref<32x96xbf16, #tpu.memory_space<vmem>>, vector<32x96xbf16>
    %c0_3 = arith.constant 0 : index
    %c0_4 = arith.constant 0 : index
    %2 = vector.load %arg3[%c0_3, %c0_4] : memref<1x96xf32, #tpu.memory_space<vmem>>, vector<1x96xf32>
    %c0_5 = arith.constant 0 : index
    %c0_6 = arith.constant 0 : index
    %3 = vector.load %arg4[%c0_5, %c0_6] : memref<32x96xbf16, #tpu.memory_space<vmem>>, vector<32x96xbf16>
    %c0_7 = arith.constant 0 : index
    %c0_8 = arith.constant 0 : index
    %4 = vector.load %arg5[%c0_7, %c0_8] : memref<1x32xf32, #tpu.memory_space<vmem>>, vector<1x32xf32>
    %c0_9 = arith.constant 0 : index
    %c0_10 = arith.constant 0 : index
    %5 = vector.load %arg6[%c0_9, %c0_10] : memref<32x32xbf16, #tpu.memory_space<vmem>>, vector<32x32xbf16>
    %c0_11 = arith.constant 0 : index
    %c0_12 = arith.constant 0 : index
    %6 = vector.load %arg7[%c0_11, %c0_12] : memref<32x32xbf16, #tpu.memory_space<vmem>>, vector<32x32xbf16>
    %c0_13 = arith.constant 0 : index
    %c0_14 = arith.constant 0 : index
    %7 = vector.load %arg8[%c0_13, %c0_14] : memref<32x32xbf16, #tpu.memory_space<vmem>>, vector<32x32xbf16>
    %c0_15 = arith.constant 0 : index
    %c0_16 = arith.constant 0 : index
    %8 = vector.load %arg9[%c0_15, %c0_16] : memref<1x32xf32, #tpu.memory_space<vmem>>, vector<1x32xf32>
    %c0_17 = arith.constant 0 : index
    %c0_18 = arith.constant 0 : index
    %9 = vector.load %arg10[%c0_17, %c0_18] : memref<1x32xf32, #tpu.memory_space<vmem>>, vector<1x32xf32>
    %c0_19 = arith.constant 0 : index
    %c0_20 = arith.constant 0 : index
    %10 = vector.load %arg11[%c0_19, %c0_20] : memref<1x1xf32, #tpu.memory_space<vmem>>, vector<1x1xf32>
    %cst = arith.constant dense<0.000000e+00> : vector<128x96xf32>
    %11 = tpu.matmul %0, %1, %cst {dimension_numbers = #tpu.dot_dimension_numbers<[1], [0], [0], [1], [0, 0, 1, 1], [], []>} : vector<128x32xbf16>, vector<32x96xbf16>, vector<128x96xf32> -> vector<128x96xf32>
    %12 = vector.broadcast %2 : vector<1x96xf32> to vector<128x96xf32>
    %13 = arith.addf %11, %12 : vector<128x96xf32>
    %c0_21 = arith.constant 0 : index
    %c0_22 = arith.constant 0 : index
    %14 = vector.load %arg13[%c0_21, %c0_22] : memref<128x96xf32, #tpu.memory_space<vmem>>, vector<128x96xf32>
    tpu.vector_store %arg13[%c0_21, %c0_22], %13 {strides = array<i32>} : memref<128x96xf32, #tpu.memory_space<vmem>>, vector<128x96xf32>,
    %c0_23 = arith.constant 0 : index
    %c0_24 = arith.constant 0 : index
    %15 = vector.load %arg13[%c0_23, %c0_24] : memref<128x96xf32, #tpu.memory_space<vmem>>, vector<16x96xf32>
    %16 = vector.extract_strided_slice %15 {offsets = [0, 0], sizes = [16, 64], strides = [1, 1]} : vector<16x96xf32> to vector<16x64xf32>
    %17 = arith.negf %16 : vector<16x64xf32>
    %18 = math.exp %17 : vector<16x64xf32>
    %cst_25 = arith.constant 1.000000e+00 : f32
    %19 = vector.broadcast %cst_25 : f32 to vector<16x64xf32>
    %20 = arith.addf %19, %18 : vector<16x64xf32>
    %21 = arith.divf %19, %20 : vector<16x64xf32>
    %22 = vector.extract_strided_slice %21 {offsets = [0, 0], sizes = [16, 32], strides = [1, 1]} : vector<16x64xf32> to vector<16x32xf32>
    %23 = vector.extract_strided_slice %21 {offsets = [0, 32], sizes = [16, 32], strides = [1, 1]} : vector<16x64xf32> to vector<16x32xf32>
    %cst_26 = arith.constant 1.000000e+00 : f32
    %24 = vector.broadcast %cst_26 : f32 to vector<16x32xf32>
    %25 = arith.subf %24, %23 : vector<16x32xf32>
    %26 = vector.extract_strided_slice %15 {offsets = [0, 64], sizes = [16, 32], strides = [1, 1]} : vector<16x96xf32> to vector<16x32xf32>
    %27 = vector.broadcast %4 : vector<1x32xf32> to vector<16x32xf32>
    %28 = arith.mulf %22, %27 : vector<16x32xf32>
    %29 = arith.addf %26, %28 : vector<16x32xf32>
    %30 = math.tanh %29 : vector<16x32xf32>
    %31 = arith.mulf %25, %30 : vector<16x32xf32>
    %c0_27 = arith.constant 0 : index
    %c0_28 = arith.constant 0 : index
    %32 = vector.load %arg14[%c0_27, %c0_28] : memref<128x32xf32, #tpu.memory_space<vmem>>, vector<16x32xf32>
    tpu.vector_store %arg14[%c0_27, %c0_28], %31 {strides = array<i32>} : memref<128x32xf32, #tpu.memory_space<vmem>>, vector<16x32xf32>,
    %c16 = arith.constant 16 : index
    %c0_29 = arith.constant 0 : index
    %33 = vector.load %arg13[%c16, %c0_29] : memref<128x96xf32, #tpu.memory_space<vmem>>, vector<16x96xf32>
    %34 = arith.truncf %31 : vector<16x32xf32> to vector<16x32xbf16>
    %cst_30 = arith.constant dense<0.000000e+00> : vector<16x96xf32>
    %35 = tpu.matmul %34, %3, %cst_30 {dimension_numbers = #tpu.dot_dimension_numbers<[1], [0], [0], [1], [0, 0, 1, 1], [], []>} : vector<16x32xbf16>, vector<32x96xbf16>, vector<16x96xf32> -> vector<16x96xf32>
    %36 = vector.extract_strided_slice %33 {offsets = [0, 0], sizes = [16, 64], strides = [1, 1]} : vector<16x96xf32> to vector<16x64xf32>
    %37 = vector.extract_strided_slice %35 {offsets = [0, 0], sizes = [16, 64], strides = [1, 1]} : vector<16x96xf32> to vector<16x64xf32>
    %38 = arith.addf %36, %37 : vector<16x64xf32>
    %39 = arith.negf %38 : vector<16x64xf32>
    %40 = math.exp %39 : vector<16x64xf32>
    %cst_31 = arith.constant 1.000000e+00 : f32
    %41 = vector.broadcast %cst_31 : f32 to vector<16x64xf32>
    %42 = arith.addf %41, %40 : vector<16x64xf32>
    %43 = arith.divf %41, %42 : vector<16x64xf32>
    %44 = vector.extract_strided_slice %43 {offsets = [0, 0], sizes = [16, 32], strides = [1, 1]} : vector<16x64xf32> to vector<16x32xf32>
    %45 = vector.extract_strided_slice %43 {offsets = [0, 32], sizes = [16, 32], strides = [1, 1]} : vector<16x64xf32> to vector<16x32xf32>
    %46 = vector.extract_strided_slice %33 {offsets = [0, 64], sizes = [16, 32], strides = [1, 1]} : vector<16x96xf32> to vector<16x32xf32>
    %47 = vector.extract_strided_slice %35 {offsets = [0, 64], sizes = [16, 32], strides = [1, 1]} : vector<16x96xf32> to vector<16x32xf32>
    %48 = vector.broadcast %4 : vector<1x32xf32> to vector<16x32xf32>
    %49 = arith.addf %47, %48 : vector<16x32xf32>
    %50 = arith.mulf %44, %49 : vector<16x32xf32>
    %51 = arith.addf %46, %50 : vector<16x32xf32>
    %52 = math.tanh %51 : vector<16x32xf32>
    %cst_32 = arith.constant 1.000000e+00 : f32
    %53 = vector.broadcast %cst_32 : f32 to vector<16x32xf32>
    %54 = arith.subf %53, %45 : vector<16x32xf32>
    %55 = arith.mulf %54, %52 : vector<16x32xf32>
    %56 = arith.mulf %45, %31 : vector<16x32xf32>
    %57 = arith.addf %55, %56 : vector<16x32xf32>
    %c16_33 = arith.constant 16 : index
    %c0_34 = arith.constant 0 : index
    %58 = vector.load %arg14[%c16_33, %c0_34] : memref<128x32xf32, #tpu.memory_space<vmem>>, vector<16x32xf32>
    tpu.vector_store %arg14[%c16_33, %c0_34], %57 {strides = array<i32>} : memref<128x32xf32, #tpu.memory_space<vmem>>, vector<16x32xf32>,
    %c32 = arith.constant 32 : index
    %c0_35 = arith.constant 0 : index
    %59 = vector.load %arg13[%c32, %c0_35] : memref<128x96xf32, #tpu.memory_space<vmem>>, vector<16x96xf32>
    %60 = arith.truncf %57 : vector<16x32xf32> to vector<16x32xbf16>
    %cst_36 = arith.constant dense<0.000000e+00> : vector<16x96xf32>
    %61 = tpu.matmul %60, %3, %cst_36 {dimension_numbers = #tpu.dot_dimension_numbers<[1], [0], [0], [1], [0, 0, 1, 1], [], []>} : vector<16x32xbf16>, vector<32x96xbf16>, vector<16x96xf32> -> vector<16x96xf32>
    %62 = vector.extract_strided_slice %59 {offsets = [0, 0], sizes = [16, 64], strides = [1, 1]} : vector<16x96xf32> to vector<16x64xf32>
    %63 = vector.extract_strided_slice %61 {offsets = [0, 0], sizes = [16, 64], strides = [1, 1]} : vector<16x96xf32> to vector<16x64xf32>
    %64 = arith.addf %62, %63 : vector<16x64xf32>
    %65 = arith.negf %64 : vector<16x64xf32>
    %66 = math.exp %65 : vector<16x64xf32>
    %cst_37 = arith.constant 1.000000e+00 : f32
    %67 = vector.broadcast %cst_37 : f32 to vector<16x64xf32>
    %68 = arith.addf %67, %66 : vector<16x64xf32>
    %69 = arith.divf %67, %68 : vector<16x64xf32>
    %70 = vector.extract_strided_slice %69 {offsets = [0, 0], sizes = [16, 32], strides = [1, 1]} : vector<16x64xf32> to vector<16x32xf32>
    %71 = vector.extract_strided_slice %69 {offsets = [0, 32], sizes = [16, 32], strides = [1, 1]} : vector<16x64xf32> to vector<16x32xf32>
    %72 = vector.extract_strided_slice %59 {offsets = [0, 64], sizes = [16, 32], strides = [1, 1]} : vector<16x96xf32> to vector<16x32xf32>
    %73 = vector.extract_strided_slice %61 {offsets = [0, 64], sizes = [16, 32], strides = [1, 1]} : vector<16x96xf32> to vector<16x32xf32>
    %74 = vector.broadcast %4 : vector<1x32xf32> to vector<16x32xf32>
    %75 = arith.addf %73, %74 : vector<16x32xf32>
    %76 = arith.mulf %70, %75 : vector<16x32xf32>
    %77 = arith.addf %72, %76 : vector<16x32xf32>
    %78 = math.tanh %77 : vector<16x32xf32>
    %cst_38 = arith.constant 1.000000e+00 : f32
    %79 = vector.broadcast %cst_38 : f32 to vector<16x32xf32>
    %80 = arith.subf %79, %71 : vector<16x32xf32>
    %81 = arith.mulf %80, %78 : vector<16x32xf32>
    %82 = arith.mulf %71, %57 : vector<16x32xf32>
    %83 = arith.addf %81, %82 : vector<16x32xf32>
    %c32_39 = arith.constant 32 : index
    %c0_40 = arith.constant 0 : index
    %84 = vector.load %arg14[%c32_39, %c0_40] : memref<128x32xf32, #tpu.memory_space<vmem>>, vector<16x32xf32>
    tpu.vector_store %arg14[%c32_39, %c0_40], %83 {strides = array<i32>} : memref<128x32xf32, #tpu.memory_space<vmem>>, vector<16x32xf32>,
    %c48 = arith.constant 48 : index
    %c0_41 = arith.constant 0 : index
    %85 = vector.load %arg13[%c48, %c0_41] : memref<128x96xf32, #tpu.memory_space<vmem>>, vector<16x96xf32>
    %86 = arith.truncf %83 : vector<16x32xf32> to vector<16x32xbf16>
    %cst_42 = arith.constant dense<0.000000e+00> : vector<16x96xf32>
    %87 = tpu.matmul %86, %3, %cst_42 {dimension_numbers = #tpu.dot_dimension_numbers<[1], [0], [0], [1], [0, 0, 1, 1], [], []>} : vector<16x32xbf16>, vector<32x96xbf16>, vector<16x96xf32> -> vector<16x96xf32>
    %88 = vector.extract_strided_slice %85 {offsets = [0, 0], sizes = [16, 64], strides = [1, 1]} : vector<16x96xf32> to vector<16x64xf32>
    %89 = vector.extract_strided_slice %87 {offsets = [0, 0], sizes = [16, 64], strides = [1, 1]} : vector<16x96xf32> to vector<16x64xf32>
    %90 = arith.addf %88, %89 : vector<16x64xf32>
    %91 = arith.negf %90 : vector<16x64xf32>
    %92 = math.exp %91 : vector<16x64xf32>
    %cst_43 = arith.constant 1.000000e+00 : f32
    %93 = vector.broadcast %cst_43 : f32 to vector<16x64xf32>
    %94 = arith.addf %93, %92 : vector<16x64xf32>
    %95 = arith.divf %93, %94 : vector<16x64xf32>
    %96 = vector.extract_strided_slice %95 {offsets = [0, 0], sizes = [16, 32], strides = [1, 1]} : vector<16x64xf32> to vector<16x32xf32>
    %97 = vector.extract_strided_slice %95 {offsets = [0, 32], sizes = [16, 32], strides = [1, 1]} : vector<16x64xf32> to vector<16x32xf32>
    %98 = vector.extract_strided_slice %85 {offsets = [0, 64], sizes = [16, 32], strides = [1, 1]} : vector<16x96xf32> to vector<16x32xf32>
    %99 = vector.extract_strided_slice %87 {offsets = [0, 64], sizes = [16, 32], strides = [1, 1]} : vector<16x96xf32> to vector<16x32xf32>
    %100 = vector.broadcast %4 : vector<1x32xf32> to vector<16x32xf32>
    %101 = arith.addf %99, %100 : vector<16x32xf32>
    %102 = arith.mulf %96, %101 : vector<16x32xf32>
    %103 = arith.addf %98, %102 : vector<16x32xf32>
    %104 = math.tanh %103 : vector<16x32xf32>
    %cst_44 = arith.constant 1.000000e+00 : f32
    %105 = vector.broadcast %cst_44 : f32 to vector<16x32xf32>
    %106 = arith.subf %105, %97 : vector<16x32xf32>
    %107 = arith.mulf %106, %104 : vector<16x32xf32>
    %108 = arith.mulf %97, %83 : vector<16x32xf32>
    %109 = arith.addf %107, %108 : vector<16x32xf32>
    %c48_45 = arith.constant 48 : index
    %c0_46 = arith.constant 0 : index
    %110 = vector.load %arg14[%c48_45, %c0_46] : memref<128x32xf32, #tpu.memory_space<vmem>>, vector<16x32xf32>
    tpu.vector_store %arg14[%c48_45, %c0_46], %109 {strides = array<i32>} : memref<128x32xf32, #tpu.memory_space<vmem>>, vector<16x32xf32>,
    %c64 = arith.constant 64 : index
    %c0_47 = arith.constant 0 : index
    %111 = vector.load %arg13[%c64, %c0_47] : memref<128x96xf32, #tpu.memory_space<vmem>>, vector<16x96xf32>
    %112 = arith.truncf %109 : vector<16x32xf32> to vector<16x32xbf16>
    %cst_48 = arith.constant dense<0.000000e+00> : vector<16x96xf32>
    %113 = tpu.matmul %112, %3, %cst_48 {dimension_numbers = #tpu.dot_dimension_numbers<[1], [0], [0], [1], [0, 0, 1, 1], [], []>} : vector<16x32xbf16>, vector<32x96xbf16>, vector<16x96xf32> -> vector<16x96xf32>
    %114 = vector.extract_strided_slice %111 {offsets = [0, 0], sizes = [16, 64], strides = [1, 1]} : vector<16x96xf32> to vector<16x64xf32>
    %115 = vector.extract_strided_slice %113 {offsets = [0, 0], sizes = [16, 64], strides = [1, 1]} : vector<16x96xf32> to vector<16x64xf32>
    %116 = arith.addf %114, %115 : vector<16x64xf32>
    %117 = arith.negf %116 : vector<16x64xf32>
    %118 = math.exp %117 : vector<16x64xf32>
    %cst_49 = arith.constant 1.000000e+00 : f32
    %119 = vector.broadcast %cst_49 : f32 to vector<16x64xf32>
    %120 = arith.addf %119, %118 : vector<16x64xf32>
    %121 = arith.divf %119, %120 : vector<16x64xf32>
    %122 = vector.extract_strided_slice %121 {offsets = [0, 0], sizes = [16, 32], strides = [1, 1]} : vector<16x64xf32> to vector<16x32xf32>
    %123 = vector.extract_strided_slice %121 {offsets = [0, 32], sizes = [16, 32], strides = [1, 1]} : vector<16x64xf32> to vector<16x32xf32>
    %124 = vector.extract_strided_slice %111 {offsets = [0, 64], sizes = [16, 32], strides = [1, 1]} : vector<16x96xf32> to vector<16x32xf32>
    %125 = vector.extract_strided_slice %113 {offsets = [0, 64], sizes = [16, 32], strides = [1, 1]} : vector<16x96xf32> to vector<16x32xf32>
    %126 = vector.broadcast %4 : vector<1x32xf32> to vector<16x32xf32>
    %127 = arith.addf %125, %126 : vector<16x32xf32>
    %128 = arith.mulf %122, %127 : vector<16x32xf32>
    %129 = arith.addf %124, %128 : vector<16x32xf32>
    %130 = math.tanh %129 : vector<16x32xf32>
    %cst_50 = arith.constant 1.000000e+00 : f32
    %131 = vector.broadcast %cst_50 : f32 to vector<16x32xf32>
    %132 = arith.subf %131, %123 : vector<16x32xf32>
    %133 = arith.mulf %132, %130 : vector<16x32xf32>
    %134 = arith.mulf %123, %109 : vector<16x32xf32>
    %135 = arith.addf %133, %134 : vector<16x32xf32>
    %c64_51 = arith.constant 64 : index
    %c0_52 = arith.constant 0 : index
    %136 = vector.load %arg14[%c64_51, %c0_52] : memref<128x32xf32, #tpu.memory_space<vmem>>, vector<16x32xf32>
    tpu.vector_store %arg14[%c64_51, %c0_52], %135 {strides = array<i32>} : memref<128x32xf32, #tpu.memory_space<vmem>>, vector<16x32xf32>,
    %c80 = arith.constant 80 : index
    %c0_53 = arith.constant 0 : index
    %137 = vector.load %arg13[%c80, %c0_53] : memref<128x96xf32, #tpu.memory_space<vmem>>, vector<16x96xf32>
    %138 = arith.truncf %135 : vector<16x32xf32> to vector<16x32xbf16>
    %cst_54 = arith.constant dense<0.000000e+00> : vector<16x96xf32>
    %139 = tpu.matmul %138, %3, %cst_54 {dimension_numbers = #tpu.dot_dimension_numbers<[1], [0], [0], [1], [0, 0, 1, 1], [], []>} : vector<16x32xbf16>, vector<32x96xbf16>, vector<16x96xf32> -> vector<16x96xf32>
    %140 = vector.extract_strided_slice %137 {offsets = [0, 0], sizes = [16, 64], strides = [1, 1]} : vector<16x96xf32> to vector<16x64xf32>
    %141 = vector.extract_strided_slice %139 {offsets = [0, 0], sizes = [16, 64], strides = [1, 1]} : vector<16x96xf32> to vector<16x64xf32>
    %142 = arith.addf %140, %141 : vector<16x64xf32>
    %143 = arith.negf %142 : vector<16x64xf32>
    %144 = math.exp %143 : vector<16x64xf32>
    %cst_55 = arith.constant 1.000000e+00 : f32
    %145 = vector.broadcast %cst_55 : f32 to vector<16x64xf32>
    %146 = arith.addf %145, %144 : vector<16x64xf32>
    %147 = arith.divf %145, %146 : vector<16x64xf32>
    %148 = vector.extract_strided_slice %147 {offsets = [0, 0], sizes = [16, 32], strides = [1, 1]} : vector<16x64xf32> to vector<16x32xf32>
    %149 = vector.extract_strided_slice %147 {offsets = [0, 32], sizes = [16, 32], strides = [1, 1]} : vector<16x64xf32> to vector<16x32xf32>
    %150 = vector.extract_strided_slice %137 {offsets = [0, 64], sizes = [16, 32], strides = [1, 1]} : vector<16x96xf32> to vector<16x32xf32>
    %151 = vector.extract_strided_slice %139 {offsets = [0, 64], sizes = [16, 32], strides = [1, 1]} : vector<16x96xf32> to vector<16x32xf32>
    %152 = vector.broadcast %4 : vector<1x32xf32> to vector<16x32xf32>
    %153 = arith.addf %151, %152 : vector<16x32xf32>
    %154 = arith.mulf %148, %153 : vector<16x32xf32>
    %155 = arith.addf %150, %154 : vector<16x32xf32>
    %156 = math.tanh %155 : vector<16x32xf32>
    %cst_56 = arith.constant 1.000000e+00 : f32
    %157 = vector.broadcast %cst_56 : f32 to vector<16x32xf32>
    %158 = arith.subf %157, %149 : vector<16x32xf32>
    %159 = arith.mulf %158, %156 : vector<16x32xf32>
    %160 = arith.mulf %149, %135 : vector<16x32xf32>
    %161 = arith.addf %159, %160 : vector<16x32xf32>
    %c80_57 = arith.constant 80 : index
    %c0_58 = arith.constant 0 : index
    %162 = vector.load %arg14[%c80_57, %c0_58] : memref<128x32xf32, #tpu.memory_space<vmem>>, vector<16x32xf32>
    tpu.vector_store %arg14[%c80_57, %c0_58], %161 {strides = array<i32>} : memref<128x32xf32, #tpu.memory_space<vmem>>, vector<16x32xf32>,
    %c96 = arith.constant 96 : index
    %c0_59 = arith.constant 0 : index
    %163 = vector.load %arg13[%c96, %c0_59] : memref<128x96xf32, #tpu.memory_space<vmem>>, vector<16x96xf32>
    %164 = arith.truncf %161 : vector<16x32xf32> to vector<16x32xbf16>
    %cst_60 = arith.constant dense<0.000000e+00> : vector<16x96xf32>
    %165 = tpu.matmul %164, %3, %cst_60 {dimension_numbers = #tpu.dot_dimension_numbers<[1], [0], [0], [1], [0, 0, 1, 1], [], []>} : vector<16x32xbf16>, vector<32x96xbf16>, vector<16x96xf32> -> vector<16x96xf32>
    %166 = vector.extract_strided_slice %163 {offsets = [0, 0], sizes = [16, 64], strides = [1, 1]} : vector<16x96xf32> to vector<16x64xf32>
    %167 = vector.extract_strided_slice %165 {offsets = [0, 0], sizes = [16, 64], strides = [1, 1]} : vector<16x96xf32> to vector<16x64xf32>
    %168 = arith.addf %166, %167 : vector<16x64xf32>
    %169 = arith.negf %168 : vector<16x64xf32>
    %170 = math.exp %169 : vector<16x64xf32>
    %cst_61 = arith.constant 1.000000e+00 : f32
    %171 = vector.broadcast %cst_61 : f32 to vector<16x64xf32>
    %172 = arith.addf %171, %170 : vector<16x64xf32>
    %173 = arith.divf %171, %172 : vector<16x64xf32>
    %174 = vector.extract_strided_slice %173 {offsets = [0, 0], sizes = [16, 32], strides = [1, 1]} : vector<16x64xf32> to vector<16x32xf32>
    %175 = vector.extract_strided_slice %173 {offsets = [0, 32], sizes = [16, 32], strides = [1, 1]} : vector<16x64xf32> to vector<16x32xf32>
    %176 = vector.extract_strided_slice %163 {offsets = [0, 64], sizes = [16, 32], strides = [1, 1]} : vector<16x96xf32> to vector<16x32xf32>
    %177 = vector.extract_strided_slice %165 {offsets = [0, 64], sizes = [16, 32], strides = [1, 1]} : vector<16x96xf32> to vector<16x32xf32>
    %178 = vector.broadcast %4 : vector<1x32xf32> to vector<16x32xf32>
    %179 = arith.addf %177, %178 : vector<16x32xf32>
    %180 = arith.mulf %174, %179 : vector<16x32xf32>
    %181 = arith.addf %176, %180 : vector<16x32xf32>
    %182 = math.tanh %181 : vector<16x32xf32>
    %cst_62 = arith.constant 1.000000e+00 : f32
    %183 = vector.broadcast %cst_62 : f32 to vector<16x32xf32>
    %184 = arith.subf %183, %175 : vector<16x32xf32>
    %185 = arith.mulf %184, %182 : vector<16x32xf32>
    %186 = arith.mulf %175, %161 : vector<16x32xf32>
    %187 = arith.addf %185, %186 : vector<16x32xf32>
    %c96_63 = arith.constant 96 : index
    %c0_64 = arith.constant 0 : index
    %188 = vector.load %arg14[%c96_63, %c0_64] : memref<128x32xf32, #tpu.memory_space<vmem>>, vector<16x32xf32>
    tpu.vector_store %arg14[%c96_63, %c0_64], %187 {strides = array<i32>} : memref<128x32xf32, #tpu.memory_space<vmem>>, vector<16x32xf32>,
    %c112 = arith.constant 112 : index
    %c0_65 = arith.constant 0 : index
    %189 = vector.load %arg13[%c112, %c0_65] : memref<128x96xf32, #tpu.memory_space<vmem>>, vector<16x96xf32>
    %190 = arith.truncf %187 : vector<16x32xf32> to vector<16x32xbf16>
    %cst_66 = arith.constant dense<0.000000e+00> : vector<16x96xf32>
    %191 = tpu.matmul %190, %3, %cst_66 {dimension_numbers = #tpu.dot_dimension_numbers<[1], [0], [0], [1], [0, 0, 1, 1], [], []>} : vector<16x32xbf16>, vector<32x96xbf16>, vector<16x96xf32> -> vector<16x96xf32>
    %192 = vector.extract_strided_slice %189 {offsets = [0, 0], sizes = [16, 64], strides = [1, 1]} : vector<16x96xf32> to vector<16x64xf32>
    %193 = vector.extract_strided_slice %191 {offsets = [0, 0], sizes = [16, 64], strides = [1, 1]} : vector<16x96xf32> to vector<16x64xf32>
    %194 = arith.addf %192, %193 : vector<16x64xf32>
    %195 = arith.negf %194 : vector<16x64xf32>
    %196 = math.exp %195 : vector<16x64xf32>
    %cst_67 = arith.constant 1.000000e+00 : f32
    %197 = vector.broadcast %cst_67 : f32 to vector<16x64xf32>
    %198 = arith.addf %197, %196 : vector<16x64xf32>
    %199 = arith.divf %197, %198 : vector<16x64xf32>
    %200 = vector.extract_strided_slice %199 {offsets = [0, 0], sizes = [16, 32], strides = [1, 1]} : vector<16x64xf32> to vector<16x32xf32>
    %201 = vector.extract_strided_slice %199 {offsets = [0, 32], sizes = [16, 32], strides = [1, 1]} : vector<16x64xf32> to vector<16x32xf32>
    %202 = vector.extract_strided_slice %189 {offsets = [0, 64], sizes = [16, 32], strides = [1, 1]} : vector<16x96xf32> to vector<16x32xf32>
    %203 = vector.extract_strided_slice %191 {offsets = [0, 64], sizes = [16, 32], strides = [1, 1]} : vector<16x96xf32> to vector<16x32xf32>
    %204 = vector.broadcast %4 : vector<1x32xf32> to vector<16x32xf32>
    %205 = arith.addf %203, %204 : vector<16x32xf32>
    %206 = arith.mulf %200, %205 : vector<16x32xf32>
    %207 = arith.addf %202, %206 : vector<16x32xf32>
    %208 = math.tanh %207 : vector<16x32xf32>
    %cst_68 = arith.constant 1.000000e+00 : f32
    %209 = vector.broadcast %cst_68 : f32 to vector<16x32xf32>
    %210 = arith.subf %209, %201 : vector<16x32xf32>
    %211 = arith.mulf %210, %208 : vector<16x32xf32>
    %212 = arith.mulf %201, %187 : vector<16x32xf32>
    %213 = arith.addf %211, %212 : vector<16x32xf32>
    %c112_69 = arith.constant 112 : index
    %c0_70 = arith.constant 0 : index
    %214 = vector.load %arg14[%c112_69, %c0_70] : memref<128x32xf32, #tpu.memory_space<vmem>>, vector<16x32xf32>
    tpu.vector_store %arg14[%c112_69, %c0_70], %213 {strides = array<i32>} : memref<128x32xf32, #tpu.memory_space<vmem>>, vector<16x32xf32>,
    %c0_71 = arith.constant 0 : index
    %c0_72 = arith.constant 0 : index
    %215 = vector.load %arg14[%c0_71, %c0_72] : memref<128x32xf32, #tpu.memory_space<vmem>>, vector<128x32xf32>
    %216 = arith.truncf %215 : vector<128x32xf32> to vector<128x32xbf16>
    %cst_73 = arith.constant dense<0.000000e+00> : vector<128x32xf32>
    %217 = tpu.matmul %216, %5, %cst_73 {dimension_numbers = #tpu.dot_dimension_numbers<[1], [0], [0], [1], [0, 0, 1, 1], [], []>} : vector<128x32xbf16>, vector<32x32xbf16>, vector<128x32xf32> -> vector<128x32xf32>
    %c0_74 = arith.constant 0 : index
    %c0_75 = arith.constant 0 : index
    %218 = vector.load %arg14[%c0_74, %c0_75] : memref<128x32xf32, #tpu.memory_space<vmem>>, vector<16x32xf32>
    %c16_76 = arith.constant 16 : index
    %c0_77 = arith.constant 0 : index
    %219 = vector.load %arg14[%c16_76, %c0_77] : memref<128x32xf32, #tpu.memory_space<vmem>>, vector<16x32xf32>
    %220 = arith.addf %218, %219 : vector<16x32xf32>
    %c32_78 = arith.constant 32 : index
    %c0_79 = arith.constant 0 : index
    %221 = vector.load %arg14[%c32_78, %c0_79] : memref<128x32xf32, #tpu.memory_space<vmem>>, vector<16x32xf32>
    %222 = arith.addf %220, %221 : vector<16x32xf32>
    %c48_80 = arith.constant 48 : index
    %c0_81 = arith.constant 0 : index
    %223 = vector.load %arg14[%c48_80, %c0_81] : memref<128x32xf32, #tpu.memory_space<vmem>>, vector<16x32xf32>
    %224 = arith.addf %222, %223 : vector<16x32xf32>
    %c64_82 = arith.constant 64 : index
    %c0_83 = arith.constant 0 : index
    %225 = vector.load %arg14[%c64_82, %c0_83] : memref<128x32xf32, #tpu.memory_space<vmem>>, vector<16x32xf32>
    %226 = arith.addf %224, %225 : vector<16x32xf32>
    %c80_84 = arith.constant 80 : index
    %c0_85 = arith.constant 0 : index
    %227 = vector.load %arg14[%c80_84, %c0_85] : memref<128x32xf32, #tpu.memory_space<vmem>>, vector<16x32xf32>
    %228 = arith.addf %226, %227 : vector<16x32xf32>
    %c96_86 = arith.constant 96 : index
    %c0_87 = arith.constant 0 : index
    %229 = vector.load %arg14[%c96_86, %c0_87] : memref<128x32xf32, #tpu.memory_space<vmem>>, vector<16x32xf32>
    %230 = arith.addf %228, %229 : vector<16x32xf32>
    %c112_88 = arith.constant 112 : index
    %c0_89 = arith.constant 0 : index
    %231 = vector.load %arg14[%c112_88, %c0_89] : memref<128x32xf32, #tpu.memory_space<vmem>>, vector<16x32xf32>
    %232 = arith.addf %230, %231 : vector<16x32xf32>
    %cst_90 = arith.constant 1.250000e-01 : f32
    %233 = vector.broadcast %cst_90 : f32 to vector<16x32xf32>
    %234 = arith.mulf %232, %233 : vector<16x32xf32>
    %235 = arith.truncf %213 : vector<16x32xf32> to vector<16x32xbf16>
    %cst_91 = arith.constant dense<0.000000e+00> : vector<16x32xf32>
    %236 = tpu.matmul %235, %6, %cst_91 {dimension_numbers = #tpu.dot_dimension_numbers<[1], [0], [0], [1], [0, 0, 1, 1], [], []>} : vector<16x32xbf16>, vector<32x32xbf16>, vector<16x32xf32> -> vector<16x32xf32>
    %237 = arith.truncf %234 : vector<16x32xf32> to vector<16x32xbf16>
    %cst_92 = arith.constant dense<0.000000e+00> : vector<16x32xf32>
    %238 = tpu.matmul %237, %7, %cst_92 {dimension_numbers = #tpu.dot_dimension_numbers<[1], [0], [0], [1], [0, 0, 1, 1], [], []>} : vector<16x32xbf16>, vector<32x32xbf16>, vector<16x32xf32> -> vector<16x32xf32>
    %239 = arith.addf %236, %238 : vector<16x32xf32>
    %240 = vector.broadcast %8 : vector<1x32xf32> to vector<16x32xf32>
    %241 = arith.addf %239, %240 : vector<16x32xf32>
    %242 = vector.shape_cast %217 : vector<128x32xf32> to vector<8x16x32xf32>
    %243 = vector.shape_cast %241 : vector<16x32xf32> to vector<1x16x32xf32>
    %244 = vector.broadcast %243 : vector<1x16x32xf32> to vector<8x16x32xf32>
    %245 = arith.addf %242, %244 : vector<8x16x32xf32>
    %cst_93 = arith.constant 0.000000e+00 : f32
    %246 = vector.broadcast %cst_93 : f32 to vector<8x16x32xf32>
    %247 = arith.cmpf oge, %245, %246 : vector<8x16x32xf32>
    %cst_94 = arith.constant 0.00999999977 : f32
    %248 = vector.broadcast %cst_94 : f32 to vector<8x16x32xf32>
    %249 = arith.mulf %248, %245 : vector<8x16x32xf32>
    %250 = arith.select %247, %245, %249 : vector<8x16x32xi1>, vector<8x16x32xf32>
    %251 = vector.shape_cast %9 : vector<1x32xf32> to vector<1x1x32xf32>
    %252 = vector.broadcast %251 : vector<1x1x32xf32> to vector<8x16x32xf32>
    %253 = arith.mulf %250, %252 : vector<8x16x32xf32>
    %cst_95 = arith.constant dense<0.000000e+00> : vector<8x16xf32>
    %254 = vector.multi_reduction <add>, %253, %cst_95 [2] : vector<8x16x32xf32> to vector<8x16xf32>
    %255 = vector.shape_cast %254 : vector<8x16xf32> to vector<8x16x1xf32>
    %256 = vector.shape_cast %10 : vector<1x1xf32> to vector<1x1x1xf32>
    %257 = vector.broadcast %256 : vector<1x1x1xf32> to vector<8x16x1xf32>
    %258 = arith.addf %255, %257 : vector<8x16x1xf32>
    %259 = vector.extract_strided_slice %258 {offsets = [0, 0, 0], sizes = [1, 16, 1], strides = [1, 1, 1]} : vector<8x16x1xf32> to vector<1x16x1xf32>
    %260 = vector.shape_cast %259 : vector<1x16x1xf32> to vector<16x1xf32>
    %261 = vector.extract_strided_slice %258 {offsets = [1, 0, 0], sizes = [1, 16, 1], strides = [1, 1, 1]} : vector<8x16x1xf32> to vector<1x16x1xf32>
    %262 = vector.shape_cast %261 : vector<1x16x1xf32> to vector<16x1xf32>
    %263 = arith.maximumf %260, %262 : vector<16x1xf32>
    %264 = vector.extract_strided_slice %258 {offsets = [2, 0, 0], sizes = [1, 16, 1], strides = [1, 1, 1]} : vector<8x16x1xf32> to vector<1x16x1xf32>
    %265 = vector.shape_cast %264 : vector<1x16x1xf32> to vector<16x1xf32>
    %266 = arith.maximumf %263, %265 : vector<16x1xf32>
    %267 = vector.extract_strided_slice %258 {offsets = [3, 0, 0], sizes = [1, 16, 1], strides = [1, 1, 1]} : vector<8x16x1xf32> to vector<1x16x1xf32>
    %268 = vector.shape_cast %267 : vector<1x16x1xf32> to vector<16x1xf32>
    %269 = arith.maximumf %266, %268 : vector<16x1xf32>
    %270 = vector.extract_strided_slice %258 {offsets = [4, 0, 0], sizes = [1, 16, 1], strides = [1, 1, 1]} : vector<8x16x1xf32> to vector<1x16x1xf32>
    %271 = vector.shape_cast %270 : vector<1x16x1xf32> to vector<16x1xf32>
    %272 = arith.maximumf %269, %271 : vector<16x1xf32>
    %273 = vector.extract_strided_slice %258 {offsets = [5, 0, 0], sizes = [1, 16, 1], strides = [1, 1, 1]} : vector<8x16x1xf32> to vector<1x16x1xf32>
    %274 = vector.shape_cast %273 : vector<1x16x1xf32> to vector<16x1xf32>
    %275 = arith.maximumf %272, %274 : vector<16x1xf32>
    %276 = vector.extract_strided_slice %258 {offsets = [6, 0, 0], sizes = [1, 16, 1], strides = [1, 1, 1]} : vector<8x16x1xf32> to vector<1x16x1xf32>
    %277 = vector.shape_cast %276 : vector<1x16x1xf32> to vector<16x1xf32>
    %278 = arith.maximumf %275, %277 : vector<16x1xf32>
    %279 = vector.extract_strided_slice %258 {offsets = [7, 0, 0], sizes = [1, 16, 1], strides = [1, 1, 1]} : vector<8x16x1xf32> to vector<1x16x1xf32>
    %280 = vector.shape_cast %279 : vector<1x16x1xf32> to vector<16x1xf32>
    %281 = arith.maximumf %278, %280 : vector<16x1xf32>
    %282 = vector.shape_cast %281 : vector<16x1xf32> to vector<1x16x1xf32>
    %283 = vector.broadcast %282 : vector<1x16x1xf32> to vector<8x16x1xf32>
    %284 = arith.subf %258, %283 : vector<8x16x1xf32>
    %285 = math.exp %284 : vector<8x16x1xf32>
    %286 = vector.extract_strided_slice %285 {offsets = [0, 0, 0], sizes = [1, 16, 1], strides = [1, 1, 1]} : vector<8x16x1xf32> to vector<1x16x1xf32>
    %287 = vector.shape_cast %286 : vector<1x16x1xf32> to vector<16x1xf32>
    %288 = vector.extract_strided_slice %285 {offsets = [1, 0, 0], sizes = [1, 16, 1], strides = [1, 1, 1]} : vector<8x16x1xf32> to vector<1x16x1xf32>
    %289 = vector.shape_cast %288 : vector<1x16x1xf32> to vector<16x1xf32>
    %290 = arith.addf %287, %289 : vector<16x1xf32>
    %291 = vector.extract_strided_slice %285 {offsets = [2, 0, 0], sizes = [1, 16, 1], strides = [1, 1, 1]} : vector<8x16x1xf32> to vector<1x16x1xf32>
    %292 = vector.shape_cast %291 : vector<1x16x1xf32> to vector<16x1xf32>
    %293 = arith.addf %290, %292 : vector<16x1xf32>
    %294 = vector.extract_strided_slice %285 {offsets = [3, 0, 0], sizes = [1, 16, 1], strides = [1, 1, 1]} : vector<8x16x1xf32> to vector<1x16x1xf32>
    %295 = vector.shape_cast %294 : vector<1x16x1xf32> to vector<16x1xf32>
    %296 = arith.addf %293, %295 : vector<16x1xf32>
    %297 = vector.extract_strided_slice %285 {offsets = [4, 0, 0], sizes = [1, 16, 1], strides = [1, 1, 1]} : vector<8x16x1xf32> to vector<1x16x1xf32>
    %298 = vector.shape_cast %297 : vector<1x16x1xf32> to vector<16x1xf32>
    %299 = arith.addf %296, %298 : vector<16x1xf32>
    %300 = vector.extract_strided_slice %285 {offsets = [5, 0, 0], sizes = [1, 16, 1], strides = [1, 1, 1]} : vector<8x16x1xf32> to vector<1x16x1xf32>
    %301 = vector.shape_cast %300 : vector<1x16x1xf32> to vector<16x1xf32>
    %302 = arith.addf %299, %301 : vector<16x1xf32>
    %303 = vector.extract_strided_slice %285 {offsets = [6, 0, 0], sizes = [1, 16, 1], strides = [1, 1, 1]} : vector<8x16x1xf32> to vector<1x16x1xf32>
    %304 = vector.shape_cast %303 : vector<1x16x1xf32> to vector<16x1xf32>
    %305 = arith.addf %302, %304 : vector<16x1xf32>
    %306 = vector.extract_strided_slice %285 {offsets = [7, 0, 0], sizes = [1, 16, 1], strides = [1, 1, 1]} : vector<8x16x1xf32> to vector<1x16x1xf32>
    %307 = vector.shape_cast %306 : vector<1x16x1xf32> to vector<16x1xf32>
    %308 = arith.addf %305, %307 : vector<16x1xf32>
    %309 = tpu.reciprocal %308 {approx = true} : vector<16x1xf32> -> vector<16x1xf32>
    %310 = vector.shape_cast %309 : vector<16x1xf32> to vector<1x16x1xf32>
    %311 = vector.broadcast %310 : vector<1x16x1xf32> to vector<8x16x1xf32>
    %312 = arith.mulf %285, %311 : vector<8x16x1xf32>
    %313 = vector.extract_strided_slice %312 {offsets = [0, 0, 0], sizes = [1, 16, 1], strides = [1, 1, 1]} : vector<8x16x1xf32> to vector<1x16x1xf32>
    %314 = vector.shape_cast %313 : vector<1x16x1xf32> to vector<16x1xf32>
    %c0_96 = arith.constant 0 : index
    %c0_97 = arith.constant 0 : index
    %315 = vector.load %arg14[%c0_96, %c0_97] : memref<128x32xf32, #tpu.memory_space<vmem>>, vector<16x32xf32>
    %316 = vector.broadcast %314 : vector<16x1xf32> to vector<16x32xf32>
    %317 = arith.mulf %316, %315 : vector<16x32xf32>
    %318 = vector.extract_strided_slice %312 {offsets = [1, 0, 0], sizes = [1, 16, 1], strides = [1, 1, 1]} : vector<8x16x1xf32> to vector<1x16x1xf32>
    %319 = vector.shape_cast %318 : vector<1x16x1xf32> to vector<16x1xf32>
    %c16_98 = arith.constant 16 : index
    %c0_99 = arith.constant 0 : index
    %320 = vector.load %arg14[%c16_98, %c0_99] : memref<128x32xf32, #tpu.memory_space<vmem>>, vector<16x32xf32>
    %321 = vector.broadcast %319 : vector<16x1xf32> to vector<16x32xf32>
    %322 = arith.mulf %321, %320 : vector<16x32xf32>
    %323 = arith.addf %317, %322 : vector<16x32xf32>
    %324 = vector.extract_strided_slice %312 {offsets = [2, 0, 0], sizes = [1, 16, 1], strides = [1, 1, 1]} : vector<8x16x1xf32> to vector<1x16x1xf32>
    %325 = vector.shape_cast %324 : vector<1x16x1xf32> to vector<16x1xf32>
    %c32_100 = arith.constant 32 : index
    %c0_101 = arith.constant 0 : index
    %326 = vector.load %arg14[%c32_100, %c0_101] : memref<128x32xf32, #tpu.memory_space<vmem>>, vector<16x32xf32>
    %327 = vector.broadcast %325 : vector<16x1xf32> to vector<16x32xf32>
    %328 = arith.mulf %327, %326 : vector<16x32xf32>
    %329 = arith.addf %323, %328 : vector<16x32xf32>
    %330 = vector.extract_strided_slice %312 {offsets = [3, 0, 0], sizes = [1, 16, 1], strides = [1, 1, 1]} : vector<8x16x1xf32> to vector<1x16x1xf32>
    %331 = vector.shape_cast %330 : vector<1x16x1xf32> to vector<16x1xf32>
    %c48_102 = arith.constant 48 : index
    %c0_103 = arith.constant 0 : index
    %332 = vector.load %arg14[%c48_102, %c0_103] : memref<128x32xf32, #tpu.memory_space<vmem>>, vector<16x32xf32>
    %333 = vector.broadcast %331 : vector<16x1xf32> to vector<16x32xf32>
    %334 = arith.mulf %333, %332 : vector<16x32xf32>
    %335 = arith.addf %329, %334 : vector<16x32xf32>
    %336 = vector.extract_strided_slice %312 {offsets = [4, 0, 0], sizes = [1, 16, 1], strides = [1, 1, 1]} : vector<8x16x1xf32> to vector<1x16x1xf32>
    %337 = vector.shape_cast %336 : vector<1x16x1xf32> to vector<16x1xf32>
    %c64_104 = arith.constant 64 : index
    %c0_105 = arith.constant 0 : index
    %338 = vector.load %arg14[%c64_104, %c0_105] : memref<128x32xf32, #tpu.memory_space<vmem>>, vector<16x32xf32>
    %339 = vector.broadcast %337 : vector<16x1xf32> to vector<16x32xf32>
    %340 = arith.mulf %339, %338 : vector<16x32xf32>
    %341 = arith.addf %335, %340 : vector<16x32xf32>
    %342 = vector.extract_strided_slice %312 {offsets = [5, 0, 0], sizes = [1, 16, 1], strides = [1, 1, 1]} : vector<8x16x1xf32> to vector<1x16x1xf32>
    %343 = vector.shape_cast %342 : vector<1x16x1xf32> to vector<16x1xf32>
    %c80_106 = arith.constant 80 : index
    %c0_107 = arith.constant 0 : index
    %344 = vector.load %arg14[%c80_106, %c0_107] : memref<128x32xf32, #tpu.memory_space<vmem>>, vector<16x32xf32>
    %345 = vector.broadcast %343 : vector<16x1xf32> to vector<16x32xf32>
    %346 = arith.mulf %345, %344 : vector<16x32xf32>
    %347 = arith.addf %341, %346 : vector<16x32xf32>
    %348 = vector.extract_strided_slice %312 {offsets = [6, 0, 0], sizes = [1, 16, 1], strides = [1, 1, 1]} : vector<8x16x1xf32> to vector<1x16x1xf32>
    %349 = vector.shape_cast %348 : vector<1x16x1xf32> to vector<16x1xf32>
    %c96_108 = arith.constant 96 : index
    %c0_109 = arith.constant 0 : index
    %350 = vector.load %arg14[%c96_108, %c0_109] : memref<128x32xf32, #tpu.memory_space<vmem>>, vector<16x32xf32>
    %351 = vector.broadcast %349 : vector<16x1xf32> to vector<16x32xf32>
    %352 = arith.mulf %351, %350 : vector<16x32xf32>
    %353 = arith.addf %347, %352 : vector<16x32xf32>
    %354 = vector.extract_strided_slice %312 {offsets = [7, 0, 0], sizes = [1, 16, 1], strides = [1, 1, 1]} : vector<8x16x1xf32> to vector<1x16x1xf32>
    %355 = vector.shape_cast %354 : vector<1x16x1xf32> to vector<16x1xf32>
    %c112_110 = arith.constant 112 : index
    %c0_111 = arith.constant 0 : index
    %356 = vector.load %arg14[%c112_110, %c0_111] : memref<128x32xf32, #tpu.memory_space<vmem>>, vector<16x32xf32>
    %357 = vector.broadcast %355 : vector<16x1xf32> to vector<16x32xf32>
    %358 = arith.mulf %357, %356 : vector<16x32xf32>
    %359 = arith.addf %353, %358 : vector<16x32xf32>
    %360 = arith.truncf %359 : vector<16x32xf32> to vector<16x32xbf16>
    %c0_112 = arith.constant 0 : index
    %c0_113 = arith.constant 0 : index
    %361 = vector.load %arg12[%c0_112, %c0_113] : memref<16x32xbf16, #tpu.memory_space<vmem>>, vector<16x32xbf16>
    tpu.vector_store %arg12[%c0_112, %c0_113], %360 {strides = array<i32>} : memref<16x32xbf16, #tpu.memory_space<vmem>>, vector<16x32xbf16>,
    return
  }
  func.func @transform_0(%arg0: i32) -> (i32, i32) {
    %c0_i32 = arith.constant 0 : i32
    %c0_i32_0 = arith.constant 0 : i32
    return %arg0, %c0_i32 : i32, i32
  }
  func.func @transform_1(%arg0: i32) -> (i32, i32) {
    %c0_i32 = arith.constant 0 : i32
    %c0_i32_0 = arith.constant 0 : i32
    %c0_i32_1 = arith.constant 0 : i32
    return %c0_i32, %c0_i32_0 : i32, i32
  }
  func.func @transform_2(%arg0: i32) -> (i32, i32) {
    %c0_i32 = arith.constant 0 : i32
    %c0_i32_0 = arith.constant 0 : i32
    %c0_i32_1 = arith.constant 0 : i32
    return %c0_i32, %c0_i32_0 : i32, i32
  }
  func.func @transform_3(%arg0: i32) -> (i32, i32) {
    %c0_i32 = arith.constant 0 : i32
    %c0_i32_0 = arith.constant 0 : i32
    %c0_i32_1 = arith.constant 0 : i32
    return %c0_i32, %c0_i32_0 : i32, i32
  }
  func.func @transform_4(%arg0: i32) -> (i32, i32) {
    %c0_i32 = arith.constant 0 : i32
    %c0_i32_0 = arith.constant 0 : i32
    %c0_i32_1 = arith.constant 0 : i32
    return %c0_i32, %c0_i32_0 : i32, i32
  }
  func.func @transform_5(%arg0: i32) -> (i32, i32) {
    %c0_i32 = arith.constant 0 : i32
    %c0_i32_0 = arith.constant 0 : i32
    %c0_i32_1 = arith.constant 0 : i32
    return %c0_i32, %c0_i32_0 : i32, i32
  }
  func.func @transform_6(%arg0: i32) -> (i32, i32) {
    %c0_i32 = arith.constant 0 : i32
    %c0_i32_0 = arith.constant 0 : i32
    %c0_i32_1 = arith.constant 0 : i32
    return %c0_i32, %c0_i32_0 : i32, i32
  }
  func.func @transform_7(%arg0: i32) -> (i32, i32) {
    %c0_i32 = arith.constant 0 : i32
    %c0_i32_0 = arith.constant 0 : i32
    %c0_i32_1 = arith.constant 0 : i32
    return %c0_i32, %c0_i32_0 : i32, i32
  }
  func.func @transform_8(%arg0: i32) -> (i32, i32) {
    %c0_i32 = arith.constant 0 : i32
    %c0_i32_0 = arith.constant 0 : i32
    %c0_i32_1 = arith.constant 0 : i32
    return %c0_i32, %c0_i32_0 : i32, i32
  }
  func.func @transform_9(%arg0: i32) -> (i32, i32) {
    %c0_i32 = arith.constant 0 : i32
    %c0_i32_0 = arith.constant 0 : i32
    %c0_i32_1 = arith.constant 0 : i32
    return %c0_i32, %c0_i32_0 : i32, i32
  }
  func.func @transform_10(%arg0: i32) -> (i32, i32) {
    %c0_i32 = arith.constant 0 : i32
    %c0_i32_0 = arith.constant 0 : i32
    %c0_i32_1 = arith.constant 0 : i32
    return %c0_i32, %c0_i32_0 : i32, i32
  }
  func.func @transform_11(%arg0: i32) -> (i32, i32) {
    %c0_i32 = arith.constant 0 : i32
    %c0_i32_0 = arith.constant 0 : i32
    return %arg0, %c0_i32 : i32, i32
  }
}

</mosaic_0001>

<llo_original>
// kernel: double_gru_forward.3
$region0: #{double_gru_forward.3}
  #allocation0 [shape = 'u32[]', space=smem, size = 0x4, offset = 0x4, fixed_abs, tag = 'smem constant byte address 0x4 - core index']
  #allocation1 [shape = 'u32[144,128]{1,0:T(1,128)}', space=vmem, size = 0x12000, scoped, tag = 'internal scratch']
  #allocation2 [shape = 'f32[32,96]{1,0:T(8,128)}', space=vmem, size = 0x4000, scoped, tag = 'scratch operand']
  #allocation3 [shape = 'f32[32,32]{1,0:T(8,128)}', space=vmem, size = 0x4000, scoped, tag = 'scratch operand']
  #allocation4 [shape = 'f32[1,1]{1,0:T(1,128)S(1)}', space=vmem, size = 0x200, scoped, tag = 'scoped memory for double_gru_forward.3']
  %s0 = inlined_call_operand.vmem [shape: bf16[32,40], index: 0, kind: input, shape index: {}]
  %s1 = inlined_call_operand.vmem [shape: bf16[40,96], index: 1, kind: input, shape index: {}]
  %s2 = inlined_call_operand.vmem [shape: f32[1,96], index: 2, kind: input, shape index: {}]
  %s3 = inlined_call_operand.vmem [shape: bf16[32,96], index: 3, kind: input, shape index: {}]
  %s4 = inlined_call_operand.vmem [shape: f32[1,32], index: 4, kind: input, shape index: {}]
  %s5 = inlined_call_operand.vmem [shape: bf16[32,32], index: 5, kind: input, shape index: {}]
  %s6 = inlined_call_operand.vmem [shape: bf16[32,32], index: 6, kind: input, shape index: {}]
  %s7 = inlined_call_operand.vmem [shape: bf16[32,32], index: 7, kind: input, shape index: {}]
  %s8 = inlined_call_operand.vmem [shape: f32[1,32], index: 8, kind: input, shape index: {}]
  %s9 = inlined_call_operand.vmem [shape: f32[1,32], index: 9, kind: input, shape index: {}]
  %s10 = inlined_call_operand.<no memory space> [shape: f32[1,1], index: 10, kind: input, shape index: {}]
  %s11 = inlined_call_operand.vmem [shape: bf16[8,40], index: 11, kind: input, shape index: {}]
  %s12 = inlined_call_operand.vmem [shape: bf16[40,32], index: 12, kind: input, shape index: {}]
  %s13 = inlined_call_operand.vmem [shape: f32[1,32], index: 13, kind: input, shape index: {}]
  %s14 = inlined_call_operand.hbm [shape: f32[2,4], index: 14, kind: output, shape index: {}]
  %s15 = sld [smem:[#allocation0]]
  $region66: #{double_gru_forward.3} parent=0
    _
  %s17 = ssub.s32 1, %s15
  %s18 = scalar_select 0, %s17, %s15
  %v19 = vstv %s10
  %20 = vst [vmem:[#allocation4] sm:$0x1] %v19
  $region1: #{double_gru_forward.3} parent=0
    #allocation5 [shape = 'u8[1024]{0}', space=vmem, size = 0x400, scoped, tag = 'output window, operand 0, single buffered']
    #allocation6 [shape = 's32[1]{0}', space=sflag, size = 0x4, scoped, tag = 'scoped memory for double_gru_forward.3']
    %21 = vsyncpa [#allocation6], 0
    // Predicated region
    $region2: #{double_gru_forward.3} parent=1 // pred_check
      _
    $region3: #{double_gru_forward.3} parent=1 // pred_check_branch
      %23 = sbr.rel (0) target = $region5
    $region4: #{double_gru_forward.3} parent=1 // pred_region
      _
    $region5: #{double_gru_forward.3} parent=1 // pred_fallthru
      _
    // Predicated region
    $region6: #{double_gru_forward.3} parent=1 // pred_check
      _
    $region7: #{double_gru_forward.3} parent=1 // pred_check_branch
      %25 = sbr.rel (0) target = $region9
    $region8: #{double_gru_forward.3} parent=1 // pred_region
      _
    $region9: #{double_gru_forward.3} parent=1 // pred_fallthru
      _
    // Predicated region
    $region10: #{double_gru_forward.3} parent=1 // pred_check
      _
    $region11: #{double_gru_forward.3} parent=1 // pred_check_branch
      %27 = sbr.rel (0) target = $region13
    $region12: #{double_gru_forward.3} parent=1 // pred_region
      _
    $region13: #{double_gru_forward.3} parent=1 // pred_fallthru
      _
    // Predicated region
    $region14: #{double_gru_forward.3} parent=1 // pred_check
      _
    $region15: #{double_gru_forward.3} parent=1 // pred_check_branch
      %29 = sbr.rel (0) target = $region17
    $region16: #{double_gru_forward.3} parent=1 // pred_region
      _
    $region17: #{double_gru_forward.3} parent=1 // pred_fallthru
      _
    // Predicated region
    $region18: #{double_gru_forward.3} parent=1 // pred_check
      _
    $region19: #{double_gru_forward.3} parent=1 // pred_check_branch
      %31 = sbr.rel (0) target = $region21
    $region20: #{double_gru_forward.3} parent=1 // pred_region
      _
    $region21: #{double_gru_forward.3} parent=1 // pred_fallthru
      _
    // Predicated region
    $region22: #{double_gru_forward.3} parent=1 // pred_check
      _
    $region23: #{double_gru_forward.3} parent=1 // pred_check_branch
      %33 = sbr.rel (0) target = $region25
    $region24: #{double_gru_forward.3} parent=1 // pred_region
      _
    $region25: #{double_gru_forward.3} parent=1 // pred_fallthru
      _
    // Predicated region
    $region26: #{double_gru_forward.3} parent=1 // pred_check
      _
    $region27: #{double_gru_forward.3} parent=1 // pred_check_branch
      %35 = sbr.rel (0) target = $region29
    $region28: #{double_gru_forward.3} parent=1 // pred_region
      _
    $region29: #{double_gru_forward.3} parent=1 // pred_fallthru
      _
    // Predicated region
    $region30: #{double_gru_forward.3} parent=1 // pred_check
      _
    $region31: #{double_gru_forward.3} parent=1 // pred_check_branch
      %37 = sbr.rel (0) target = $region33
    $region32: #{double_gru_forward.3} parent=1 // pred_region
      _
    $region33: #{double_gru_forward.3} parent=1 // pred_fallthru
      _
    // Predicated region
    $region34: #{double_gru_forward.3} parent=1 // pred_check
      _
    $region35: #{double_gru_forward.3} parent=1 // pred_check_branch
      %39 = sbr.rel (0) target = $region37
    $region36: #{double_gru_forward.3} parent=1 // pred_region
      _
    $region37: #{double_gru_forward.3} parent=1 // pred_fallthru
      _
    // Predicated region
    $region38: #{double_gru_forward.3} parent=1 // pred_check
      _
    $region39: #{double_gru_forward.3} parent=1 // pred_check_branch
      %41 = sbr.rel (0) target = $region41
    $region40: #{double_gru_forward.3} parent=1 // pred_region
      _
    $region41: #{double_gru_forward.3} parent=1 // pred_fallthru
      _
    // Predicated region
    $region42: #{double_gru_forward.3} parent=1 // pred_check
      _
    $region43: #{double_gru_forward.3} parent=1 // pred_check_branch
      %43 = sbr.rel (0) target = $region45
    $region44: #{double_gru_forward.3} parent=1 // pred_region
      _
    $region45: #{double_gru_forward.3} parent=1 // pred_fallthru
      _
    // Predicated region
    $region46: #{double_gru_forward.3} parent=1 // pred_check
      _
    $region47: #{double_gru_forward.3} parent=1 // pred_check_branch
      %45 = sbr.rel (0) target = $region49
    $region48: #{double_gru_forward.3} parent=1 // pred_region
      _
    $region49: #{double_gru_forward.3} parent=1 // pred_fallthru
      _
    // Predicated region
    $region50: #{double_gru_forward.3} parent=1 // pred_check
      _
    $region51: #{double_gru_forward.3} parent=1 // pred_check_branch
      %47 = sbr.rel (0) target = $region53
    $region52: #{double_gru_forward.3} parent=1 // pred_region
      _
    $region53: #{double_gru_forward.3} parent=1 // pred_fallthru
      _
    // Predicated region
    $region54: #{double_gru_forward.3} parent=1 // pred_check
      _
    $region55: #{double_gru_forward.3} parent=1 // pred_check_branch
      %49 = sbr.rel (0) target = $region57
    $region56: #{double_gru_forward.3} parent=1 // pred_region
      _
    $region57: #{double_gru_forward.3} parent=1 // pred_fallthru
      _
    %v51 = vld [vmem:[%s0] sm:$0xf]
    %v52 = vld [vmem:[%s0 + $0x4] sm:$0xf]
    %v53 = vld [vmem:[%s0 + $0x8] sm:$0xf]
    %v54 = vld [vmem:[%s0 + $0xc] sm:$0xf]
    %v55 = vld [vmem:[%s1] sm:$0xf]
    %v56 = vld [vmem:[%s1 + $0x4] sm:$0xf]
    %v57 = vld [vmem:[%s1 + $0x8] sm:$0xf]
    %v58 = vld [vmem:[%s1 + $0xc] sm:$0xf]
    %v59 = vld [vmem:[%s1 + $0x10] sm:$0xf]
    %v60 = vld [vmem:[%s2] sm:$0x1]
    %v61 = vld [vmem:[%s3] sm:$0xf]
    %v62 = vld [vmem:[%s3 + $0x4] sm:$0xf]
    %v63 = vld [vmem:[%s3 + $0x8] sm:$0xf]
    %v64 = vld [vmem:[%s3 + $0xc] sm:$0xf]
    %v65 = vld [vmem:[%s4] sm:$0x1]
    %v66 = vld [vmem:[%s5] sm:$0xf]
    %v67 = vld [vmem:[%s5 + $0x4] sm:$0xf]
    %v68 = vld [vmem:[%s5 + $0x8] sm:$0xf]
    %v69 = vld [vmem:[%s5 + $0xc] sm:$0xf]
    %v70 = vld [vmem:[%s6] sm:$0xf]
    %v71 = vld [vmem:[%s6 + $0x4] sm:$0xf]
    %v72 = vld [vmem:[%s6 + $0x8] sm:$0xf]
    %v73 = vld [vmem:[%s6 + $0xc] sm:$0xf]
    %v74 = vld [vmem:[%s7] sm:$0xf]
    %v75 = vld [vmem:[%s7 + $0x4] sm:$0xf]
    %v76 = vld [vmem:[%s7 + $0x8] sm:$0xf]
    %v77 = vld [vmem:[%s7 + $0xc] sm:$0xf]
    %v78 = vld [vmem:[%s8] sm:$0x1]
    %v79 = vld [vmem:[%s9] sm:$0x1]
    %v80 = vld [vmem:[#allocation4] sm:$0x1]
    %v82 = vlaneseq
    %v83 = vshrl.u32 %v82, 7
    %v84 = vsub.s32 0, %v83
    %v85 = vrot.slane %v60, %v84
    %v91 = vunpack.c.l.b16 %v51
    %v92 = vunpack.c.l.b16 %v52
    %v93 = vunpack.c.l.b16 %v53
    %v94 = vunpack.c.l.b16 %v54
    %v95 = vpack.c.b16 %v92, %v91
    %v96 = vpack.c.b16 %v94, %v93
    %v102 = vunpack.c.l.b16 %v55
    %v103 = vunpack.c.l.b16 %v56
    %v104 = vunpack.c.l.b16 %v57
    %v105 = vunpack.c.l.b16 %v58
    %v106 = vunpack.c.l.b16 %v59
    %v107 = vpack.c.b16 %v103, %v102
    %v108 = vpack.c.b16 %v105, %v104
    %v109 = vpack.c.b16 %v106, %v106
    %vm112 = vcmask 326656
    %v114 = vsel %vm112, %v95, 0
    %v117 = vsel %vm112, %v96, 0
    %vm119 = vcmask 1043456
    %v121 = vsel %vm119, %v109, 0
    %123 = vmatprep.subr.bf16.mxu0 0
    %124 = vmatpush1.bf16.msra.mxu0 %v107
    %125 = vmatprep.subr.bf16.mxu0 0
    %126 = vmatpush1.bf16.msra.mxu0 %v108
    %127 = vmatprep.subr.bf16.mxu0 0
    %128 = vmatpush1.bf16.msra.mxu0 %v121
    %129 = vmatprep.subr.bf16.mxu0 0
    %130 = vmatpush1.bf16.msra.mxu0 0
    %131 = vmatprep.subr.bf16.mxu0 0
    %132 = vmatpush1.bf16.msra.mxu0 0
    %133 = vmatprep.subr.bf16.mxu0 0
    %134 = vmatpush1.bf16.msra.mxu0 0
    %135 = vmatprep.subr.bf16.mxu0 0
    %136 = vmatpush1.bf16.msra.mxu0 0
    %137 = vmatprep.subr.bf16.mxu0 0
    %138 = vmatpush1.bf16.msra.mxu0 0
    %139 = vmatprep.subr.bf16.mxu0 0
    %140 = vmatpush1.bf16.msra.mxu0 0
    %141 = vmatprep.subr.bf16.mxu0 0
    %142 = vmatpush1.bf16.msra.mxu0 0
    %143 = vmatprep.subr.bf16.mxu0 0
    %144 = vmatpush1.bf16.msra.mxu0 0
    %145 = vmatprep.subr.bf16.mxu0 0
    %146 = vmatpush1.bf16.msra.mxu0 0
    %147 = vmatprep.subr.bf16.mxu0 0
    %148 = vmatpush1.bf16.msra.mxu0 0
    %149 = vmatprep.subr.bf16.mxu0 0
    %150 = vmatpush1.bf16.msra.mxu0 0
    %151 = vmatprep.subr.bf16.mxu0 0
    %152 = vmatpush1.bf16.msra.mxu0 0
    %153 = vmatprep.subr.bf16.mxu0 0
    %154 = vmatpush1.bf16.msra.mxu0 0
    %155 = vmatprep.mubr.bf16.mxu0 0
    %156 = vmatmul.mubr.bf16.gmra.mrb[0].mxu0 %v114
    %v157 = vpop.f32.mrb[0].mxu0
    %v158 = vadd.f32 %v85, %v157
    %v159 = vpop.f32.mrb[0].mxu0
    %v160 = vpop.f32.mrb[0].mxu0
    %v161 = vadd.f32 %v85, %v160
    %v162 = vpop.f32.mrb[0].mxu0
    %163 = vmatprep.mubr.bf16.mxu0 0
    %164 = vmatmul.mubr.bf16.gmra.mrb[0].mxu0 %v117
    %v165 = vpop.f32.mrb[0].mxu0
    %v166 = vadd.f32 %v85, %v165
    %v167 = vpop.f32.mrb[0].mxu0
    %v168 = vpop.f32.mrb[0].mxu0
    %v169 = vadd.f32 %v85, %v168
    %v170 = vpop.f32.mrb[0].mxu0
    %171 = vdwg.mxu0
    %vm172 = vcmask 785408
    %173 = vst.msk [vmem:[#allocation2] sm:$0xff] %vm172, %v158
    %174 = vst.msk [vmem:[#allocation2 + $0x8] sm:$0xff] %vm172, %v161
    %175 = vst.msk [vmem:[#allocation2 + $0x10] sm:$0xff] %vm172, %v166
    %176 = vst.msk [vmem:[#allocation2 + $0x18] sm:$0xff] %vm172, %v169
    %v177 = vld [vmem:[#allocation2] sm:$0xff]
    %v178 = vxor.u32 %v177, 2147483648
    %v179 = vmul.f32 %v178, 1.442695
    %v180 = vpow.pop %v179
    %v181 = vadd.f32 %v180, 1.0
    %v182 = vrcp.pop %v181
    %v183 = vmul.f32 1.0, %v182
    %v184 = vsub.f32 1.0, %v183
    %v186 = vlaneseq
    %v187 = vshrl.u32 %v186, 7
    %v188 = vsub.s32 0, %v187
    %v189 = vrot.slane %v65, %v188
    %v191 = vmul.f32 %v183, %v189
    %193 = vrot.lane.b32.xlu0 %v191, 64
    %v194 = vpop.permute.xlu0 %193
    %v196 = vadd.f32 %v177, %v194
    %v197 = vtanh.pop %v196
    %199 = vrot.lane.b32.xlu0 %v197, 96
    %v200 = vpop.permute.xlu0 %199
    %v202 = vmul.f32 %v184, %v200
    %204 = vrot.lane.b32.xlu0 %v202, 96
    %v205 = vpop.permute.xlu0 %204
    %vm207 = vcmask 261120
    %208 = vst.msk [vmem:[#allocation3] sm:$0xff] %vm207, %v205
    %v209 = vld [vmem:[#allocation2 + $0x8] sm:$0xff]
    %v210 = vpack.c.bf16 %v202, %v202
    %212 = vrot.lane.b32.xlu0 %v210, 96
    %v213 = vpop.permute.xlu0 %212
    %v218 = vunpack.c.l.b16 %v61
    %v219 = vunpack.c.l.b16 %v62
    %v220 = vunpack.c.l.b16 %v63
    %v221 = vunpack.c.l.b16 %v64
    %v222 = vpack.c.b16 %v219, %v218
    %v223 = vpack.c.b16 %v221, %v220
    %v227 = vsel %vm207, %v213, 0
    %229 = vmatprep.subr.bf16.mxu0 0
    %230 = vmatpush1.bf16.msra.mxu0 %v222
    %231 = vmatprep.subr.bf16.mxu0 0
    %232 = vmatpush1.bf16.msra.mxu0 %v223
    %233 = vmatprep.subr.bf16.mxu0 0
    %234 = vmatpush1.bf16.msra.mxu0 0
    %235 = vmatprep.subr.bf16.mxu0 0
    %236 = vmatpush1.bf16.msra.mxu0 0
    %237 = vmatprep.subr.bf16.mxu0 0
    %238 = vmatpush1.bf16.msra.mxu0 0
    %239 = vmatprep.subr.bf16.mxu0 0
    %240 = vmatpush1.bf16.msra.mxu0 0
    %241 = vmatprep.subr.bf16.mxu0 0
    %242 = vmatpush1.bf16.msra.mxu0 0
    %243 = vmatprep.subr.bf16.mxu0 0
    %244 = vmatpush1.bf16.msra.mxu0 0
    %245 = vmatprep.subr.bf16.mxu0 0
    %246 = vmatpush1.bf16.msra.mxu0 0
    %247 = vmatprep.subr.bf16.mxu0 0
    %248 = vmatpush1.bf16.msra.mxu0 0
    %249 = vmatprep.subr.bf16.mxu0 0
    %250 = vmatpush1.bf16.msra.mxu0 0
    %251 = vmatprep.subr.bf16.mxu0 0
    %252 = vmatpush1.bf16.msra.mxu0 0
    %253 = vmatprep.subr.bf16.mxu0 0
    %254 = vmatpush1.bf16.msra.mxu0 0
    %255 = vmatprep.subr.bf16.mxu0 0
    %256 = vmatpush1.bf16.msra.mxu0 0
    %257 = vmatprep.subr.bf16.mxu0 0
    %258 = vmatpush1.bf16.msra.mxu0 0
    %259 = vmatprep.subr.bf16.mxu0 0
    %260 = vmatpush1.bf16.msra.mxu0 0
    %261 = vmatprep.mubr.bf16.mxu0 0
    %262 = vmatmul.mubr.bf16.gmra.mrb[0].mxu0 %v227
    %v263 = vpop.f32.mrb[0].mxu0
    %v264 = vadd.f32 0.0, %v263
    %v265 = vpop.f32.mrb[0].mxu0
    %v266 = vpop.f32.mrb[0].mxu0
    %v267 = vpop.f32.mrb[0].mxu0
    %268 = vdwg.mxu0
    %v269 = vadd.f32 %v209, %v264
    %v270 = vxor.u32 %v269, 2147483648
    %v271 = vmul.f32 %v270, 1.442695
    %v272 = vpow.pop %v271
    %v273 = vadd.f32 %v272, 1.0
    %v274 = vrcp.pop %v273
    %v275 = vmul.f32 1.0, %v274
    %276 = vrot.lane.b32.xlu0 %v189, 64
    %v277 = vpop.permute.xlu0 %276
    %v279 = vadd.f32 %v264, %v277
    %281 = vrot.lane.b32.xlu0 %v279, 64
    %v282 = vpop.permute.xlu0 %281
    %v284 = vmul.f32 %v275, %v282
    %286 = vrot.lane.b32.xlu0 %v284, 64
    %v287 = vpop.permute.xlu0 %286
    %v289 = vadd.f32 %v209, %v287
    %v290 = vtanh.pop %v289
    %v291 = vsub.f32 1.0, %v275
    %293 = vrot.lane.b32.xlu0 %v290, 96
    %v294 = vpop.permute.xlu0 %293
    %v296 = vmul.f32 %v291, %v294
    %v297 = vmul.f32 %v275, %v202
    %v298 = vadd.f32 %v296, %v297
    %300 = vrot.lane.b32.xlu0 %v298, 96
    %v301 = vpop.permute.xlu0 %300
    %303 = vst.msk [vmem:[#allocation3 + $0x8] sm:$0xff] %vm207, %v301
    %v304 = vld [vmem:[#allocation2 + $0x10] sm:$0xff]
    %v305 = vpack.c.bf16 %v298, %v298
    %307 = vrot.lane.b32.xlu0 %v305, 96
    %v308 = vpop.permute.xlu0 %307
    %v310 = vsel %vm207, %v308, 0
    %312 = vmatprep.subr.bf16.mxu0 0
    %313 = vmatpush1.bf16.msra.mxu0 %v222
    %314 = vmatprep.subr.bf16.mxu0 0
    %315 = vmatpush1.bf16.msra.mxu0 %v223
    %316 = vmatprep.subr.bf16.mxu0 0
    %317 = vmatpush1.bf16.msra.mxu0 0
    %318 = vmatprep.subr.bf16.mxu0 0
    %319 = vmatpush1.bf16.msra.mxu0 0
    %320 = vmatprep.subr.bf16.mxu0 0
    %321 = vmatpush1.bf16.msra.mxu0 0
    %322 = vmatprep.subr.bf16.mxu0 0
    %323 = vmatpush1.bf16.msra.mxu0 0
    %324 = vmatprep.subr.bf16.mxu0 0
    %325 = vmatpush1.bf16.msra.mxu0 0
    %326 = vmatprep.subr.bf16.mxu0 0
    %327 = vmatpush1.bf16.msra.mxu0 0
    %328 = vmatprep.subr.bf16.mxu0 0
    %329 = vmatpush1.bf16.msra.mxu0 0
    %330 = vmatprep.subr.bf16.mxu0 0
    %331 = vmatpush1.bf16.msra.mxu0 0
    %332 = vmatprep.subr.bf16.mxu0 0
    %333 = vmatpush1.bf16.msra.mxu0 0
    %334 = vmatprep.subr.bf16.mxu0 0
    %335 = vmatpush1.bf16.msra.mxu0 0
    %336 = vmatprep.subr.bf16.mxu0 0
    %337 = vmatpush1.bf16.msra.mxu0 0
    %338 = vmatprep.subr.bf16.mxu0 0
    %339 = vmatpush1.bf16.msra.mxu0 0
    %340 = vmatprep.subr.bf16.mxu0 0
    %341 = vmatpush1.bf16.msra.mxu0 0
    %342 = vmatprep.subr.bf16.mxu0 0
    %343 = vmatpush1.bf16.msra.mxu0 0
    %344 = vmatprep.mubr.bf16.mxu0 0
    %345 = vmatmul.mubr.bf16.gmra.mrb[0].mxu0 %v310
    %v346 = vpop.f32.mrb[0].mxu0
    %v347 = vadd.f32 0.0, %v346
    %v348 = vpop.f32.mrb[0].mxu0
    %v349 = vpop.f32.mrb[0].mxu0
    %v350 = vpop.f32.mrb[0].mxu0
    %351 = vdwg.mxu0
    %v352 = vadd.f32 %v304, %v347
    %v353 = vxor.u32 %v352, 2147483648
    %v354 = vmul.f32 %v353, 1.442695
    %v355 = vpow.pop %v354
    %v356 = vadd.f32 %v355, 1.0
    %v357 = vrcp.pop %v356
    %v358 = vmul.f32 1.0, %v357
    %v359 = vadd.f32 %v347, %v277
    %361 = vrot.lane.b32.xlu0 %v359, 64
    %v362 = vpop.permute.xlu0 %361
    %v364 = vmul.f32 %v358, %v362
    %366 = vrot.lane.b32.xlu0 %v364, 64
    %v367 = vpop.permute.xlu0 %366
    %v369 = vadd.f32 %v304, %v367
    %v370 = vtanh.pop %v369
    %v371 = vsub.f32 1.0, %v358
    %373 = vrot.lane.b32.xlu0 %v370, 96
    %v374 = vpop.permute.xlu0 %373
    %v376 = vmul.f32 %v371, %v374
    %v377 = vmul.f32 %v358, %v298
    %v378 = vadd.f32 %v376, %v377
    %380 = vrot.lane.b32.xlu0 %v378, 96
    %v381 = vpop.permute.xlu0 %380
    %383 = vst.msk [vmem:[#allocation3 + $0x10] sm:$0xff] %vm207, %v381
    %v384 = vld [vmem:[#allocation2 + $0x18] sm:$0xff]
    %v385 = vpack.c.bf16 %v378, %v378
    %387 = vrot.lane.b32.xlu0 %v385, 96
    %v388 = vpop.permute.xlu0 %387
    %v390 = vsel %vm207, %v388, 0
    %392 = vmatprep.subr.bf16.mxu0 0
    %393 = vmatpush1.bf16.msra.mxu0 %v222
    %394 = vmatprep.subr.bf16.mxu0 0
    %395 = vmatpush1.bf16.msra.mxu0 %v223
    %396 = vmatprep.subr.bf16.mxu0 0
    %397 = vmatpush1.bf16.msra.mxu0 0
    %398 = vmatprep.subr.bf16.mxu0 0
    %399 = vmatpush1.bf16.msra.mxu0 0
    %400 = vmatprep.subr.bf16.mxu0 0
    %401 = vmatpush1.bf16.msra.mxu0 0
    %402 = vmatprep.subr.bf16.mxu0 0
    %403 = vmatpush1.bf16.msra.mxu0 0
    %404 = vmatprep.subr.bf16.mxu0 0
    %405 = vmatpush1.bf16.msra.mxu0 0
    %406 = vmatprep.subr.bf16.mxu0 0
    %407 = vmatpush1.bf16.msra.mxu0 0
    %408 = vmatprep.subr.bf16.mxu0 0
    %409 = vmatpush1.bf16.msra.mxu0 0
    %410 = vmatprep.subr.bf16.mxu0 0
    %411 = vmatpush1.bf16.msra.mxu0 0
    %412 = vmatprep.subr.bf16.mxu0 0
    %413 = vmatpush1.bf16.msra.mxu0 0
    %414 = vmatprep.subr.bf16.mxu0 0
    %415 = vmatpush1.bf16.msra.mxu0 0
    %416 = vmatprep.subr.bf16.mxu0 0
    %417 = vmatpush1.bf16.msra.mxu0 0
    %418 = vmatprep.subr.bf16.mxu0 0
    %419 = vmatpush1.bf16.msra.mxu0 0
    %420 = vmatprep.subr.bf16.mxu0 0
    %421 = vmatpush1.bf16.msra.mxu0 0
    %422 = vmatprep.subr.bf16.mxu0 0
    %423 = vmatpush1.bf16.msra.mxu0 0
    %424 = vmatprep.mubr.bf16.mxu0 0
    %425 = vmatmul.mubr.bf16.gmra.mrb[0].mxu0 %v390
    %v426 = vpop.f32.mrb[0].mxu0
    %v427 = vadd.f32 0.0, %v426
    %v428 = vpop.f32.mrb[0].mxu0
    %v429 = vpop.f32.mrb[0].mxu0
    %v430 = vpop.f32.mrb[0].mxu0
    %431 = vdwg.mxu0
    %v432 = vadd.f32 %v384, %v427
    %v433 = vxor.u32 %v432, 2147483648
    %v434 = vmul.f32 %v433, 1.442695
    %v435 = vpow.pop %v434
    %v436 = vadd.f32 %v435, 1.0
    %v437 = vrcp.pop %v436
    %v438 = vmul.f32 1.0, %v437
    %v439 = vadd.f32 %v427, %v277
    %441 = vrot.lane.b32.xlu0 %v439, 64
    %v442 = vpop.permute.xlu0 %441
    %v444 = vmul.f32 %v438, %v442
    %446 = vrot.lane.b32.xlu0 %v444, 64
    %v447 = vpop.permute.xlu0 %446
    %v449 = vadd.f32 %v384, %v447
    %v450 = vtanh.pop %v449
    %v451 = vsub.f32 1.0, %v438
    %453 = vrot.lane.b32.xlu0 %v450, 96
    %v454 = vpop.permute.xlu0 %453
    %v456 = vmul.f32 %v451, %v454
    %v457 = vmul.f32 %v438, %v378
    %v458 = vadd.f32 %v456, %v457
    %460 = vrot.lane.b32.xlu0 %v458, 96
    %v461 = vpop.permute.xlu0 %460
    %463 = vst.msk [vmem:[#allocation3 + $0x18] sm:$0xff] %vm207, %v461
    %v464 = vld [vmem:[#allocation3] sm:$0xff]
    %v465 = vld [vmem:[#allocation3 + $0x8] sm:$0xff]
    %v466 = vld [vmem:[#allocation3 + $0x10] sm:$0xff]
    %v467 = vld [vmem:[#allocation3 + $0x18] sm:$0xff]
    %v468 = vpack.c.bf16 %v465, %v464
    %v469 = vpack.c.bf16 %v467, %v466
    %v474 = vunpack.c.l.b16 %v66
    %v475 = vunpack.c.l.b16 %v67
    %v476 = vunpack.c.l.b16 %v68
    %v477 = vunpack.c.l.b16 %v69
    %v478 = vpack.c.b16 %v475, %v474
    %v479 = vpack.c.b16 %v477, %v476
    %v483 = vsel %vm207, %v468, 0
    %v486 = vsel %vm207, %v469, 0
    %488 = vmatprep.subr.bf16.mxu0 0
    %489 = vmatpush1.bf16.msra.mxu0 %v478
    %490 = vmatprep.subr.bf16.mxu0 0
    %491 = vmatpush1.bf16.msra.mxu0 %v479
    %492 = vmatprep.subr.bf16.mxu0 0
    %493 = vmatpush1.bf16.msra.mxu0 0
    %494 = vmatprep.subr.bf16.mxu0 0
    %495 = vmatpush1.bf16.msra.mxu0 0
    %496 = vmatprep.subr.bf16.mxu0 0
    %497 = vmatpush1.bf16.msra.mxu0 0
    %498 = vmatprep.subr.bf16.mxu0 0
    %499 = vmatpush1.bf16.msra.mxu0 0
    %500 = vmatprep.subr.bf16.mxu0 0
    %501 = vmatpush1.bf16.msra.mxu0 0
    %502 = vmatprep.subr.bf16.mxu0 0
    %503 = vmatpush1.bf16.msra.mxu0 0
    %504 = vmatprep.subr.bf16.mxu0 0
    %505 = vmatpush1.bf16.msra.mxu0 0
    %506 = vmatprep.subr.bf16.mxu0 0
    %507 = vmatpush1.bf16.msra.mxu0 0
    %508 = vmatprep.subr.bf16.mxu0 0
    %509 = vmatpush1.bf16.msra.mxu0 0
    %510 = vmatprep.subr.bf16.mxu0 0
    %511 = vmatpush1.bf16.msra.mxu0 0
    %512 = vmatprep.subr.bf16.mxu0 0
    %513 = vmatpush1.bf16.msra.mxu0 0
    %514 = vmatprep.subr.bf16.mxu0 0
    %515 = vmatpush1.bf16.msra.mxu0 0
    %516 = vmatprep.subr.bf16.mxu0 0
    %517 = vmatpush1.bf16.msra.mxu0 0
    %518 = vmatprep.subr.bf16.mxu0 0
    %519 = vmatpush1.bf16.msra.mxu0 0
    %520 = vmatprep.mubr.bf16.mxu0 0
    %521 = vmatmul.mubr.bf16.gmra.mrb[0].mxu0 %v483
    %v522 = vpop.f32.mrb[0].mxu0
    %v523 = vadd.f32 0.0, %v522
    %v524 = vpop.f32.mrb[0].mxu0
    %v525 = vpop.f32.mrb[0].mxu0
    %v526 = vadd.f32 0.0, %v525
    %v527 = vpop.f32.mrb[0].mxu0
    %528 = vmatprep.mubr.bf16.mxu0 0
    %529 = vmatmul.mubr.bf16.gmra.mrb[0].mxu0 %v486
    %v530 = vpop.f32.mrb[0].mxu0
    %v531 = vadd.f32 0.0, %v530
    %v532 = vpop.f32.mrb[0].mxu0
    %v533 = vpop.f32.mrb[0].mxu0
    %v534 = vadd.f32 0.0, %v533
    %v535 = vpop.f32.mrb[0].mxu0
    %536 = vdwg.mxu0
    %v537 = vld [vmem:[#allocation3] sm:$0xff]
    %v538 = vld [vmem:[#allocation3 + $0x8] sm:$0xff]
    %v539 = vadd.f32 %v537, %v538
    %v540 = vld [vmem:[#allocation3 + $0x10] sm:$0xff]
    %v541 = vadd.f32 %v539, %v540
    %v542 = vadd.f32 %v541, %v467
    %v543 = vmul.f32 %v542, 0.25
    %v544 = vpack.c.bf16 %v458, %v458
    %v545 = vpack.c.bf16 %v543, %v543
    %v550 = vunpack.c.l.b16 %v74
    %v551 = vunpack.c.l.b16 %v75
    %v552 = vunpack.c.l.b16 %v76
    %v553 = vunpack.c.l.b16 %v77
    %v554 = vpack.c.b16 %v551, %v550
    %v555 = vpack.c.b16 %v553, %v552
    %v559 = vsel %vm207, %v545, 0
    %561 = vmatprep.subr.bf16.mxu0 0
    %562 = vmatpush1.bf16.msra.mxu0 %v554
    %563 = vmatprep.subr.bf16.mxu0 0
    %564 = vmatpush1.bf16.msra.mxu0 %v555
    %565 = vmatprep.subr.bf16.mxu0 0
    %566 = vmatpush1.bf16.msra.mxu0 0
    %567 = vmatprep.subr.bf16.mxu0 0
    %568 = vmatpush1.bf16.msra.mxu0 0
    %569 = vmatprep.subr.bf16.mxu0 0
    %570 = vmatpush1.bf16.msra.mxu0 0
    %571 = vmatprep.subr.bf16.mxu0 0
    %572 = vmatpush1.bf16.msra.mxu0 0
    %573 = vmatprep.subr.bf16.mxu0 0
    %574 = vmatpush1.bf16.msra.mxu0 0
    %575 = vmatprep.subr.bf16.mxu0 0
    %576 = vmatpush1.bf16.msra.mxu0 0
    %577 = vmatprep.subr.bf16.mxu0 0
    %578 = vmatpush1.bf16.msra.mxu0 0
    %579 = vmatprep.subr.bf16.mxu0 0
    %580 = vmatpush1.bf16.msra.mxu0 0
    %581 = vmatprep.subr.bf16.mxu0 0
    %582 = vmatpush1.bf16.msra.mxu0 0
    %583 = vmatprep.subr.bf16.mxu0 0
    %584 = vmatpush1.bf16.msra.mxu0 0
    %585 = vmatprep.subr.bf16.mxu0 0
    %586 = vmatpush1.bf16.msra.mxu0 0
    %587 = vmatprep.subr.bf16.mxu0 0
    %588 = vmatpush1.bf16.msra.mxu0 0
    %589 = vmatprep.subr.bf16.mxu0 0
    %590 = vmatpush1.bf16.msra.mxu0 0
    %591 = vmatprep.subr.bf16.mxu0 0
    %592 = vmatpush1.bf16.msra.mxu0 0
    %593 = vmatprep.mubr.bf16.mxu0 0
    %594 = vmatmul.mubr.bf16.gmra.mrb[0].mxu0 %v559
    %v595 = vpop.f32.mrb[0].mxu0
    %v596 = vadd.f32 0.0, %v595
    %v597 = vpop.f32.mrb[0].mxu0
    %v598 = vpop.f32.mrb[0].mxu0
    %v599 = vpop.f32.mrb[0].mxu0
    %600 = vdwg.mxu0
    %602 = vrot.lane.b32.xlu0 %v544, 96
    %v603 = vpop.permute.xlu0 %602
    %v608 = vunpack.c.l.b16 %v70
    %v609 = vunpack.c.l.b16 %v71
    %v610 = vunpack.c.l.b16 %v72
    %v611 = vunpack.c.l.b16 %v73
    %v612 = vpack.c.b16 %v609, %v608
    %v613 = vpack.c.b16 %v611, %v610
    %v617 = vsel %vm207, %v603, 0
    %619 = vmatprep.subr.bf16.mxu0 0
    %620 = vmatpush1.bf16.msra.mxu0 %v612
    %621 = vmatprep.subr.bf16.mxu0 0
    %622 = vmatpush1.bf16.msra.mxu0 %v613
    %623 = vmatprep.subr.bf16.mxu0 0
    %624 = vmatpush1.bf16.msra.mxu0 0
    %625 = vmatprep.subr.bf16.mxu0 0
    %626 = vmatpush1.bf16.msra.mxu0 0
    %627 = vmatprep.subr.bf16.mxu0 0
    %628 = vmatpush1.bf16.msra.mxu0 0
    %629 = vmatprep.subr.bf16.mxu0 0
    %630 = vmatpush1.bf16.msra.mxu0 0
    %631 = vmatprep.subr.bf16.mxu0 0
    %632 = vmatpush1.bf16.msra.mxu0 0
    %633 = vmatprep.subr.bf16.mxu0 0
    %634 = vmatpush1.bf16.msra.mxu0 0
    %635 = vmatprep.subr.bf16.mxu0 0
    %636 = vmatpush1.bf16.msra.mxu0 0
    %637 = vmatprep.subr.bf16.mxu0 0
    %638 = vmatpush1.bf16.msra.mxu0 0
    %639 = vmatprep.subr.bf16.mxu0 0
    %640 = vmatpush1.bf16.msra.mxu0 0
    %641 = vmatprep.subr.bf16.mxu0 0
    %642 = vmatpush1.bf16.msra.mxu0 0
    %643 = vmatprep.subr.bf16.mxu0 0
    %644 = vmatpush1.bf16.msra.mxu0 0
    %645 = vmatprep.subr.bf16.mxu0 0
    %646 = vmatpush1.bf16.msra.mxu0 0
    %647 = vmatprep.subr.bf16.mxu0 0
    %648 = vmatpush1.bf16.msra.mxu0 0
    %649 = vmatprep.subr.bf16.mxu0 0
    %650 = vmatpush1.bf16.msra.mxu0 0
    %651 = vmatprep.mubr.bf16.mxu0 0
    %652 = vmatmul.mubr.bf16.gmra.mrb[0].mxu0 %v617
    %v653 = vpop.f32.mrb[0].mxu0
    %v654 = vadd.f32 %v596, %v653
    %v655 = vpop.f32.mrb[0].mxu0
    %v656 = vpop.f32.mrb[0].mxu0
    %v657 = vpop.f32.mrb[0].mxu0
    %658 = vdwg.mxu0
    %v660 = vlaneseq
    %v661 = vshrl.u32 %v660, 7
    %v662 = vsub.s32 0, %v661
    %v663 = vrot.slane %v78, %v662
    %v665 = vadd.f32 %v654, %v663
    %v666 = vadd.f32 %v523, %v665
    %v667 = vadd.f32 %v526, %v665
    %v668 = vadd.f32 %v531, %v665
    %v669 = vadd.f32 %v534, %v665
    %v670 = vxor.u32 %v666, 2147483648
    %v671 = vxor.u32 %v667, 2147483648
    %v672 = vxor.u32 %v668, 2147483648
    %v673 = vxor.u32 %v669, 2147483648
    %v674 = vmul.f32 %v670, 1.442695
    %v675 = vpow.pop %v674
    %v676 = vmul.f32 %v671, 1.442695
    %v677 = vpow.pop %v676
    %v678 = vmul.f32 %v672, 1.442695
    %v679 = vpow.pop %v678
    %v680 = vmul.f32 %v673, 1.442695
    %v681 = vpow.pop %v680
    %v682 = vadd.f32 %v675, 1.0
    %v683 = vadd.f32 %v677, 1.0
    %v684 = vadd.f32 %v679, 1.0
    %v685 = vadd.f32 %v681, 1.0
    %v686 = vrcp.pop %v682
    %v687 = vmul.f32 1.0, %v686
    %v688 = vrcp.pop %v683
    %v689 = vmul.f32 1.0, %v688
    %v690 = vrcp.pop %v684
    %v691 = vmul.f32 1.0, %v690
    %v692 = vrcp.pop %v685
    %v693 = vmul.f32 1.0, %v692
    %v695 = vlaneseq
    %v696 = vshrl.u32 %v695, 7
    %v697 = vsub.s32 0, %v696
    %v698 = vrot.slane %v79, %v697
    %v700 = vmul.f32 %v687, %v698
    %v701 = vmul.f32 %v689, %v698
    %v702 = vmul.f32 %v691, %v698
    %v703 = vmul.f32 %v693, %v698
    %v704 = vsel %vm207, %v700, 0.0
    %705 = vadd.xlane.f32.xlu0 %v704
    %v706 = vpop.xlane.xlu0 %705
    %v707 = vsel %vm207, %v701, 0.0
    %708 = vadd.xlane.f32.xlu0 %v707
    %v709 = vpop.xlane.xlu0 %708
    %v710 = vsel %vm207, %v702, 0.0
    %711 = vadd.xlane.f32.xlu0 %v710
    %v712 = vpop.xlane.xlu0 %711
    %v713 = vsel %vm207, %v703, 0.0
    %714 = vadd.xlane.f32.xlu0 %v713
    %v715 = vpop.xlane.xlu0 %714
    %v717 = vlaneseq
    %v718 = vshrl.u32 %v717, 7
    %v719 = vsub.s32 0, %v718
    %v720 = vrot.slane %v80, %v719
    %v722 = vadd.f32 %v706, %v720
    %v723 = vadd.f32 %v709, %v720
    %v724 = vadd.f32 %v712, %v720
    %v725 = vadd.f32 %v715, %v720
    %v726 = vmax.f32 %v722, %v723
    %v727 = vmax.f32 %v726, %v724
    %v728 = vmax.f32 %v727, %v725
    %v729 = vsub.f32 %v722, %v728
    %v730 = vsub.f32 %v723, %v728
    %v731 = vsub.f32 %v724, %v728
    %v732 = vsub.f32 %v725, %v728
    %v733 = vmul.f32 %v729, 1.442695
    %v734 = vpow.pop %v733
    %v735 = vmul.f32 %v730, 1.442695
    %v736 = vpow.pop %v735
    %v737 = vmul.f32 %v731, 1.442695
    %v738 = vpow.pop %v737
    %v739 = vmul.f32 %v732, 1.442695
    %v740 = vpow.pop %v739
    %v741 = vadd.f32 %v734, %v736
    %v742 = vadd.f32 %v741, %v738
    %v743 = vadd.f32 %v742, %v740
    %v744 = vrcp.pop %v743
    %v745 = vmul.f32 %v734, %v744
    %v746 = vmul.f32 %v736, %v744
    %v747 = vmul.f32 %v738, %v744
    %v748 = vmul.f32 %v740, %v744
    %750 = vset.pattern.permute.xlu0 0
    %751 = vperm.xlu0 %750, %v745
    %v752 = vpop.permute.xlu0 %751
    %v754 = vmul.f32 %v752, %v537
    %756 = vset.pattern.permute.xlu0 0
    %757 = vperm.xlu0 %756, %v746
    %v758 = vpop.permute.xlu0 %757
    %v760 = vmul.f32 %v758, %v538
    %v761 = vadd.f32 %v754, %v760
    %763 = vset.pattern.permute.xlu0 0
    %764 = vperm.xlu0 %763, %v747
    %v765 = vpop.permute.xlu0 %764
    %v767 = vmul.f32 %v765, %v540
    %v768 = vadd.f32 %v761, %v767
    %770 = vset.pattern.permute.xlu0 0
    %771 = vperm.xlu0 %770, %v748
    %v772 = vpop.permute.xlu0 %771
    %v774 = vmul.f32 %v772, %v467
    %v775 = vadd.f32 %v768, %v774
    %v776 = vld [vmem:[%s11] sm:$0xf]
    %v777 = vld [vmem:[%s12] sm:$0xf]
    %v778 = vld [vmem:[%s12 + $0x4] sm:$0xf]
    %v779 = vld [vmem:[%s12 + $0x8] sm:$0xf]
    %v780 = vld [vmem:[%s12 + $0xc] sm:$0xf]
    %v781 = vld [vmem:[%s12 + $0x10] sm:$0xf]
    %v782 = vld [vmem:[%s13] sm:$0x1]
    %v784 = vlaneseq
    %v785 = vshrl.u32 %v784, 7
    %v786 = vsub.s32 0, %v785
    %v787 = vrot.slane %v782, %v786
    %v794 = vunpack.c.l.b16 %v777
    %v795 = vunpack.c.l.b16 %v778
    %v796 = vunpack.c.l.b16 %v779
    %v797 = vunpack.c.l.b16 %v780
    %v798 = vunpack.c.l.b16 %v781
    %v799 = vpack.c.b16 %v795, %v794
    %v800 = vpack.c.b16 %v797, %v796
    %v801 = vpack.c.b16 %v798, %v798
    %v805 = vsel %vm112, %v776, 0
    %v808 = vsel %vm119, %v801, 0
    %810 = vmatprep.subr.bf16.mxu0 0
    %811 = vmatpush1.bf16.msra.mxu0 %v799
    %812 = vmatprep.subr.bf16.mxu0 0
    %813 = vmatpush1.bf16.msra.mxu0 %v800
    %814 = vmatprep.subr.bf16.mxu0 0
    %815 = vmatpush1.bf16.msra.mxu0 %v808
    %816 = vmatprep.subr.bf16.mxu0 0
    %817 = vmatpush1.bf16.msra.mxu0 0
    %818 = vmatprep.subr.bf16.mxu0 0
    %819 = vmatpush1.bf16.msra.mxu0 0
    %820 = vmatprep.subr.bf16.mxu0 0
    %821 = vmatpush1.bf16.msra.mxu0 0
    %822 = vmatprep.subr.bf16.mxu0 0
    %823 = vmatpush1.bf16.msra.mxu0 0
    %824 = vmatprep.subr.bf16.mxu0 0
    %825 = vmatpush1.bf16.msra.mxu0 0
    %826 = vmatprep.subr.bf16.mxu0 0
    %827 = vmatpush1.bf16.msra.mxu0 0
    %828 = vmatprep.subr.bf16.mxu0 0
    %829 = vmatpush1.bf16.msra.mxu0 0
    %830 = vmatprep.subr.bf16.mxu0 0
    %831 = vmatpush1.bf16.msra.mxu0 0
    %832 = vmatprep.subr.bf16.mxu0 0
    %833 = vmatpush1.bf16.msra.mxu0 0
    %834 = vmatprep.subr.bf16.mxu0 0
    %835 = vmatpush1.bf16.msra.mxu0 0
    %836 = vmatprep.subr.bf16.mxu0 0
    %837 = vmatpush1.bf16.msra.mxu0 0
    %838 = vmatprep.subr.bf16.mxu0 0
    %839 = vmatpush1.bf16.msra.mxu0 0
    %840 = vmatprep.subr.bf16.mxu0 0
    %841 = vmatpush1.bf16.msra.mxu0 0
    %842 = vmatprep.mubr.bf16.mxu0 0
    %843 = vmatmul.mubr.bf16.gmra.mrb[0].mxu0 %v805
    %v844 = vpop.f32.mrb[0].mxu0
    %v845 = vadd.f32 %v787, %v844
    %v846 = vpop.f32.mrb[0].mxu0
    %v847 = vpop.f32.mrb[0].mxu0
    %v848 = vpop.f32.mrb[0].mxu0
    %849 = vdwg.mxu0
    %v850 = vxor.u32 %v845, 2147483648
    %v851 = vmul.f32 %v850, 1.442695
    %v852 = vpow.pop %v851
    %v853 = vadd.f32 %v852, 1.0
    %v854 = vrcp.pop %v853
    %v855 = vmul.f32 1.0, %v854
    %v856 = vlaneseq
    %v857 = vand.u32 %v856, 127
    %v858 = vmul.f32 %v855, %v775
    %vm859 = vcmask 254976
    %v860 = vsel %vm859, %v858, 0.0
    %861 = vadd.xlane.f32.xlu0 %v860
    %v862 = vpop.xlane.xlu0 %861
    %vm863 = vcmp.eq.s32.totalorder %v857, 0
    %v864 = vsel %vm863, 1, 0
    %vm865 = vcmp.eq.s32.totalorder %v864, 1
    %v866 = vsel %vm865, %v862, 0.0
    %v867 = vadd.f32 %v866, 0.0
    %v869 = vrot.slane %v775, 6
    %v871 = vmul.f32 %v855, %v869
    %vm872 = vcmask 257026
    %v873 = vsel %vm872, %v871, 0.0
    %874 = vadd.xlane.f32.xlu0 %v873
    %v875 = vpop.xlane.xlu0 %874
    %vm876 = vcmp.eq.s32.totalorder %v857, 1
    %v877 = vsel %vm876, 1, 0
    %vm878 = vcmp.eq.s32.totalorder %v877, 1
    %v879 = vsel %vm878, %v875, 0.0
    %v881 = vrot.slane %v879, 2
    %v883 = vadd.f32 %v867, %v881
    %v884 = vrot.slane %v775, 4
    %v886 = vmul.f32 %v855, %v884
    %vm887 = vcmask 259076
    %v888 = vsel %vm887, %v886, 0.0
    %889 = vadd.xlane.f32.xlu0 %v888
    %v890 = vpop.xlane.xlu0 %889
    %vm891 = vcmp.eq.s32.totalorder %v857, 2
    %v892 = vsel %vm891, 1, 0
    %vm893 = vcmp.eq.s32.totalorder %v892, 1
    %v894 = vsel %vm893, %v890, 0.0
    %v896 = vrot.slane %v894, 4
    %v898 = vadd.f32 %v883, %v896
    %v899 = vrot.slane %v775, 2
    %v901 = vmul.f32 %v855, %v899
    %vm902 = vcmask 261126
    %v903 = vsel %vm902, %v901, 0.0
    %904 = vadd.xlane.f32.xlu0 %v903
    %v905 = vpop.xlane.xlu0 %904
    %vm906 = vcmp.eq.s32.totalorder %v857, 3
    %v907 = vsel %vm906, 1, 0
    %vm908 = vcmp.eq.s32.totalorder %v907, 1
    %v909 = vsel %vm908, %v905, 0.0
    %v911 = vrot.slane %v909, 6
    %v913 = vadd.f32 %v898, %v911
    %vm914 = vcmask 25600
    %915 = vst.msk [vmem:[#allocation5] sm:$0x3] %vm914, %v913
    // Predicated region
    $region58: #{double_gru_forward.3} parent=1 // pred_check
      _
    $region59: #{double_gru_forward.3} parent=1 // pred_check_branch
      %917 = sbr.rel (0) target = $region61
    $region60: #{double_gru_forward.3} parent=1 // pred_region
      %s919 = ssub.s32 32, 32
      %920 = vsyncadd [#allocation6], %s919
      %s922 = sshll.u32 [#allocation5], 4
      %s923 = int_to_ptr.vmem [resolvable:$true] %s922
      %925 = dma.vmem_to_hbm [thread:$0]  %s923, 32, %s14, [#allocation6]
    $region61: #{double_gru_forward.3} parent=1 // pred_fallthru
      _
    // Predicated region
    $region62: #{double_gru_forward.3} parent=1 // pred_check
      _
    $region63: #{double_gru_forward.3} parent=1 // pred_check_branch
      %927 = sbr.rel (0) target = $region65
    $region64: #{double_gru_forward.3} parent=1 // pred_region
      %928 = dma.done [#allocation6], 32
    $region65: #{double_gru_forward.3} parent=1 // pred_fallthru
      _
    %929 = vsyncpa [#allocation6], 1

// kernel: double_gru_forward.2
$region0: #{double_gru_forward.2}
  #allocation0 [shape = 'u32[]', space=smem, size = 0x4, offset = 0x4, fixed_abs, tag = 'smem constant byte address 0x4 - core index']
  #allocation1 [shape = 'u32[144,128]{1,0:T(1,128)}', space=vmem, size = 0x12000, scoped, tag = 'internal scratch']
  #allocation2 [shape = 'f32[128,96]{1,0:T(8,128)}', space=vmem, size = 0x10000, scoped, tag = 'scratch operand']
  #allocation3 [shape = 'f32[128,32]{1,0:T(8,128)}', space=vmem, size = 0x10000, scoped, tag = 'scratch operand']
  #allocation4 [shape = 'f32[1,1]{1,0:T(1,128)S(1)}', space=vmem, size = 0x200, scoped, tag = 'scoped memory for double_gru_forward.2']
  %s0 = inlined_call_operand.vmem [shape: bf16[128,32], index: 0, kind: input, shape index: {}]
  %s1 = inlined_call_operand.vmem [shape: bf16[32,96], index: 1, kind: input, shape index: {}]
  %s2 = inlined_call_operand.vmem [shape: f32[1,96], index: 2, kind: input, shape index: {}]
  %s3 = inlined_call_operand.vmem [shape: bf16[32,96], index: 3, kind: input, shape index: {}]
  %s4 = inlined_call_operand.vmem [shape: f32[1,32], index: 4, kind: input, shape index: {}]
  %s5 = inlined_call_operand.vmem [shape: bf16[32,32], index: 5, kind: input, shape index: {}]
  %s6 = inlined_call_operand.vmem [shape: bf16[32,32], index: 6, kind: input, shape index: {}]
  %s7 = inlined_call_operand.vmem [shape: bf16[32,32], index: 7, kind: input, shape index: {}]
  %s8 = inlined_call_operand.vmem [shape: f32[1,32], index: 8, kind: input, shape index: {}]
  %s9 = inlined_call_operand.vmem [shape: f32[1,32], index: 9, kind: input, shape index: {}]
  %s10 = inlined_call_operand.<no memory space> [shape: f32[1,1], index: 10, kind: input, shape index: {}]
  %s11 = inlined_call_operand.vmem [shape: bf16[16,32], index: 11, kind: output, shape index: {}]
  %s12 = sld [smem:[#allocation0]]
  $region54: #{double_gru_forward.2} parent=0
    _
  %s14 = ssub.s32 1, %s12
  %s15 = scalar_select 0, %s14, %s12
  %v16 = vstv %s10
  %17 = vst [vmem:[#allocation4] sm:$0x1] %v16
  // Predicated region
  $region2: #{double_gru_forward.2} parent=0 // pred_check
    _
  $region3: #{double_gru_forward.2} parent=0 // pred_check_branch
    %19 = sbr.rel (0) target = $region5
  $region4: #{double_gru_forward.2} parent=0 // pred_region
    _
  $region5: #{double_gru_forward.2} parent=0 // pred_fallthru
    _
  // Predicated region
  $region6: #{double_gru_forward.2} parent=0 // pred_check
    _
  $region7: #{double_gru_forward.2} parent=0 // pred_check_branch
    %21 = sbr.rel (0) target = $region9
  $region8: #{double_gru_forward.2} parent=0 // pred_region
    _
  $region9: #{double_gru_forward.2} parent=0 // pred_fallthru
    _
  // Predicated region
  $region10: #{double_gru_forward.2} parent=0 // pred_check
    _
  $region11: #{double_gru_forward.2} parent=0 // pred_check_branch
    %23 = sbr.rel (0) target = $region13
  $region12: #{double_gru_forward.2} parent=0 // pred_region
    _
  $region13: #{double_gru_forward.2} parent=0 // pred_fallthru
    _
  // Predicated region
  $region14: #{double_gru_forward.2} parent=0 // pred_check
    _
  $region15: #{double_gru_forward.2} parent=0 // pred_check_branch
    %25 = sbr.rel (0) target = $region17
  $region16: #{double_gru_forward.2} parent=0 // pred_region
    _
  $region17: #{double_gru_forward.2} parent=0 // pred_fallthru
    _
  // Predicated region
  $region18: #{double_gru_forward.2} parent=0 // pred_check
    _
  $region19: #{double_gru_forward.2} parent=0 // pred_check_branch
    %27 = sbr.rel (0) target = $region21
  $region20: #{double_gru_forward.2} parent=0 // pred_region
    _
  $region21: #{double_gru_forward.2} parent=0 // pred_fallthru
    _
  // Predicated region
  $region22: #{double_gru_forward.2} parent=0 // pred_check
    _
  $region23: #{double_gru_forward.2} parent=0 // pred_check_branch
    %29 = sbr.rel (0) target = $region25
  $region24: #{double_gru_forward.2} parent=0 // pred_region
    _
  $region25: #{double_gru_forward.2} parent=0 // pred_fallthru
    _
  // Predicated region
  $region26: #{double_gru_forward.2} parent=0 // pred_check
    _
  $region27: #{double_gru_forward.2} parent=0 // pred_check_branch
    %31 = sbr.rel (0) target = $region29
  $region28: #{double_gru_forward.2} parent=0 // pred_region
    _
  $region29: #{double_gru_forward.2} parent=0 // pred_fallthru
    _
  // Predicated region
  $region30: #{double_gru_forward.2} parent=0 // pred_check
    _
  $region31: #{double_gru_forward.2} parent=0 // pred_check_branch
    %33 = sbr.rel (0) target = $region33
  $region32: #{double_gru_forward.2} parent=0 // pred_region
    _
  $region33: #{double_gru_forward.2} parent=0 // pred_fallthru
    _
  // Predicated region
  $region34: #{double_gru_forward.2} parent=0 // pred_check
    _
  $region35: #{double_gru_forward.2} parent=0 // pred_check_branch
    %35 = sbr.rel (0) target = $region37
  $region36: #{double_gru_forward.2} parent=0 // pred_region
    _
  $region37: #{double_gru_forward.2} parent=0 // pred_fallthru
    _
  // Predicated region
  $region38: #{double_gru_forward.2} parent=0 // pred_check
    _
  $region39: #{double_gru_forward.2} parent=0 // pred_check_branch
    %37 = sbr.rel (0) target = $region41
  $region40: #{double_gru_forward.2} parent=0 // pred_region
    _
  $region41: #{double_gru_forward.2} parent=0 // pred_fallthru
    _
  // Predicated region
  $region42: #{double_gru_forward.2} parent=0 // pred_check
    _
  $region43: #{double_gru_forward.2} parent=0 // pred_check_branch
    %39 = sbr.rel (0) target = $region45
  $region44: #{double_gru_forward.2} parent=0 // pred_region
    _
  $region45: #{double_gru_forward.2} parent=0 // pred_fallthru
    _
  %v41 = vld [vmem:[%s0] sm:$0xf]
  %v42 = vld [vmem:[%s0 + $0x4] sm:$0xf]
  %v43 = vld [vmem:[%s0 + $0x8] sm:$0xf]
  %v44 = vld [vmem:[%s0 + $0xc] sm:$0xf]
  %v45 = vld [vmem:[%s0 + $0x10] sm:$0xf]
  %v46 = vld [vmem:[%s0 + $0x14] sm:$0xf]
  %v47 = vld [vmem:[%s0 + $0x18] sm:$0xf]
  %v48 = vld [vmem:[%s0 + $0x1c] sm:$0xf]
  %v49 = vld [vmem:[%s0 + $0x20] sm:$0xf]
  %v50 = vld [vmem:[%s0 + $0x24] sm:$0xf]
  %v51 = vld [vmem:[%s0 + $0x28] sm:$0xf]
  %v52 = vld [vmem:[%s0 + $0x2c] sm:$0xf]
  %v53 = vld [vmem:[%s0 + $0x30] sm:$0xf]
  %v54 = vld [vmem:[%s0 + $0x34] sm:$0xf]
  %v55 = vld [vmem:[%s0 + $0x38] sm:$0xf]
  %v56 = vld [vmem:[%s0 + $0x3c] sm:$0xf]
  %v57 = vld [vmem:[%s1] sm:$0xf]
  %v58 = vld [vmem:[%s1 + $0x4] sm:$0xf]
  %v59 = vld [vmem:[%s1 + $0x8] sm:$0xf]
  %v60 = vld [vmem:[%s1 + $0xc] sm:$0xf]
  %v61 = vld [vmem:[%s2] sm:$0x1]
  %v62 = vld [vmem:[%s3] sm:$0xf]
  %v63 = vld [vmem:[%s3 + $0x4] sm:$0xf]
  %v64 = vld [vmem:[%s3 + $0x8] sm:$0xf]
  %v65 = vld [vmem:[%s3 + $0xc] sm:$0xf]
  %v66 = vld [vmem:[%s4] sm:$0x1]
  %v67 = vld [vmem:[%s5] sm:$0xf]
  %v68 = vld [vmem:[%s5 + $0x4] sm:$0xf]
  %v69 = vld [vmem:[%s5 + $0x8] sm:$0xf]
  %v70 = vld [vmem:[%s5 + $0xc] sm:$0xf]
  %v71 = vld [vmem:[%s6] sm:$0xf]
  %v72 = vld [vmem:[%s6 + $0x4] sm:$0xf]
  %v73 = vld [vmem:[%s6 + $0x8] sm:$0xf]
  %v74 = vld [vmem:[%s6 + $0xc] sm:$0xf]
  %v75 = vld [vmem:[%s7] sm:$0xf]
  %v76 = vld [vmem:[%s7 + $0x4] sm:$0xf]
  %v77 = vld [vmem:[%s7 + $0x8] sm:$0xf]
  %v78 = vld [vmem:[%s7 + $0xc] sm:$0xf]
  %v79 = vld [vmem:[%s8] sm:$0x1]
  %v80 = vld [vmem:[%s9] sm:$0x1]
  %v81 = vld [vmem:[#allocation4] sm:$0x1]
  %v83 = vlaneseq
  %v84 = vshrl.u32 %v83, 7
  %v85 = vsub.s32 0, %v84
  %v86 = vrot.slane %v61, %v85
  %v104 = vunpack.c.l.b16 %v41
  %v105 = vunpack.c.l.b16 %v42
  %v106 = vunpack.c.l.b16 %v43
  %v107 = vunpack.c.l.b16 %v44
  %v108 = vunpack.c.l.b16 %v45
  %v109 = vunpack.c.l.b16 %v46
  %v110 = vunpack.c.l.b16 %v47
  %v111 = vunpack.c.l.b16 %v48
  %v112 = vunpack.c.l.b16 %v49
  %v113 = vunpack.c.l.b16 %v50
  %v114 = vunpack.c.l.b16 %v51
  %v115 = vunpack.c.l.b16 %v52
  %v116 = vunpack.c.l.b16 %v53
  %v117 = vunpack.c.l.b16 %v54
  %v118 = vunpack.c.l.b16 %v55
  %v119 = vunpack.c.l.b16 %v56
  %v120 = vpack.c.b16 %v105, %v104
  %v121 = vpack.c.b16 %v107, %v106
  %v122 = vpack.c.b16 %v109, %v108
  %v123 = vpack.c.b16 %v111, %v110
  %v124 = vpack.c.b16 %v113, %v112
  %v125 = vpack.c.b16 %v115, %v114
  %v126 = vpack.c.b16 %v117, %v116
  %v127 = vpack.c.b16 %v119, %v118
  %v132 = vunpack.c.l.b16 %v57
  %v133 = vunpack.c.l.b16 %v58
  %v134 = vunpack.c.l.b16 %v59
  %v135 = vunpack.c.l.b16 %v60
  %v136 = vpack.c.b16 %v133, %v132
  %v137 = vpack.c.b16 %v135, %v134
  %vm140 = vcmask 261120
  %v142 = vsel %vm140, %v120, 0
  %v145 = vsel %vm140, %v121, 0
  %v148 = vsel %vm140, %v122, 0
  %v151 = vsel %vm140, %v123, 0
  %v154 = vsel %vm140, %v124, 0
  %v157 = vsel %vm140, %v125, 0
  %v160 = vsel %vm140, %v126, 0
  %v163 = vsel %vm140, %v127, 0
  %165 = vmatprep.subr.bf16.mxu0 0
  %166 = vmatpush1.bf16.msra.mxu0 %v136
  %167 = vmatprep.subr.bf16.mxu0 0
  %168 = vmatpush1.bf16.msra.mxu0 %v137
  %169 = vmatprep.subr.bf16.mxu0 0
  %170 = vmatpush1.bf16.msra.mxu0 0
  %171 = vmatprep.subr.bf16.mxu0 0
  %172 = vmatpush1.bf16.msra.mxu0 0
  %173 = vmatprep.subr.bf16.mxu0 0
  %174 = vmatpush1.bf16.msra.mxu0 0
  %175 = vmatprep.subr.bf16.mxu0 0
  %176 = vmatpush1.bf16.msra.mxu0 0
  %177 = vmatprep.subr.bf16.mxu0 0
  %178 = vmatpush1.bf16.msra.mxu0 0
  %179 = vmatprep.subr.bf16.mxu0 0
  %180 = vmatpush1.bf16.msra.mxu0 0
  %181 = vmatprep.subr.bf16.mxu0 0
  %182 = vmatpush1.bf16.msra.mxu0 0
  %183 = vmatprep.subr.bf16.mxu0 0
  %184 = vmatpush1.bf16.msra.mxu0 0
  %185 = vmatprep.subr.bf16.mxu0 0
  %186 = vmatpush1.bf16.msra.mxu0 0
  %187 = vmatprep.subr.bf16.mxu0 0
  %188 = vmatpush1.bf16.msra.mxu0 0
  %189 = vmatprep.subr.bf16.mxu0 0
  %190 = vmatpush1.bf16.msra.mxu0 0
  %191 = vmatprep.subr.bf16.mxu0 0
  %192 = vmatpush1.bf16.msra.mxu0 0
  %193 = vmatprep.subr.bf16.mxu0 0
  %194 = vmatpush1.bf16.msra.mxu0 0
  %195 = vmatprep.subr.bf16.mxu0 0
  %196 = vmatpush1.bf16.msra.mxu0 0
  %197 = vmatprep.mubr.bf16.mxu0 0
  %198 = vmatmul.mubr.bf16.gmra.mrb[0].mxu0 %v142
  %v199 = vpop.f32.mrb[0].mxu0
  %v200 = vadd.f32 %v86, %v199
  %v201 = vpop.f32.mrb[0].mxu0
  %v202 = vpop.f32.mrb[0].mxu0
  %v203 = vadd.f32 %v86, %v202
  %v204 = vpop.f32.mrb[0].mxu0
  %205 = vmatprep.mubr.bf16.mxu0 0
  %206 = vmatmul.mubr.bf16.gmra.mrb[0].mxu0 %v145
  %v207 = vpop.f32.mrb[0].mxu0
  %v208 = vadd.f32 %v86, %v207
  %v209 = vpop.f32.mrb[0].mxu0
  %v210 = vpop.f32.mrb[0].mxu0
  %v211 = vadd.f32 %v86, %v210
  %v212 = vpop.f32.mrb[0].mxu0
  %213 = vmatprep.mubr.bf16.mxu0 0
  %214 = vmatmul.mubr.bf16.gmra.mrb[0].mxu0 %v148
  %v215 = vpop.f32.mrb[0].mxu0
  %v216 = vadd.f32 %v86, %v215
  %v217 = vpop.f32.mrb[0].mxu0
  %v218 = vpop.f32.mrb[0].mxu0
  %v219 = vadd.f32 %v86, %v218
  %v220 = vpop.f32.mrb[0].mxu0
  %221 = vmatprep.mubr.bf16.mxu0 0
  %222 = vmatmul.mubr.bf16.gmra.mrb[0].mxu0 %v151
  %v223 = vpop.f32.mrb[0].mxu0
  %v224 = vadd.f32 %v86, %v223
  %v225 = vpop.f32.mrb[0].mxu0
  %v226 = vpop.f32.mrb[0].mxu0
  %v227 = vadd.f32 %v86, %v226
  %v228 = vpop.f32.mrb[0].mxu0
  %229 = vmatprep.mubr.bf16.mxu0 0
  %230 = vmatmul.mubr.bf16.gmra.mrb[0].mxu0 %v154
  %v231 = vpop.f32.mrb[0].mxu0
  %v232 = vadd.f32 %v86, %v231
  %v233 = vpop.f32.mrb[0].mxu0
  %v234 = vpop.f32.mrb[0].mxu0
  %v235 = vadd.f32 %v86, %v234
  %v236 = vpop.f32.mrb[0].mxu0
  %237 = vmatprep.mubr.bf16.mxu0 0
  %238 = vmatmul.mubr.bf16.gmra.mrb[0].mxu0 %v157
  %v239 = vpop.f32.mrb[0].mxu0
  %v240 = vadd.f32 %v86, %v239
  %v241 = vpop.f32.mrb[0].mxu0
  %v242 = vpop.f32.mrb[0].mxu0
  %v243 = vadd.f32 %v86, %v242
  %v244 = vpop.f32.mrb[0].mxu0
  %245 = vmatprep.mubr.bf16.mxu0 0
  %246 = vmatmul.mubr.bf16.gmra.mrb[0].mxu0 %v160
  %v247 = vpop.f32.mrb[0].mxu0
  %v248 = vadd.f32 %v86, %v247
  %v249 = vpop.f32.mrb[0].mxu0
  %v250 = vpop.f32.mrb[0].mxu0
  %v251 = vadd.f32 %v86, %v250
  %v252 = vpop.f32.mrb[0].mxu0
  %253 = vmatprep.mubr.bf16.mxu0 0
  %254 = vmatmul.mubr.bf16.gmra.mrb[0].mxu0 %v163
  %v255 = vpop.f32.mrb[0].mxu0
  %v256 = vadd.f32 %v86, %v255
  %v257 = vpop.f32.mrb[0].mxu0
  %v258 = vpop.f32.mrb[0].mxu0
  %v259 = vadd.f32 %v86, %v258
  %v260 = vpop.f32.mrb[0].mxu0
  %261 = vdwg.mxu0
  %vm262 = vcmask 785408
  %263 = vst.msk [vmem:[#allocation2] sm:$0xff] %vm262, %v200
  %264 = vst.msk [vmem:[#allocation2 + $0x8] sm:$0xff] %vm262, %v203
  %265 = vst.msk [vmem:[#allocation2 + $0x10] sm:$0xff] %vm262, %v208
  %266 = vst.msk [vmem:[#allocation2 + $0x18] sm:$0xff] %vm262, %v211
  %267 = vst.msk [vmem:[#allocation2 + $0x20] sm:$0xff] %vm262, %v216
  %268 = vst.msk [vmem:[#allocation2 + $0x28] sm:$0xff] %vm262, %v219
  %269 = vst.msk [vmem:[#allocation2 + $0x30] sm:$0xff] %vm262, %v224
  %270 = vst.msk [vmem:[#allocation2 + $0x38] sm:$0xff] %vm262, %v227
  %271 = vst.msk [vmem:[#allocation2 + $0x40] sm:$0xff] %vm262, %v232
  %272 = vst.msk [vmem:[#allocation2 + $0x48] sm:$0xff] %vm262, %v235
  %273 = vst.msk [vmem:[#allocation2 + $0x50] sm:$0xff] %vm262, %v240
  %274 = vst.msk [vmem:[#allocation2 + $0x58] sm:$0xff] %vm262, %v243
  %275 = vst.msk [vmem:[#allocation2 + $0x60] sm:$0xff] %vm262, %v248
  %276 = vst.msk [vmem:[#allocation2 + $0x68] sm:$0xff] %vm262, %v251
  %277 = vst.msk [vmem:[#allocation2 + $0x70] sm:$0xff] %vm262, %v256
  %278 = vst.msk [vmem:[#allocation2 + $0x78] sm:$0xff] %vm262, %v259
  %v279 = vld [vmem:[#allocation2] sm:$0xff]
  %v280 = vld [vmem:[#allocation2 + $0x8] sm:$0xff]
  %v281 = vxor.u32 %v279, 2147483648
  %v282 = vxor.u32 %v280, 2147483648
  %v283 = vmul.f32 %v281, 1.442695
  %v284 = vpow.pop %v283
  %v285 = vmul.f32 %v282, 1.442695
  %v286 = vpow.pop %v285
  %v287 = vadd.f32 %v284, 1.0
  %v288 = vadd.f32 %v286, 1.0
  %v289 = vrcp.pop %v287
  %v290 = vmul.f32 1.0, %v289
  %v291 = vrcp.pop %v288
  %v292 = vmul.f32 1.0, %v291
  %v293 = vsub.f32 1.0, %v290
  %v294 = vsub.f32 1.0, %v292
  %v296 = vlaneseq
  %v297 = vshrl.u32 %v296, 7
  %v298 = vsub.s32 0, %v297
  %v299 = vrot.slane %v66, %v298
  %v301 = vmul.f32 %v290, %v299
  %v302 = vmul.f32 %v292, %v299
  %305 = vrot.lane.b32.xlu0 %v301, 64
  %v306 = vpop.permute.xlu0 %305
  %307 = vrot.lane.b32.xlu0 %v302, 64
  %v308 = vpop.permute.xlu0 %307
  %v311 = vadd.f32 %v279, %v306
  %v312 = vadd.f32 %v280, %v308
  %v313 = vtanh.pop %v311
  %v314 = vtanh.pop %v312
  %317 = vrot.lane.b32.xlu0 %v313, 96
  %v318 = vpop.permute.xlu0 %317
  %319 = vrot.lane.b32.xlu0 %v314, 96
  %v320 = vpop.permute.xlu0 %319
  %v323 = vmul.f32 %v293, %v318
  %v324 = vmul.f32 %v294, %v320
  %327 = vrot.lane.b32.xlu0 %v323, 96
  %v328 = vpop.permute.xlu0 %327
  %329 = vrot.lane.b32.xlu0 %v324, 96
  %v330 = vpop.permute.xlu0 %329
  %333 = vst.msk [vmem:[#allocation3] sm:$0xff] %vm140, %v328
  %334 = vst.msk [vmem:[#allocation3 + $0x8] sm:$0xff] %vm140, %v330
  %v335 = vld [vmem:[#allocation2 + $0x10] sm:$0xff]
  %v336 = vld [vmem:[#allocation2 + $0x18] sm:$0xff]
  %v337 = vpack.c.bf16 %v324, %v323
  %339 = vrot.lane.b32.xlu0 %v337, 96
  %v340 = vpop.permute.xlu0 %339
  %v345 = vunpack.c.l.b16 %v62
  %v346 = vunpack.c.l.b16 %v63
  %v347 = vunpack.c.l.b16 %v64
  %v348 = vunpack.c.l.b16 %v65
  %v349 = vpack.c.b16 %v346, %v345
  %v350 = vpack.c.b16 %v348, %v347
  %v354 = vsel %vm140, %v340, 0
  %356 = vmatprep.subr.bf16.mxu0 0
  %357 = vmatpush1.bf16.msra.mxu0 %v349
  %358 = vmatprep.subr.bf16.mxu0 0
  %359 = vmatpush1.bf16.msra.mxu0 %v350
  %360 = vmatprep.subr.bf16.mxu0 0
  %361 = vmatpush1.bf16.msra.mxu0 0
  %362 = vmatprep.subr.bf16.mxu0 0
  %363 = vmatpush1.bf16.msra.mxu0 0
  %364 = vmatprep.subr.bf16.mxu0 0
  %365 = vmatpush1.bf16.msra.mxu0 0
  %366 = vmatprep.subr.bf16.mxu0 0
  %367 = vmatpush1.bf16.msra.mxu0 0
  %368 = vmatprep.subr.bf16.mxu0 0
  %369 = vmatpush1.bf16.msra.mxu0 0
  %370 = vmatprep.subr.bf16.mxu0 0
  %371 = vmatpush1.bf16.msra.mxu0 0
  %372 = vmatprep.subr.bf16.mxu0 0
  %373 = vmatpush1.bf16.msra.mxu0 0
  %374 = vmatprep.subr.bf16.mxu0 0
  %375 = vmatpush1.bf16.msra.mxu0 0
  %376 = vmatprep.subr.bf16.mxu0 0
  %377 = vmatpush1.bf16.msra.mxu0 0
  %378 = vmatprep.subr.bf16.mxu0 0
  %379 = vmatpush1.bf16.msra.mxu0 0
  %380 = vmatprep.subr.bf16.mxu0 0
  %381 = vmatpush1.bf16.msra.mxu0 0
  %382 = vmatprep.subr.bf16.mxu0 0
  %383 = vmatpush1.bf16.msra.mxu0 0
  %384 = vmatprep.subr.bf16.mxu0 0
  %385 = vmatpush1.bf16.msra.mxu0 0
  %386 = vmatprep.subr.bf16.mxu0 0
  %387 = vmatpush1.bf16.msra.mxu0 0
  %388 = vmatprep.mubr.bf16.mxu0 0
  %389 = vmatmul.mubr.bf16.gmra.mrb[0].mxu0 %v354
  %v390 = vpop.f32.mrb[0].mxu0
  %v391 = vadd.f32 0.0, %v390
  %v392 = vpop.f32.mrb[0].mxu0
  %v393 = vpop.f32.mrb[0].mxu0
  %v394 = vadd.f32 0.0, %v393
  %v395 = vpop.f32.mrb[0].mxu0
  %396 = vdwg.mxu0
  %v397 = vadd.f32 %v335, %v391
  %v398 = vadd.f32 %v336, %v394
  %v399 = vxor.u32 %v397, 2147483648
  %v400 = vxor.u32 %v398, 2147483648
  %v401 = vmul.f32 %v399, 1.442695
  %v402 = vpow.pop %v401
  %v403 = vmul.f32 %v400, 1.442695
  %v404 = vpow.pop %v403
  %v405 = vadd.f32 %v402, 1.0
  %v406 = vadd.f32 %v404, 1.0
  %v407 = vrcp.pop %v405
  %v408 = vmul.f32 1.0, %v407
  %v409 = vrcp.pop %v406
  %v410 = vmul.f32 1.0, %v409
  %411 = vrot.lane.b32.xlu0 %v299, 64
  %v412 = vpop.permute.xlu0 %411
  %v414 = vadd.f32 %v391, %v412
  %v415 = vadd.f32 %v394, %v412
  %418 = vrot.lane.b32.xlu0 %v414, 64
  %v419 = vpop.permute.xlu0 %418
  %420 = vrot.lane.b32.xlu0 %v415, 64
  %v421 = vpop.permute.xlu0 %420
  %v424 = vmul.f32 %v408, %v419
  %v425 = vmul.f32 %v410, %v421
  %428 = vrot.lane.b32.xlu0 %v424, 64
  %v429 = vpop.permute.xlu0 %428
  %430 = vrot.lane.b32.xlu0 %v425, 64
  %v431 = vpop.permute.xlu0 %430
  %v434 = vadd.f32 %v335, %v429
  %v435 = vadd.f32 %v336, %v431
  %v436 = vtanh.pop %v434
  %v437 = vtanh.pop %v435
  %v438 = vsub.f32 1.0, %v408
  %v439 = vsub.f32 1.0, %v410
  %442 = vrot.lane.b32.xlu0 %v436, 96
  %v443 = vpop.permute.xlu0 %442
  %444 = vrot.lane.b32.xlu0 %v437, 96
  %v445 = vpop.permute.xlu0 %444
  %v448 = vmul.f32 %v438, %v443
  %v449 = vmul.f32 %v439, %v445
  %v450 = vmul.f32 %v408, %v323
  %v451 = vmul.f32 %v410, %v324
  %v452 = vadd.f32 %v448, %v450
  %v453 = vadd.f32 %v449, %v451
  %456 = vrot.lane.b32.xlu0 %v452, 96
  %v457 = vpop.permute.xlu0 %456
  %458 = vrot.lane.b32.xlu0 %v453, 96
  %v459 = vpop.permute.xlu0 %458
  %462 = vst.msk [vmem:[#allocation3 + $0x10] sm:$0xff] %vm140, %v457
  %463 = vst.msk [vmem:[#allocation3 + $0x18] sm:$0xff] %vm140, %v459
  %v464 = vld [vmem:[#allocation2 + $0x20] sm:$0xff]
  %v465 = vld [vmem:[#allocation2 + $0x28] sm:$0xff]
  %v466 = vpack.c.bf16 %v453, %v452
  %468 = vrot.lane.b32.xlu0 %v466, 96
  %v469 = vpop.permute.xlu0 %468
  %v471 = vsel %vm140, %v469, 0
  %473 = vmatprep.subr.bf16.mxu0 0
  %474 = vmatpush1.bf16.msra.mxu0 %v349
  %475 = vmatprep.subr.bf16.mxu0 0
  %476 = vmatpush1.bf16.msra.mxu0 %v350
  %477 = vmatprep.subr.bf16.mxu0 0
  %478 = vmatpush1.bf16.msra.mxu0 0
  %479 = vmatprep.subr.bf16.mxu0 0
  %480 = vmatpush1.bf16.msra.mxu0 0
  %481 = vmatprep.subr.bf16.mxu0 0
  %482 = vmatpush1.bf16.msra.mxu0 0
  %483 = vmatprep.subr.bf16.mxu0 0
  %484 = vmatpush1.bf16.msra.mxu0 0
  %485 = vmatprep.subr.bf16.mxu0 0
  %486 = vmatpush1.bf16.msra.mxu0 0
  %487 = vmatprep.subr.bf16.mxu0 0
  %488 = vmatpush1.bf16.msra.mxu0 0
  %489 = vmatprep.subr.bf16.mxu0 0
  %490 = vmatpush1.bf16.msra.mxu0 0
  %491 = vmatprep.subr.bf16.mxu0 0
  %492 = vmatpush1.bf16.msra.mxu0 0
  %493 = vmatprep.subr.bf16.mxu0 0
  %494 = vmatpush1.bf16.msra.mxu0 0
  %495 = vmatprep.subr.bf16.mxu0 0
  %496 = vmatpush1.bf16.msra.mxu0 0
  %497 = vmatprep.subr.bf16.mxu0 0
  %498 = vmatpush1.bf16.msra.mxu0 0
  %499 = vmatprep.subr.bf16.mxu0 0
  %500 = vmatpush1.bf16.msra.mxu0 0
  %501 = vmatprep.subr.bf16.mxu0 0
  %502 = vmatpush1.bf16.msra.mxu0 0
  %503 = vmatprep.subr.bf16.mxu0 0
  %504 = vmatpush1.bf16.msra.mxu0 0
  %505 = vmatprep.mubr.bf16.mxu0 0
  %506 = vmatmul.mubr.bf16.gmra.mrb[0].mxu0 %v471
  %v507 = vpop.f32.mrb[0].mxu0
  %v508 = vadd.f32 0.0, %v507
  %v509 = vpop.f32.mrb[0].mxu0
  %v510 = vpop.f32.mrb[0].mxu0
  %v511 = vadd.f32 0.0, %v510
  %v512 = vpop.f32.mrb[0].mxu0
  %513 = vdwg.mxu0
  %v514 = vadd.f32 %v464, %v508
  %v515 = vadd.f32 %v465, %v511
  %v516 = vxor.u32 %v514, 2147483648
  %v517 = vxor.u32 %v515, 2147483648
  %v518 = vmul.f32 %v516, 1.442695
  %v519 = vpow.pop %v518
  %v520 = vmul.f32 %v517, 1.442695
  %v521 = vpow.pop %v520
  %v522 = vadd.f32 %v519, 1.0
  %v523 = vadd.f32 %v521, 1.0
  %v524 = vrcp.pop %v522
  %v525 = vmul.f32 1.0, %v524
  %v526 = vrcp.pop %v523
  %v527 = vmul.f32 1.0, %v526
  %v528 = vadd.f32 %v508, %v412
  %v529 = vadd.f32 %v511, %v412
  %532 = vrot.lane.b32.xlu0 %v528, 64
  %v533 = vpop.permute.xlu0 %532
  %534 = vrot.lane.b32.xlu0 %v529, 64
  %v535 = vpop.permute.xlu0 %534
  %v538 = vmul.f32 %v525, %v533
  %v539 = vmul.f32 %v527, %v535
  %542 = vrot.lane.b32.xlu0 %v538, 64
  %v543 = vpop.permute.xlu0 %542
  %544 = vrot.lane.b32.xlu0 %v539, 64
  %v545 = vpop.permute.xlu0 %544
  %v548 = vadd.f32 %v464, %v543
  %v549 = vadd.f32 %v465, %v545
  %v550 = vtanh.pop %v548
  %v551 = vtanh.pop %v549
  %v552 = vsub.f32 1.0, %v525
  %v553 = vsub.f32 1.0, %v527
  %556 = vrot.lane.b32.xlu0 %v550, 96
  %v557 = vpop.permute.xlu0 %556
  %558 = vrot.lane.b32.xlu0 %v551, 96
  %v559 = vpop.permute.xlu0 %558
  %v562 = vmul.f32 %v552, %v557
  %v563 = vmul.f32 %v553, %v559
  %v564 = vmul.f32 %v525, %v452
  %v565 = vmul.f32 %v527, %v453
  %v566 = vadd.f32 %v562, %v564
  %v567 = vadd.f32 %v563, %v565
  %570 = vrot.lane.b32.xlu0 %v566, 96
  %v571 = vpop.permute.xlu0 %570
  %572 = vrot.lane.b32.xlu0 %v567, 96
  %v573 = vpop.permute.xlu0 %572
  %576 = vst.msk [vmem:[#allocation3 + $0x20] sm:$0xff] %vm140, %v571
  %577 = vst.msk [vmem:[#allocation3 + $0x28] sm:$0xff] %vm140, %v573
  %v578 = vld [vmem:[#allocation2 + $0x30] sm:$0xff]
  %v579 = vld [vmem:[#allocation2 + $0x38] sm:$0xff]
  %v580 = vpack.c.bf16 %v567, %v566
  %582 = vrot.lane.b32.xlu0 %v580, 96
  %v583 = vpop.permute.xlu0 %582
  %v585 = vsel %vm140, %v583, 0
  %587 = vmatprep.subr.bf16.mxu0 0
  %588 = vmatpush1.bf16.msra.mxu0 %v349
  %589 = vmatprep.subr.bf16.mxu0 0
  %590 = vmatpush1.bf16.msra.mxu0 %v350
  %591 = vmatprep.subr.bf16.mxu0 0
  %592 = vmatpush1.bf16.msra.mxu0 0
  %593 = vmatprep.subr.bf16.mxu0 0
  %594 = vmatpush1.bf16.msra.mxu0 0
  %595 = vmatprep.subr.bf16.mxu0 0
  %596 = vmatpush1.bf16.msra.mxu0 0
  %597 = vmatprep.subr.bf16.mxu0 0
  %598 = vmatpush1.bf16.msra.mxu0 0
  %599 = vmatprep.subr.bf16.mxu0 0
  %600 = vmatpush1.bf16.msra.mxu0 0
  %601 = vmatprep.subr.bf16.mxu0 0
  %602 = vmatpush1.bf16.msra.mxu0 0
  %603 = vmatprep.subr.bf16.mxu0 0
  %604 = vmatpush1.bf16.msra.mxu0 0
  %605 = vmatprep.subr.bf16.mxu0 0
  %606 = vmatpush1.bf16.msra.mxu0 0
  %607 = vmatprep.subr.bf16.mxu0 0
  %608 = vmatpush1.bf16.msra.mxu0 0
  %609 = vmatprep.subr.bf16.mxu0 0
  %610 = vmatpush1.bf16.msra.mxu0 0
  %611 = vmatprep.subr.bf16.mxu0 0
  %612 = vmatpush1.bf16.msra.mxu0 0
  %613 = vmatprep.subr.bf16.mxu0 0
  %614 = vmatpush1.bf16.msra.mxu0 0
  %615 = vmatprep.subr.bf16.mxu0 0
  %616 = vmatpush1.bf16.msra.mxu0 0
  %617 = vmatprep.subr.bf16.mxu0 0
  %618 = vmatpush1.bf16.msra.mxu0 0
  %619 = vmatprep.mubr.bf16.mxu0 0
  %620 = vmatmul.mubr.bf16.gmra.mrb[0].mxu0 %v585
  %v621 = vpop.f32.mrb[0].mxu0
  %v622 = vadd.f32 0.0, %v621
  %v623 = vpop.f32.mrb[0].mxu0
  %v624 = vpop.f32.mrb[0].mxu0
  %v625 = vadd.f32 0.0, %v624
  %v626 = vpop.f32.mrb[0].mxu0
  %627 = vdwg.mxu0
  %v628 = vadd.f32 %v578, %v622
  %v629 = vadd.f32 %v579, %v625
  %v630 = vxor.u32 %v628, 2147483648
  %v631 = vxor.u32 %v629, 2147483648
  %v632 = vmul.f32 %v630, 1.442695
  %v633 = vpow.pop %v632
  %v634 = vmul.f32 %v631, 1.442695
  %v635 = vpow.pop %v634
  %v636 = vadd.f32 %v633, 1.0
  %v637 = vadd.f32 %v635, 1.0
  %v638 = vrcp.pop %v636
  %v639 = vmul.f32 1.0, %v638
  %v640 = vrcp.pop %v637
  %v641 = vmul.f32 1.0, %v640
  %v642 = vadd.f32 %v622, %v412
  %v643 = vadd.f32 %v625, %v412
  %646 = vrot.lane.b32.xlu0 %v642, 64
  %v647 = vpop.permute.xlu0 %646
  %648 = vrot.lane.b32.xlu0 %v643, 64
  %v649 = vpop.permute.xlu0 %648
  %v652 = vmul.f32 %v639, %v647
  %v653 = vmul.f32 %v641, %v649
  %656 = vrot.lane.b32.xlu0 %v652, 64
  %v657 = vpop.permute.xlu0 %656
  %658 = vrot.lane.b32.xlu0 %v653, 64
  %v659 = vpop.permute.xlu0 %658
  %v662 = vadd.f32 %v578, %v657
  %v663 = vadd.f32 %v579, %v659
  %v664 = vtanh.pop %v662
  %v665 = vtanh.pop %v663
  %v666 = vsub.f32 1.0, %v639
  %v667 = vsub.f32 1.0, %v641
  %670 = vrot.lane.b32.xlu0 %v664, 96
  %v671 = vpop.permute.xlu0 %670
  %672 = vrot.lane.b32.xlu0 %v665, 96
  %v673 = vpop.permute.xlu0 %672
  %v676 = vmul.f32 %v666, %v671
  %v677 = vmul.f32 %v667, %v673
  %v678 = vmul.f32 %v639, %v566
  %v679 = vmul.f32 %v641, %v567
  %v680 = vadd.f32 %v676, %v678
  %v681 = vadd.f32 %v677, %v679
  %684 = vrot.lane.b32.xlu0 %v680, 96
  %v685 = vpop.permute.xlu0 %684
  %686 = vrot.lane.b32.xlu0 %v681, 96
  %v687 = vpop.permute.xlu0 %686
  %690 = vst.msk [vmem:[#allocation3 + $0x30] sm:$0xff] %vm140, %v685
  %691 = vst.msk [vmem:[#allocation3 + $0x38] sm:$0xff] %vm140, %v687
  %v692 = vld [vmem:[#allocation2 + $0x40] sm:$0xff]
  %v693 = vld [vmem:[#allocation2 + $0x48] sm:$0xff]
  %v694 = vpack.c.bf16 %v681, %v680
  %696 = vrot.lane.b32.xlu0 %v694, 96
  %v697 = vpop.permute.xlu0 %696
  %v699 = vsel %vm140, %v697, 0
  %701 = vmatprep.subr.bf16.mxu0 0
  %702 = vmatpush1.bf16.msra.mxu0 %v349
  %703 = vmatprep.subr.bf16.mxu0 0
  %704 = vmatpush1.bf16.msra.mxu0 %v350
  %705 = vmatprep.subr.bf16.mxu0 0
  %706 = vmatpush1.bf16.msra.mxu0 0
  %707 = vmatprep.subr.bf16.mxu0 0
  %708 = vmatpush1.bf16.msra.mxu0 0
  %709 = vmatprep.subr.bf16.mxu0 0
  %710 = vmatpush1.bf16.msra.mxu0 0
  %711 = vmatprep.subr.bf16.mxu0 0
  %712 = vmatpush1.bf16.msra.mxu0 0
  %713 = vmatprep.subr.bf16.mxu0 0
  %714 = vmatpush1.bf16.msra.mxu0 0
  %715 = vmatprep.subr.bf16.mxu0 0
  %716 = vmatpush1.bf16.msra.mxu0 0
  %717 = vmatprep.subr.bf16.mxu0 0
  %718 = vmatpush1.bf16.msra.mxu0 0
  %719 = vmatprep.subr.bf16.mxu0 0
  %720 = vmatpush1.bf16.msra.mxu0 0
  %721 = vmatprep.subr.bf16.mxu0 0
  %722 = vmatpush1.bf16.msra.mxu0 0
  %723 = vmatprep.subr.bf16.mxu0 0
  %724 = vmatpush1.bf16.msra.mxu0 0
  %725 = vmatprep.subr.bf16.mxu0 0
  %726 = vmatpush1.bf16.msra.mxu0 0
  %727 = vmatprep.subr.bf16.mxu0 0
  %728 = vmatpush1.bf16.msra.mxu0 0
  %729 = vmatprep.subr.bf16.mxu0 0
  %730 = vmatpush1.bf16.msra.mxu0 0
  %731 = vmatprep.subr.bf16.mxu0 0
  %732 = vmatpush1.bf16.msra.mxu0 0
  %733 = vmatprep.mubr.bf16.mxu0 0
  %734 = vmatmul.mubr.bf16.gmra.mrb[0].mxu0 %v699
  %v735 = vpop.f32.mrb[0].mxu0
  %v736 = vadd.f32 0.0, %v735
  %v737 = vpop.f32.mrb[0].mxu0
  %v738 = vpop.f32.mrb[0].mxu0
  %v739 = vadd.f32 0.0, %v738
  %v740 = vpop.f32.mrb[0].mxu0
  %741 = vdwg.mxu0
  %v742 = vadd.f32 %v692, %v736
  %v743 = vadd.f32 %v693, %v739
  %v744 = vxor.u32 %v742, 2147483648
  %v745 = vxor.u32 %v743, 2147483648
  %v746 = vmul.f32 %v744, 1.442695
  %v747 = vpow.pop %v746
  %v748 = vmul.f32 %v745, 1.442695
  %v749 = vpow.pop %v748
  %v750 = vadd.f32 %v747, 1.0
  %v751 = vadd.f32 %v749, 1.0
  %v752 = vrcp.pop %v750
  %v753 = vmul.f32 1.0, %v752
  %v754 = vrcp.pop %v751
  %v755 = vmul.f32 1.0, %v754
  %v756 = vadd.f32 %v736, %v412
  %v757 = vadd.f32 %v739, %v412
  %760 = vrot.lane.b32.xlu0 %v756, 64
  %v761 = vpop.permute.xlu0 %760
  %762 = vrot.lane.b32.xlu0 %v757, 64
  %v763 = vpop.permute.xlu0 %762
  %v766 = vmul.f32 %v753, %v761
  %v767 = vmul.f32 %v755, %v763
  %770 = vrot.lane.b32.xlu0 %v766, 64
  %v771 = vpop.permute.xlu0 %770
  %772 = vrot.lane.b32.xlu0 %v767, 64
  %v773 = vpop.permute.xlu0 %772
  %v776 = vadd.f32 %v692, %v771
  %v777 = vadd.f32 %v693, %v773
  %v778 = vtanh.pop %v776
  %v779 = vtanh.pop %v777
  %v780 = vsub.f32 1.0, %v753
  %v781 = vsub.f32 1.0, %v755
  %784 = vrot.lane.b32.xlu0 %v778, 96
  %v785 = vpop.permute.xlu0 %784
  %786 = vrot.lane.b32.xlu0 %v779, 96
  %v787 = vpop.permute.xlu0 %786
  %v790 = vmul.f32 %v780, %v785
  %v791 = vmul.f32 %v781, %v787
  %v792 = vmul.f32 %v753, %v680
  %v793 = vmul.f32 %v755, %v681
  %v794 = vadd.f32 %v790, %v792
  %v795 = vadd.f32 %v791, %v793
  %798 = vrot.lane.b32.xlu0 %v794, 96
  %v799 = vpop.permute.xlu0 %798
  %800 = vrot.lane.b32.xlu0 %v795, 96
  %v801 = vpop.permute.xlu0 %800
  %804 = vst.msk [vmem:[#allocation3 + $0x40] sm:$0xff] %vm140, %v799
  %805 = vst.msk [vmem:[#allocation3 + $0x48] sm:$0xff] %vm140, %v801
  %v806 = vld [vmem:[#allocation2 + $0x50] sm:$0xff]
  %v807 = vld [vmem:[#allocation2 + $0x58] sm:$0xff]
  %v808 = vpack.c.bf16 %v795, %v794
  %810 = vrot.lane.b32.xlu0 %v808, 96
  %v811 = vpop.permute.xlu0 %810
  %v813 = vsel %vm140, %v811, 0
  %815 = vmatprep.subr.bf16.mxu0 0
  %816 = vmatpush1.bf16.msra.mxu0 %v349
  %817 = vmatprep.subr.bf16.mxu0 0
  %818 = vmatpush1.bf16.msra.mxu0 %v350
  %819 = vmatprep.subr.bf16.mxu0 0
  %820 = vmatpush1.bf16.msra.mxu0 0
  %821 = vmatprep.subr.bf16.mxu0 0
  %822 = vmatpush1.bf16.msra.mxu0 0
  %823 = vmatprep.subr.bf16.mxu0 0
  %824 = vmatpush1.bf16.msra.mxu0 0
  %825 = vmatprep.subr.bf16.mxu0 0
  %826 = vmatpush1.bf16.msra.mxu0 0
  %827 = vmatprep.subr.bf16.mxu0 0
  %828 = vmatpush1.bf16.msra.mxu0 0
  %829 = vmatprep.subr.bf16.mxu0 0
  %830 = vmatpush1.bf16.msra.mxu0 0
  %831 = vmatprep.subr.bf16.mxu0 0
  %832 = vmatpush1.bf16.msra.mxu0 0
  %833 = vmatprep.subr.bf16.mxu0 0
  %834 = vmatpush1.bf16.msra.mxu0 0
  %835 = vmatprep.subr.bf16.mxu0 0
  %836 = vmatpush1.bf16.msra.mxu0 0
  %837 = vmatprep.subr.bf16.mxu0 0
  %838 = vmatpush1.bf16.msra.mxu0 0
  %839 = vmatprep.subr.bf16.mxu0 0
  %840 = vmatpush1.bf16.msra.mxu0 0
  %841 = vmatprep.subr.bf16.mxu0 0
  %842 = vmatpush1.bf16.msra.mxu0 0
  %843 = vmatprep.subr.bf16.mxu0 0
  %844 = vmatpush1.bf16.msra.mxu0 0
  %845 = vmatprep.subr.bf16.mxu0 0
  %846 = vmatpush1.bf16.msra.mxu0 0
  %847 = vmatprep.mubr.bf16.mxu0 0
  %848 = vmatmul.mubr.bf16.gmra.mrb[0].mxu0 %v813
  %v849 = vpop.f32.mrb[0].mxu0
  %v850 = vadd.f32 0.0, %v849
  %v851 = vpop.f32.mrb[0].mxu0
  %v852 = vpop.f32.mrb[0].mxu0
  %v853 = vadd.f32 0.0, %v852
  %v854 = vpop.f32.mrb[0].mxu0
  %855 = vdwg.mxu0
  %v856 = vadd.f32 %v806, %v850
  %v857 = vadd.f32 %v807, %v853
  %v858 = vxor.u32 %v856, 2147483648
  %v859 = vxor.u32 %v857, 2147483648
  %v860 = vmul.f32 %v858, 1.442695
  %v861 = vpow.pop %v860
  %v862 = vmul.f32 %v859, 1.442695
  %v863 = vpow.pop %v862
  %v864 = vadd.f32 %v861, 1.0
  %v865 = vadd.f32 %v863, 1.0
  %v866 = vrcp.pop %v864
  %v867 = vmul.f32 1.0, %v866
  %v868 = vrcp.pop %v865
  %v869 = vmul.f32 1.0, %v868
  %v870 = vadd.f32 %v850, %v412
  %v871 = vadd.f32 %v853, %v412
  %874 = vrot.lane.b32.xlu0 %v870, 64
  %v875 = vpop.permute.xlu0 %874
  %876 = vrot.lane.b32.xlu0 %v871, 64
  %v877 = vpop.permute.xlu0 %876
  %v880 = vmul.f32 %v867, %v875
  %v881 = vmul.f32 %v869, %v877
  %884 = vrot.lane.b32.xlu0 %v880, 64
  %v885 = vpop.permute.xlu0 %884
  %886 = vrot.lane.b32.xlu0 %v881, 64
  %v887 = vpop.permute.xlu0 %886
  %v890 = vadd.f32 %v806, %v885
  %v891 = vadd.f32 %v807, %v887
  %v892 = vtanh.pop %v890
  %v893 = vtanh.pop %v891
  %v894 = vsub.f32 1.0, %v867
  %v895 = vsub.f32 1.0, %v869
  %898 = vrot.lane.b32.xlu0 %v892, 96
  %v899 = vpop.permute.xlu0 %898
  %900 = vrot.lane.b32.xlu0 %v893, 96
  %v901 = vpop.permute.xlu0 %900
  %v904 = vmul.f32 %v894, %v899
  %v905 = vmul.f32 %v895, %v901
  %v906 = vmul.f32 %v867, %v794
  %v907 = vmul.f32 %v869, %v795
  %v908 = vadd.f32 %v904, %v906
  %v909 = vadd.f32 %v905, %v907
  %912 = vrot.lane.b32.xlu0 %v908, 96
  %v913 = vpop.permute.xlu0 %912
  %914 = vrot.lane.b32.xlu0 %v909, 96
  %v915 = vpop.permute.xlu0 %914
  %918 = vst.msk [vmem:[#allocation3 + $0x50] sm:$0xff] %vm140, %v913
  %919 = vst.msk [vmem:[#allocation3 + $0x58] sm:$0xff] %vm140, %v915
  %v920 = vld [vmem:[#allocation2 + $0x60] sm:$0xff]
  %v921 = vld [vmem:[#allocation2 + $0x68] sm:$0xff]
  %v922 = vpack.c.bf16 %v909, %v908
  %924 = vrot.lane.b32.xlu0 %v922, 96
  %v925 = vpop.permute.xlu0 %924
  %v927 = vsel %vm140, %v925, 0
  %929 = vmatprep.subr.bf16.mxu0 0
  %930 = vmatpush1.bf16.msra.mxu0 %v349
  %931 = vmatprep.subr.bf16.mxu0 0
  %932 = vmatpush1.bf16.msra.mxu0 %v350
  %933 = vmatprep.subr.bf16.mxu0 0
  %934 = vmatpush1.bf16.msra.mxu0 0
  %935 = vmatprep.subr.bf16.mxu0 0
  %936 = vmatpush1.bf16.msra.mxu0 0
  %937 = vmatprep.subr.bf16.mxu0 0
  %938 = vmatpush1.bf16.msra.mxu0 0
  %939 = vmatprep.subr.bf16.mxu0 0
  %940 = vmatpush1.bf16.msra.mxu0 0
  %941 = vmatprep.subr.bf16.mxu0 0
  %942 = vmatpush1.bf16.msra.mxu0 0
  %943 = vmatprep.subr.bf16.mxu0 0
  %944 = vmatpush1.bf16.msra.mxu0 0
  %945 = vmatprep.subr.bf16.mxu0 0
  %946 = vmatpush1.bf16.msra.mxu0 0
  %947 = vmatprep.subr.bf16.mxu0 0
  %948 = vmatpush1.bf16.msra.mxu0 0
  %949 = vmatprep.subr.bf16.mxu0 0
  %950 = vmatpush1.bf16.msra.mxu0 0
  %951 = vmatprep.subr.bf16.mxu0 0
  %952 = vmatpush1.bf16.msra.mxu0 0
  %953 = vmatprep.subr.bf16.mxu0 0
  %954 = vmatpush1.bf16.msra.mxu0 0
  %955 = vmatprep.subr.bf16.mxu0 0
  %956 = vmatpush1.bf16.msra.mxu0 0
  %957 = vmatprep.subr.bf16.mxu0 0
  %958 = vmatpush1.bf16.msra.mxu0 0
  %959 = vmatprep.subr.bf16.mxu0 0
  %960 = vmatpush1.bf16.msra.mxu0 0
  %961 = vmatprep.mubr.bf16.mxu0 0
  %962 = vmatmul.mubr.bf16.gmra.mrb[0].mxu0 %v927
  %v963 = vpop.f32.mrb[0].mxu0
  %v964 = vadd.f32 0.0, %v963
  %v965 = vpop.f32.mrb[0].mxu0
  %v966 = vpop.f32.mrb[0].mxu0
  %v967 = vadd.f32 0.0, %v966
  %v968 = vpop.f32.mrb[0].mxu0
  %969 = vdwg.mxu0
  %v970 = vadd.f32 %v920, %v964
  %v971 = vadd.f32 %v921, %v967
  %v972 = vxor.u32 %v970, 2147483648
  %v973 = vxor.u32 %v971, 2147483648
  %v974 = vmul.f32 %v972, 1.442695
  %v975 = vpow.pop %v974
  %v976 = vmul.f32 %v973, 1.442695
  %v977 = vpow.pop %v976
  %v978 = vadd.f32 %v975, 1.0
  %v979 = vadd.f32 %v977, 1.0
  %v980 = vrcp.pop %v978
  %v981 = vmul.f32 1.0, %v980
  %v982 = vrcp.pop %v979
  %v983 = vmul.f32 1.0, %v982
  %v984 = vadd.f32 %v964, %v412
  %v985 = vadd.f32 %v967, %v412
  %988 = vrot.lane.b32.xlu0 %v984, 64
  %v989 = vpop.permute.xlu0 %988
  %990 = vrot.lane.b32.xlu0 %v985, 64
  %v991 = vpop.permute.xlu0 %990
  %v994 = vmul.f32 %v981, %v989
  %v995 = vmul.f32 %v983, %v991
  %998 = vrot.lane.b32.xlu0 %v994, 64
  %v999 = vpop.permute.xlu0 %998
  %1000 = vrot.lane.b32.xlu0 %v995, 64
  %v1001 = vpop.permute.xlu0 %1000
  %v1004 = vadd.f32 %v920, %v999
  %v1005 = vadd.f32 %v921, %v1001
  %v1006 = vtanh.pop %v1004
  %v1007 = vtanh.pop %v1005
  %v1008 = vsub.f32 1.0, %v981
  %v1009 = vsub.f32 1.0, %v983
  %1012 = vrot.lane.b32.xlu0 %v1006, 96
  %v1013 = vpop.permute.xlu0 %1012
  %1014 = vrot.lane.b32.xlu0 %v1007, 96
  %v1015 = vpop.permute.xlu0 %1014
  %v1018 = vmul.f32 %v1008, %v1013
  %v1019 = vmul.f32 %v1009, %v1015
  %v1020 = vmul.f32 %v981, %v908
  %v1021 = vmul.f32 %v983, %v909
  %v1022 = vadd.f32 %v1018, %v1020
  %v1023 = vadd.f32 %v1019, %v1021
  %1026 = vrot.lane.b32.xlu0 %v1022, 96
  %v1027 = vpop.permute.xlu0 %1026
  %1028 = vrot.lane.b32.xlu0 %v1023, 96
  %v1029 = vpop.permute.xlu0 %1028
  %1032 = vst.msk [vmem:[#allocation3 + $0x60] sm:$0xff] %vm140, %v1027
  %1033 = vst.msk [vmem:[#allocation3 + $0x68] sm:$0xff] %vm140, %v1029
  %v1034 = vld [vmem:[#allocation2 + $0x70] sm:$0xff]
  %v1035 = vld [vmem:[#allocation2 + $0x78] sm:$0xff]
  %v1036 = vpack.c.bf16 %v1023, %v1022
  %1038 = vrot.lane.b32.xlu0 %v1036, 96
  %v1039 = vpop.permute.xlu0 %1038
  %v1041 = vsel %vm140, %v1039, 0
  %1043 = vmatprep.subr.bf16.mxu0 0
  %1044 = vmatpush1.bf16.msra.mxu0 %v349
  %1045 = vmatprep.subr.bf16.mxu0 0
  %1046 = vmatpush1.bf16.msra.mxu0 %v350
  %1047 = vmatprep.subr.bf16.mxu0 0
  %1048 = vmatpush1.bf16.msra.mxu0 0
  %1049 = vmatprep.subr.bf16.mxu0 0
  %1050 = vmatpush1.bf16.msra.mxu0 0
  %1051 = vmatprep.subr.bf16.mxu0 0
  %1052 = vmatpush1.bf16.msra.mxu0 0
  %1053 = vmatprep.subr.bf16.mxu0 0
  %1054 = vmatpush1.bf16.msra.mxu0 0
  %1055 = vmatprep.subr.bf16.mxu0 0
  %1056 = vmatpush1.bf16.msra.mxu0 0
  %1057 = vmatprep.subr.bf16.mxu0 0
  %1058 = vmatpush1.bf16.msra.mxu0 0
  %1059 = vmatprep.subr.bf16.mxu0 0
  %1060 = vmatpush1.bf16.msra.mxu0 0
  %1061 = vmatprep.subr.bf16.mxu0 0
  %1062 = vmatpush1.bf16.msra.mxu0 0
  %1063 = vmatprep.subr.bf16.mxu0 0
  %1064 = vmatpush1.bf16.msra.mxu0 0
  %1065 = vmatprep.subr.bf16.mxu0 0
  %1066 = vmatpush1.bf16.msra.mxu0 0
  %1067 = vmatprep.subr.bf16.mxu0 0
  %1068 = vmatpush1.bf16.msra.mxu0 0
  %1069 = vmatprep.subr.bf16.mxu0 0
  %1070 = vmatpush1.bf16.msra.mxu0 0
  %1071 = vmatprep.subr.bf16.mxu0 0
  %1072 = vmatpush1.bf16.msra.mxu0 0
  %1073 = vmatprep.subr.bf16.mxu0 0
  %1074 = vmatpush1.bf16.msra.mxu0 0
  %1075 = vmatprep.mubr.bf16.mxu0 0
  %1076 = vmatmul.mubr.bf16.gmra.mrb[0].mxu0 %v1041
  %v1077 = vpop.f32.mrb[0].mxu0
  %v1078 = vadd.f32 0.0, %v1077
  %v1079 = vpop.f32.mrb[0].mxu0
  %v1080 = vpop.f32.mrb[0].mxu0
  %v1081 = vadd.f32 0.0, %v1080
  %v1082 = vpop.f32.mrb[0].mxu0
  %1083 = vdwg.mxu0
  %v1084 = vadd.f32 %v1034, %v1078
  %v1085 = vadd.f32 %v1035, %v1081
  %v1086 = vxor.u32 %v1084, 2147483648
  %v1087 = vxor.u32 %v1085, 2147483648
  %v1088 = vmul.f32 %v1086, 1.442695
  %v1089 = vpow.pop %v1088
  %v1090 = vmul.f32 %v1087, 1.442695
  %v1091 = vpow.pop %v1090
  %v1092 = vadd.f32 %v1089, 1.0
  %v1093 = vadd.f32 %v1091, 1.0
  %v1094 = vrcp.pop %v1092
  %v1095 = vmul.f32 1.0, %v1094
  %v1096 = vrcp.pop %v1093
  %v1097 = vmul.f32 1.0, %v1096
  %v1098 = vadd.f32 %v1078, %v412
  %v1099 = vadd.f32 %v1081, %v412
  %1102 = vrot.lane.b32.xlu0 %v1098, 64
  %v1103 = vpop.permute.xlu0 %1102
  %1104 = vrot.lane.b32.xlu0 %v1099, 64
  %v1105 = vpop.permute.xlu0 %1104
  %v1108 = vmul.f32 %v1095, %v1103
  %v1109 = vmul.f32 %v1097, %v1105
  %1112 = vrot.lane.b32.xlu0 %v1108, 64
  %v1113 = vpop.permute.xlu0 %1112
  %1114 = vrot.lane.b32.xlu0 %v1109, 64
  %v1115 = vpop.permute.xlu0 %1114
  %v1118 = vadd.f32 %v1034, %v1113
  %v1119 = vadd.f32 %v1035, %v1115
  %v1120 = vtanh.pop %v1118
  %v1121 = vtanh.pop %v1119
  %v1122 = vsub.f32 1.0, %v1095
  %v1123 = vsub.f32 1.0, %v1097
  %1126 = vrot.lane.b32.xlu0 %v1120, 96
  %v1127 = vpop.permute.xlu0 %1126
  %1128 = vrot.lane.b32.xlu0 %v1121, 96
  %v1129 = vpop.permute.xlu0 %1128
  %v1132 = vmul.f32 %v1122, %v1127
  %v1133 = vmul.f32 %v1123, %v1129
  %v1134 = vmul.f32 %v1095, %v1022
  %v1135 = vmul.f32 %v1097, %v1023
  %v1136 = vadd.f32 %v1132, %v1134
  %v1137 = vadd.f32 %v1133, %v1135
  %1140 = vrot.lane.b32.xlu0 %v1136, 96
  %v1141 = vpop.permute.xlu0 %1140
  %1142 = vrot.lane.b32.xlu0 %v1137, 96
  %v1143 = vpop.permute.xlu0 %1142
  %1146 = vst.msk [vmem:[#allocation3 + $0x70] sm:$0xff] %vm140, %v1141
  %1147 = vst.msk [vmem:[#allocation3 + $0x78] sm:$0xff] %vm140, %v1143
  %v1148 = vld [vmem:[#allocation3] sm:$0xff]
  %v1149 = vld [vmem:[#allocation3 + $0x8] sm:$0xff]
  %v1150 = vld [vmem:[#allocation3 + $0x10] sm:$0xff]
  %v1151 = vld [vmem:[#allocation3 + $0x18] sm:$0xff]
  %v1152 = vld [vmem:[#allocation3 + $0x20] sm:$0xff]
  %v1153 = vld [vmem:[#allocation3 + $0x28] sm:$0xff]
  %v1154 = vld [vmem:[#allocation3 + $0x30] sm:$0xff]
  %v1155 = vld [vmem:[#allocation3 + $0x38] sm:$0xff]
  %v1156 = vld [vmem:[#allocation3 + $0x40] sm:$0xff]
  %v1157 = vld [vmem:[#allocation3 + $0x48] sm:$0xff]
  %v1158 = vld [vmem:[#allocation3 + $0x50] sm:$0xff]
  %v1159 = vld [vmem:[#allocation3 + $0x58] sm:$0xff]
  %v1160 = vld [vmem:[#allocation3 + $0x60] sm:$0xff]
  %v1161 = vld [vmem:[#allocation3 + $0x68] sm:$0xff]
  %v1162 = vld [vmem:[#allocation3 + $0x70] sm:$0xff]
  %v1163 = vld [vmem:[#allocation3 + $0x78] sm:$0xff]
  %v1164 = vpack.c.bf16 %v1149, %v1148
  %v1165 = vpack.c.bf16 %v1151, %v1150
  %v1166 = vpack.c.bf16 %v1153, %v1152
  %v1167 = vpack.c.bf16 %v1155, %v1154
  %v1168 = vpack.c.bf16 %v1157, %v1156
  %v1169 = vpack.c.bf16 %v1159, %v1158
  %v1170 = vpack.c.bf16 %v1161, %v1160
  %v1171 = vpack.c.bf16 %v1163, %v1162
  %v1176 = vunpack.c.l.b16 %v67
  %v1177 = vunpack.c.l.b16 %v68
  %v1178 = vunpack.c.l.b16 %v69
  %v1179 = vunpack.c.l.b16 %v70
  %v1180 = vpack.c.b16 %v1177, %v1176
  %v1181 = vpack.c.b16 %v1179, %v1178
  %v1185 = vsel %vm140, %v1164, 0
  %v1188 = vsel %vm140, %v1165, 0
  %v1191 = vsel %vm140, %v1166, 0
  %v1194 = vsel %vm140, %v1167, 0
  %v1197 = vsel %vm140, %v1168, 0
  %v1200 = vsel %vm140, %v1169, 0
  %v1203 = vsel %vm140, %v1170, 0
  %v1206 = vsel %vm140, %v1171, 0
  %1208 = vmatprep.subr.bf16.mxu0 0
  %1209 = vmatpush1.bf16.msra.mxu0 %v1180
  %1210 = vmatprep.subr.bf16.mxu0 0
  %1211 = vmatpush1.bf16.msra.mxu0 %v1181
  %1212 = vmatprep.subr.bf16.mxu0 0
  %1213 = vmatpush1.bf16.msra.mxu0 0
  %1214 = vmatprep.subr.bf16.mxu0 0
  %1215 = vmatpush1.bf16.msra.mxu0 0
  %1216 = vmatprep.subr.bf16.mxu0 0
  %1217 = vmatpush1.bf16.msra.mxu0 0
  %1218 = vmatprep.subr.bf16.mxu0 0
  %1219 = vmatpush1.bf16.msra.mxu0 0
  %1220 = vmatprep.subr.bf16.mxu0 0
  %1221 = vmatpush1.bf16.msra.mxu0 0
  %1222 = vmatprep.subr.bf16.mxu0 0
  %1223 = vmatpush1.bf16.msra.mxu0 0
  %1224 = vmatprep.subr.bf16.mxu0 0
  %1225 = vmatpush1.bf16.msra.mxu0 0
  %1226 = vmatprep.subr.bf16.mxu0 0
  %1227 = vmatpush1.bf16.msra.mxu0 0
  %1228 = vmatprep.subr.bf16.mxu0 0
  %1229 = vmatpush1.bf16.msra.mxu0 0
  %1230 = vmatprep.subr.bf16.mxu0 0
  %1231 = vmatpush1.bf16.msra.mxu0 0
  %1232 = vmatprep.subr.bf16.mxu0 0
  %1233 = vmatpush1.bf16.msra.mxu0 0
  %1234 = vmatprep.subr.bf16.mxu0 0
  %1235 = vmatpush1.bf16.msra.mxu0 0
  %1236 = vmatprep.subr.bf16.mxu0 0
  %1237 = vmatpush1.bf16.msra.mxu0 0
  %1238 = vmatprep.subr.bf16.mxu0 0
  %1239 = vmatpush1.bf16.msra.mxu0 0
  %1240 = vmatprep.mubr.bf16.mxu0 0
  %1241 = vmatmul.mubr.bf16.gmra.mrb[0].mxu0 %v1185
  %v1242 = vpop.f32.mrb[0].mxu0
  %v1243 = vadd.f32 0.0, %v1242
  %v1244 = vpop.f32.mrb[0].mxu0
  %v1245 = vpop.f32.mrb[0].mxu0
  %v1246 = vadd.f32 0.0, %v1245
  %v1247 = vpop.f32.mrb[0].mxu0
  %1248 = vmatprep.mubr.bf16.mxu0 0
  %1249 = vmatmul.mubr.bf16.gmra.mrb[0].mxu0 %v1188
  %v1250 = vpop.f32.mrb[0].mxu0
  %v1251 = vadd.f32 0.0, %v1250
  %v1252 = vpop.f32.mrb[0].mxu0
  %v1253 = vpop.f32.mrb[0].mxu0
  %v1254 = vadd.f32 0.0, %v1253
  %v1255 = vpop.f32.mrb[0].mxu0
  %1256 = vmatprep.mubr.bf16.mxu0 0
  %1257 = vmatmul.mubr.bf16.gmra.mrb[0].mxu0 %v1191
  %v1258 = vpop.f32.mrb[0].mxu0
  %v1259 = vadd.f32 0.0, %v1258
  %v1260 = vpop.f32.mrb[0].mxu0
  %v1261 = vpop.f32.mrb[0].mxu0
  %v1262 = vadd.f32 0.0, %v1261
  %v1263 = vpop.f32.mrb[0].mxu0
  %1264 = vmatprep.mubr.bf16.mxu0 0
  %1265 = vmatmul.mubr.bf16.gmra.mrb[0].mxu0 %v1194
  %v1266 = vpop.f32.mrb[0].mxu0
  %v1267 = vadd.f32 0.0, %v1266
  %v1268 = vpop.f32.mrb[0].mxu0
  %v1269 = vpop.f32.mrb[0].mxu0
  %v1270 = vadd.f32 0.0, %v1269
  %v1271 = vpop.f32.mrb[0].mxu0
  %1272 = vmatprep.mubr.bf16.mxu0 0
  %1273 = vmatmul.mubr.bf16.gmra.mrb[0].mxu0 %v1197
  %v1274 = vpop.f32.mrb[0].mxu0
  %v1275 = vadd.f32 0.0, %v1274
  %v1276 = vpop.f32.mrb[0].mxu0
  %v1277 = vpop.f32.mrb[0].mxu0
  %v1278 = vadd.f32 0.0, %v1277
  %v1279 = vpop.f32.mrb[0].mxu0
  %1280 = vmatprep.mubr.bf16.mxu0 0
  %1281 = vmatmul.mubr.bf16.gmra.mrb[0].mxu0 %v1200
  %v1282 = vpop.f32.mrb[0].mxu0
  %v1283 = vadd.f32 0.0, %v1282
  %v1284 = vpop.f32.mrb[0].mxu0
  %v1285 = vpop.f32.mrb[0].mxu0
  %v1286 = vadd.f32 0.0, %v1285
  %v1287 = vpop.f32.mrb[0].mxu0
  %1288 = vmatprep.mubr.bf16.mxu0 0
  %1289 = vmatmul.mubr.bf16.gmra.mrb[0].mxu0 %v1203
  %v1290 = vpop.f32.mrb[0].mxu0
  %v1291 = vadd.f32 0.0, %v1290
  %v1292 = vpop.f32.mrb[0].mxu0
  %v1293 = vpop.f32.mrb[0].mxu0
  %v1294 = vadd.f32 0.0, %v1293
  %v1295 = vpop.f32.mrb[0].mxu0
  %1296 = vmatprep.mubr.bf16.mxu0 0
  %1297 = vmatmul.mubr.bf16.gmra.mrb[0].mxu0 %v1206
  %v1298 = vpop.f32.mrb[0].mxu0
  %v1299 = vadd.f32 0.0, %v1298
  %v1300 = vpop.f32.mrb[0].mxu0
  %v1301 = vpop.f32.mrb[0].mxu0
  %v1302 = vadd.f32 0.0, %v1301
  %v1303 = vpop.f32.mrb[0].mxu0
  %1304 = vdwg.mxu0
  %v1305 = vld [vmem:[#allocation3] sm:$0xff]
  %v1306 = vld [vmem:[#allocation3 + $0x8] sm:$0xff]
  %v1307 = vld [vmem:[#allocation3 + $0x10] sm:$0xff]
  %v1308 = vld [vmem:[#allocation3 + $0x18] sm:$0xff]
  %v1309 = vadd.f32 %v1305, %v1307
  %v1310 = vadd.f32 %v1306, %v1308
  %v1311 = vld [vmem:[#allocation3 + $0x20] sm:$0xff]
  %v1312 = vld [vmem:[#allocation3 + $0x28] sm:$0xff]
  %v1313 = vadd.f32 %v1309, %v1311
  %v1314 = vadd.f32 %v1310, %v1312
  %v1315 = vld [vmem:[#allocation3 + $0x30] sm:$0xff]
  %v1316 = vld [vmem:[#allocation3 + $0x38] sm:$0xff]
  %v1317 = vadd.f32 %v1313, %v1315
  %v1318 = vadd.f32 %v1314, %v1316
  %v1319 = vld [vmem:[#allocation3 + $0x40] sm:$0xff]
  %v1320 = vld [vmem:[#allocation3 + $0x48] sm:$0xff]
  %v1321 = vadd.f32 %v1317, %v1319
  %v1322 = vadd.f32 %v1318, %v1320
  %v1323 = vld [vmem:[#allocation3 + $0x50] sm:$0xff]
  %v1324 = vld [vmem:[#allocation3 + $0x58] sm:$0xff]
  %v1325 = vadd.f32 %v1321, %v1323
  %v1326 = vadd.f32 %v1322, %v1324
  %v1327 = vld [vmem:[#allocation3 + $0x60] sm:$0xff]
  %v1328 = vld [vmem:[#allocation3 + $0x68] sm:$0xff]
  %v1329 = vadd.f32 %v1325, %v1327
  %v1330 = vadd.f32 %v1326, %v1328
  %v1331 = vadd.f32 %v1329, %v1162
  %v1332 = vadd.f32 %v1330, %v1163
  %v1333 = vmul.f32 %v1331, 0.125
  %v1334 = vmul.f32 %v1332, 0.125
  %v1335 = vpack.c.bf16 %v1137, %v1136
  %v1336 = vpack.c.bf16 %v1334, %v1333
  %v1341 = vunpack.c.l.b16 %v75
  %v1342 = vunpack.c.l.b16 %v76
  %v1343 = vunpack.c.l.b16 %v77
  %v1344 = vunpack.c.l.b16 %v78
  %v1345 = vpack.c.b16 %v1342, %v1341
  %v1346 = vpack.c.b16 %v1344, %v1343
  %v1350 = vsel %vm140, %v1336, 0
  %1352 = vmatprep.subr.bf16.mxu0 0
  %1353 = vmatpush1.bf16.msra.mxu0 %v1345
  %1354 = vmatprep.subr.bf16.mxu0 0
  %1355 = vmatpush1.bf16.msra.mxu0 %v1346
  %1356 = vmatprep.subr.bf16.mxu0 0
  %1357 = vmatpush1.bf16.msra.mxu0 0
  %1358 = vmatprep.subr.bf16.mxu0 0
  %1359 = vmatpush1.bf16.msra.mxu0 0
  %1360 = vmatprep.subr.bf16.mxu0 0
  %1361 = vmatpush1.bf16.msra.mxu0 0
  %1362 = vmatprep.subr.bf16.mxu0 0
  %1363 = vmatpush1.bf16.msra.mxu0 0
  %1364 = vmatprep.subr.bf16.mxu0 0
  %1365 = vmatpush1.bf16.msra.mxu0 0
  %1366 = vmatprep.subr.bf16.mxu0 0
  %1367 = vmatpush1.bf16.msra.mxu0 0
  %1368 = vmatprep.subr.bf16.mxu0 0
  %1369 = vmatpush1.bf16.msra.mxu0 0
  %1370 = vmatprep.subr.bf16.mxu0 0
  %1371 = vmatpush1.bf16.msra.mxu0 0
  %1372 = vmatprep.subr.bf16.mxu0 0
  %1373 = vmatpush1.bf16.msra.mxu0 0
  %1374 = vmatprep.subr.bf16.mxu0 0
  %1375 = vmatpush1.bf16.msra.mxu0 0
  %1376 = vmatprep.subr.bf16.mxu0 0
  %1377 = vmatpush1.bf16.msra.mxu0 0
  %1378 = vmatprep.subr.bf16.mxu0 0
  %1379 = vmatpush1.bf16.msra.mxu0 0
  %1380 = vmatprep.subr.bf16.mxu0 0
  %1381 = vmatpush1.bf16.msra.mxu0 0
  %1382 = vmatprep.subr.bf16.mxu0 0
  %1383 = vmatpush1.bf16.msra.mxu0 0
  %1384 = vmatprep.mubr.bf16.mxu0 0
  %1385 = vmatmul.mubr.bf16.gmra.mrb[0].mxu0 %v1350
  %v1386 = vpop.f32.mrb[0].mxu0
  %v1387 = vadd.f32 0.0, %v1386
  %v1388 = vpop.f32.mrb[0].mxu0
  %v1389 = vpop.f32.mrb[0].mxu0
  %v1390 = vadd.f32 0.0, %v1389
  %v1391 = vpop.f32.mrb[0].mxu0
  %1392 = vdwg.mxu0
  %1394 = vrot.lane.b32.xlu0 %v1335, 96
  %v1395 = vpop.permute.xlu0 %1394
  %v1400 = vunpack.c.l.b16 %v71
  %v1401 = vunpack.c.l.b16 %v72
  %v1402 = vunpack.c.l.b16 %v73
  %v1403 = vunpack.c.l.b16 %v74
  %v1404 = vpack.c.b16 %v1401, %v1400
  %v1405 = vpack.c.b16 %v1403, %v1402
  %v1409 = vsel %vm140, %v1395, 0
  %1411 = vmatprep.subr.bf16.mxu0 0
  %1412 = vmatpush1.bf16.msra.mxu0 %v1404
  %1413 = vmatprep.subr.bf16.mxu0 0
  %1414 = vmatpush1.bf16.msra.mxu0 %v1405
  %1415 = vmatprep.subr.bf16.mxu0 0
  %1416 = vmatpush1.bf16.msra.mxu0 0
  %1417 = vmatprep.subr.bf16.mxu0 0
  %1418 = vmatpush1.bf16.msra.mxu0 0
  %1419 = vmatprep.subr.bf16.mxu0 0
  %1420 = vmatpush1.bf16.msra.mxu0 0
  %1421 = vmatprep.subr.bf16.mxu0 0
  %1422 = vmatpush1.bf16.msra.mxu0 0
  %1423 = vmatprep.subr.bf16.mxu0 0
  %1424 = vmatpush1.bf16.msra.mxu0 0
  %1425 = vmatprep.subr.bf16.mxu0 0
  %1426 = vmatpush1.bf16.msra.mxu0 0
  %1427 = vmatprep.subr.bf16.mxu0 0
  %1428 = vmatpush1.bf16.msra.mxu0 0
  %1429 = vmatprep.subr.bf16.mxu0 0
  %1430 = vmatpush1.bf16.msra.mxu0 0
  %1431 = vmatprep.subr.bf16.mxu0 0
  %1432 = vmatpush1.bf16.msra.mxu0 0
  %1433 = vmatprep.subr.bf16.mxu0 0
  %1434 = vmatpush1.bf16.msra.mxu0 0
  %1435 = vmatprep.subr.bf16.mxu0 0
  %1436 = vmatpush1.bf16.msra.mxu0 0
  %1437 = vmatprep.subr.bf16.mxu0 0
  %1438 = vmatpush1.bf16.msra.mxu0 0
  %1439 = vmatprep.subr.bf16.mxu0 0
  %1440 = vmatpush1.bf16.msra.mxu0 0
  %1441 = vmatprep.subr.bf16.mxu0 0
  %1442 = vmatpush1.bf16.msra.mxu0 0
  %1443 = vmatprep.mubr.bf16.mxu0 0
  %1444 = vmatmul.mubr.bf16.gmra.mrb[0].mxu0 %v1409
  %v1445 = vpop.f32.mrb[0].mxu0
  %v1446 = vadd.f32 %v1387, %v1445
  %v1447 = vpop.f32.mrb[0].mxu0
  %v1448 = vpop.f32.mrb[0].mxu0
  %v1449 = vadd.f32 %v1390, %v1448
  %v1450 = vpop.f32.mrb[0].mxu0
  %1451 = vdwg.mxu0
  %v1453 = vlaneseq
  %v1454 = vshrl.u32 %v1453, 7
  %v1455 = vsub.s32 0, %v1454
  %v1456 = vrot.slane %v79, %v1455
  %v1458 = vadd.f32 %v1446, %v1456
  %v1459 = vadd.f32 %v1449, %v1456
  %v1460 = vadd.f32 %v1243, %v1458
  %v1461 = vadd.f32 %v1246, %v1459
  %v1462 = vadd.f32 %v1251, %v1458
  %v1463 = vadd.f32 %v1254, %v1459
  %v1464 = vadd.f32 %v1259, %v1458
  %v1465 = vadd.f32 %v1262, %v1459
  %v1466 = vadd.f32 %v1267, %v1458
  %v1467 = vadd.f32 %v1270, %v1459
  %v1468 = vadd.f32 %v1275, %v1458
  %v1469 = vadd.f32 %v1278, %v1459
  %v1470 = vadd.f32 %v1283, %v1458
  %v1471 = vadd.f32 %v1286, %v1459
  %v1472 = vadd.f32 %v1291, %v1458
  %v1473 = vadd.f32 %v1294, %v1459
  %v1474 = vadd.f32 %v1299, %v1458
  %v1475 = vadd.f32 %v1302, %v1459
  %vm1476 = vcmp.ge.f32.partialorder %v1460, 0.0
  %vm1477 = vcmp.ge.f32.partialorder %v1461, 0.0
  %vm1478 = vcmp.ge.f32.partialorder %v1462, 0.0
  %vm1479 = vcmp.ge.f32.partialorder %v1463, 0.0
  %vm1480 = vcmp.ge.f32.partialorder %v1464, 0.0
  %vm1481 = vcmp.ge.f32.partialorder %v1465, 0.0
  %vm1482 = vcmp.ge.f32.partialorder %v1466, 0.0
  %vm1483 = vcmp.ge.f32.partialorder %v1467, 0.0
  %vm1484 = vcmp.ge.f32.partialorder %v1468, 0.0
  %vm1485 = vcmp.ge.f32.partialorder %v1469, 0.0
  %vm1486 = vcmp.ge.f32.partialorder %v1470, 0.0
  %vm1487 = vcmp.ge.f32.partialorder %v1471, 0.0
  %vm1488 = vcmp.ge.f32.partialorder %v1472, 0.0
  %vm1489 = vcmp.ge.f32.partialorder %v1473, 0.0
  %vm1490 = vcmp.ge.f32.partialorder %v1474, 0.0
  %vm1491 = vcmp.ge.f32.partialorder %v1475, 0.0
  %v1492 = vmul.f32 %v1460, 0.01
  %v1493 = vmul.f32 %v1461, 0.01
  %v1494 = vmul.f32 %v1462, 0.01
  %v1495 = vmul.f32 %v1463, 0.01
  %v1496 = vmul.f32 %v1464, 0.01
  %v1497 = vmul.f32 %v1465, 0.01
  %v1498 = vmul.f32 %v1466, 0.01
  %v1499 = vmul.f32 %v1467, 0.01
  %v1500 = vmul.f32 %v1468, 0.01
  %v1501 = vmul.f32 %v1469, 0.01
  %v1502 = vmul.f32 %v1470, 0.01
  %v1503 = vmul.f32 %v1471, 0.01
  %v1504 = vmul.f32 %v1472, 0.01
  %v1505 = vmul.f32 %v1473, 0.01
  %v1506 = vmul.f32 %v1474, 0.01
  %v1507 = vmul.f32 %v1475, 0.01
  %v1508 = vsel %vm1476, %v1460, %v1492
  %v1509 = vsel %vm1477, %v1461, %v1493
  %v1510 = vsel %vm1478, %v1462, %v1494
  %v1511 = vsel %vm1479, %v1463, %v1495
  %v1512 = vsel %vm1480, %v1464, %v1496
  %v1513 = vsel %vm1481, %v1465, %v1497
  %v1514 = vsel %vm1482, %v1466, %v1498
  %v1515 = vsel %vm1483, %v1467, %v1499
  %v1516 = vsel %vm1484, %v1468, %v1500
  %v1517 = vsel %vm1485, %v1469, %v1501
  %v1518 = vsel %vm1486, %v1470, %v1502
  %v1519 = vsel %vm1487, %v1471, %v1503
  %v1520 = vsel %vm1488, %v1472, %v1504
  %v1521 = vsel %vm1489, %v1473, %v1505
  %v1522 = vsel %vm1490, %v1474, %v1506
  %v1523 = vsel %vm1491, %v1475, %v1507
  %v1525 = vlaneseq
  %v1526 = vshrl.u32 %v1525, 7
  %v1527 = vsub.s32 0, %v1526
  %v1528 = vrot.slane %v80, %v1527
  %v1530 = vmul.f32 %v1508, %v1528
  %v1531 = vmul.f32 %v1509, %v1528
  %v1532 = vmul.f32 %v1510, %v1528
  %v1533 = vmul.f32 %v1511, %v1528
  %v1534 = vmul.f32 %v1512, %v1528
  %v1535 = vmul.f32 %v1513, %v1528
  %v1536 = vmul.f32 %v1514, %v1528
  %v1537 = vmul.f32 %v1515, %v1528
  %v1538 = vmul.f32 %v1516, %v1528
  %v1539 = vmul.f32 %v1517, %v1528
  %v1540 = vmul.f32 %v1518, %v1528
  %v1541 = vmul.f32 %v1519, %v1528
  %v1542 = vmul.f32 %v1520, %v1528
  %v1543 = vmul.f32 %v1521, %v1528
  %v1544 = vmul.f32 %v1522, %v1528
  %v1545 = vmul.f32 %v1523, %v1528
  %v1546 = vsel %vm140, %v1530, 0.0
  %1547 = vadd.xlane.f32.xlu0 %v1546
  %v1548 = vpop.xlane.xlu0 %1547
  %v1549 = vsel %vm140, %v1531, 0.0
  %1550 = vadd.xlane.f32.xlu0 %v1549
  %v1551 = vpop.xlane.xlu0 %1550
  %v1552 = vsel %vm140, %v1532, 0.0
  %1553 = vadd.xlane.f32.xlu0 %v1552
  %v1554 = vpop.xlane.xlu0 %1553
  %v1555 = vsel %vm140, %v1533, 0.0
  %1556 = vadd.xlane.f32.xlu0 %v1555
  %v1557 = vpop.xlane.xlu0 %1556
  %v1558 = vsel %vm140, %v1534, 0.0
  %1559 = vadd.xlane.f32.xlu0 %v1558
  %v1560 = vpop.xlane.xlu0 %1559
  %v1561 = vsel %vm140, %v1535, 0.0
  %1562 = vadd.xlane.f32.xlu0 %v1561
  %v1563 = vpop.xlane.xlu0 %1562
  %v1564 = vsel %vm140, %v1536, 0.0
  %1565 = vadd.xlane.f32.xlu0 %v1564
  %v1566 = vpop.xlane.xlu0 %1565
  %v1567 = vsel %vm140, %v1537, 0.0
  %1568 = vadd.xlane.f32.xlu0 %v1567
  %v1569 = vpop.xlane.xlu0 %1568
  %v1570 = vsel %vm140, %v1538, 0.0
  %1571 = vadd.xlane.f32.xlu0 %v1570
  %v1572 = vpop.xlane.xlu0 %1571
  %v1573 = vsel %vm140, %v1539, 0.0
  %1574 = vadd.xlane.f32.xlu0 %v1573
  %v1575 = vpop.xlane.xlu0 %1574
  %v1576 = vsel %vm140, %v1540, 0.0
  %1577 = vadd.xlane.f32.xlu0 %v1576
  %v1578 = vpop.xlane.xlu0 %1577
  %v1579 = vsel %vm140, %v1541, 0.0
  %1580 = vadd.xlane.f32.xlu0 %v1579
  %v1581 = vpop.xlane.xlu0 %1580
  %v1582 = vsel %vm140, %v1542, 0.0
  %1583 = vadd.xlane.f32.xlu0 %v1582
  %v1584 = vpop.xlane.xlu0 %1583
  %v1585 = vsel %vm140, %v1543, 0.0
  %1586 = vadd.xlane.f32.xlu0 %v1585
  %v1587 = vpop.xlane.xlu0 %1586
  %v1588 = vsel %vm140, %v1544, 0.0
  %1589 = vadd.xlane.f32.xlu0 %v1588
  %v1590 = vpop.xlane.xlu0 %1589
  %v1591 = vsel %vm140, %v1545, 0.0
  %1592 = vadd.xlane.f32.xlu0 %v1591
  %v1593 = vpop.xlane.xlu0 %1592
  %v1595 = vlaneseq
  %v1596 = vshrl.u32 %v1595, 7
  %v1597 = vsub.s32 0, %v1596
  %v1598 = vrot.slane %v81, %v1597
  %v1600 = vadd.f32 %v1548, %v1598
  %v1601 = vadd.f32 %v1551, %v1598
  %v1602 = vadd.f32 %v1554, %v1598
  %v1603 = vadd.f32 %v1557, %v1598
  %v1604 = vadd.f32 %v1560, %v1598
  %v1605 = vadd.f32 %v1563, %v1598
  %v1606 = vadd.f32 %v1566, %v1598
  %v1607 = vadd.f32 %v1569, %v1598
  %v1608 = vadd.f32 %v1572, %v1598
  %v1609 = vadd.f32 %v1575, %v1598
  %v1610 = vadd.f32 %v1578, %v1598
  %v1611 = vadd.f32 %v1581, %v1598
  %v1612 = vadd.f32 %v1584, %v1598
  %v1613 = vadd.f32 %v1587, %v1598
  %v1614 = vadd.f32 %v1590, %v1598
  %v1615 = vadd.f32 %v1593, %v1598
  %v1616 = vmax.f32 %v1600, %v1602
  %v1617 = vmax.f32 %v1601, %v1603
  %v1618 = vmax.f32 %v1616, %v1604
  %v1619 = vmax.f32 %v1617, %v1605
  %v1620 = vmax.f32 %v1618, %v1606
  %v1621 = vmax.f32 %v1619, %v1607
  %v1622 = vmax.f32 %v1620, %v1608
  %v1623 = vmax.f32 %v1621, %v1609
  %v1624 = vmax.f32 %v1622, %v1610
  %v1625 = vmax.f32 %v1623, %v1611
  %v1626 = vmax.f32 %v1624, %v1612
  %v1627 = vmax.f32 %v1625, %v1613
  %v1628 = vmax.f32 %v1626, %v1614
  %v1629 = vmax.f32 %v1627, %v1615
  %v1630 = vsub.f32 %v1600, %v1628
  %v1631 = vsub.f32 %v1601, %v1629
  %v1632 = vsub.f32 %v1602, %v1628
  %v1633 = vsub.f32 %v1603, %v1629
  %v1634 = vsub.f32 %v1604, %v1628
  %v1635 = vsub.f32 %v1605, %v1629
  %v1636 = vsub.f32 %v1606, %v1628
  %v1637 = vsub.f32 %v1607, %v1629
  %v1638 = vsub.f32 %v1608, %v1628
  %v1639 = vsub.f32 %v1609, %v1629
  %v1640 = vsub.f32 %v1610, %v1628
  %v1641 = vsub.f32 %v1611, %v1629
  %v1642 = vsub.f32 %v1612, %v1628
  %v1643 = vsub.f32 %v1613, %v1629
  %v1644 = vsub.f32 %v1614, %v1628
  %v1645 = vsub.f32 %v1615, %v1629
  %v1646 = vmul.f32 %v1630, 1.442695
  %v1647 = vpow.pop %v1646
  %v1648 = vmul.f32 %v1631, 1.442695
  %v1649 = vpow.pop %v1648
  %v1650 = vmul.f32 %v1632, 1.442695
  %v1651 = vpow.pop %v1650
  %v1652 = vmul.f32 %v1633, 1.442695
  %v1653 = vpow.pop %v1652
  %v1654 = vmul.f32 %v1634, 1.442695
  %v1655 = vpow.pop %v1654
  %v1656 = vmul.f32 %v1635, 1.442695
  %v1657 = vpow.pop %v1656
  %v1658 = vmul.f32 %v1636, 1.442695
  %v1659 = vpow.pop %v1658
  %v1660 = vmul.f32 %v1637, 1.442695
  %v1661 = vpow.pop %v1660
  %v1662 = vmul.f32 %v1638, 1.442695
  %v1663 = vpow.pop %v1662
  %v1664 = vmul.f32 %v1639, 1.442695
  %v1665 = vpow.pop %v1664
  %v1666 = vmul.f32 %v1640, 1.442695
  %v1667 = vpow.pop %v1666
  %v1668 = vmul.f32 %v1641, 1.442695
  %v1669 = vpow.pop %v1668
  %v1670 = vmul.f32 %v1642, 1.442695
  %v1671 = vpow.pop %v1670
  %v1672 = vmul.f32 %v1643, 1.442695
  %v1673 = vpow.pop %v1672
  %v1674 = vmul.f32 %v1644, 1.442695
  %v1675 = vpow.pop %v1674
  %v1676 = vmul.f32 %v1645, 1.442695
  %v1677 = vpow.pop %v1676
  %v1678 = vadd.f32 %v1647, %v1651
  %v1679 = vadd.f32 %v1649, %v1653
  %v1680 = vadd.f32 %v1678, %v1655
  %v1681 = vadd.f32 %v1679, %v1657
  %v1682 = vadd.f32 %v1680, %v1659
  %v1683 = vadd.f32 %v1681, %v1661
  %v1684 = vadd.f32 %v1682, %v1663
  %v1685 = vadd.f32 %v1683, %v1665
  %v1686 = vadd.f32 %v1684, %v1667
  %v1687 = vadd.f32 %v1685, %v1669
  %v1688 = vadd.f32 %v1686, %v1671
  %v1689 = vadd.f32 %v1687, %v1673
  %v1690 = vadd.f32 %v1688, %v1675
  %v1691 = vadd.f32 %v1689, %v1677
  %v1692 = vrcp.pop %v1690
  %v1693 = vrcp.pop %v1691
  %v1694 = vmul.f32 %v1647, %v1692
  %v1695 = vmul.f32 %v1649, %v1693
  %v1696 = vmul.f32 %v1651, %v1692
  %v1697 = vmul.f32 %v1653, %v1693
  %v1698 = vmul.f32 %v1655, %v1692
  %v1699 = vmul.f32 %v1657, %v1693
  %v1700 = vmul.f32 %v1659, %v1692
  %v1701 = vmul.f32 %v1661, %v1693
  %v1702 = vmul.f32 %v1663, %v1692
  %v1703 = vmul.f32 %v1665, %v1693
  %v1704 = vmul.f32 %v1667, %v1692
  %v1705 = vmul.f32 %v1669, %v1693
  %v1706 = vmul.f32 %v1671, %v1692
  %v1707 = vmul.f32 %v1673, %v1693
  %v1708 = vmul.f32 %v1675, %v1692
  %v1709 = vmul.f32 %v1677, %v1693
  %1711 = vset.pattern.permute.xlu0 0
  %1712 = vperm.xlu0 %1711, %v1694
  %v1713 = vpop.permute.xlu0 %1712
  %1716 = vset.pattern.permute.xlu0 0
  %1717 = vperm.xlu0 %1716, %v1695
  %v1718 = vpop.permute.xlu0 %1717
  %v1720 = vmul.f32 %v1713, %v1305
  %v1721 = vmul.f32 %v1718, %v1306
  %1723 = vset.pattern.permute.xlu0 0
  %1724 = vperm.xlu0 %1723, %v1696
  %v1725 = vpop.permute.xlu0 %1724
  %1728 = vset.pattern.permute.xlu0 0
  %1729 = vperm.xlu0 %1728, %v1697
  %v1730 = vpop.permute.xlu0 %1729
  %v1732 = vmul.f32 %v1725, %v1307
  %v1733 = vmul.f32 %v1730, %v1308
  %v1734 = vadd.f32 %v1720, %v1732
  %v1735 = vadd.f32 %v1721, %v1733
  %1737 = vset.pattern.permute.xlu0 0
  %1738 = vperm.xlu0 %1737, %v1698
  %v1739 = vpop.permute.xlu0 %1738
  %1742 = vset.pattern.permute.xlu0 0
  %1743 = vperm.xlu0 %1742, %v1699
  %v1744 = vpop.permute.xlu0 %1743
  %v1746 = vmul.f32 %v1739, %v1311
  %v1747 = vmul.f32 %v1744, %v1312
  %v1748 = vadd.f32 %v1734, %v1746
  %v1749 = vadd.f32 %v1735, %v1747
  %1751 = vset.pattern.permute.xlu0 0
  %1752 = vperm.xlu0 %1751, %v1700
  %v1753 = vpop.permute.xlu0 %1752
  %1756 = vset.pattern.permute.xlu0 0
  %1757 = vperm.xlu0 %1756, %v1701
  %v1758 = vpop.permute.xlu0 %1757
  %v1760 = vmul.f32 %v1753, %v1315
  %v1761 = vmul.f32 %v1758, %v1316
  %v1762 = vadd.f32 %v1748, %v1760
  %v1763 = vadd.f32 %v1749, %v1761
  %1765 = vset.pattern.permute.xlu0 0
  %1766 = vperm.xlu0 %1765, %v1702
  %v1767 = vpop.permute.xlu0 %1766
  %1770 = vset.pattern.permute.xlu0 0
  %1771 = vperm.xlu0 %1770, %v1703
  %v1772 = vpop.permute.xlu0 %1771
  %v1774 = vmul.f32 %v1767, %v1319
  %v1775 = vmul.f32 %v1772, %v1320
  %v1776 = vadd.f32 %v1762, %v1774
  %v1777 = vadd.f32 %v1763, %v1775
  %1779 = vset.pattern.permute.xlu0 0
  %1780 = vperm.xlu0 %1779, %v1704
  %v1781 = vpop.permute.xlu0 %1780
  %1784 = vset.pattern.permute.xlu0 0
  %1785 = vperm.xlu0 %1784, %v1705
  %v1786 = vpop.permute.xlu0 %1785
  %v1788 = vmul.f32 %v1781, %v1323
  %v1789 = vmul.f32 %v1786, %v1324
  %v1790 = vadd.f32 %v1776, %v1788
  %v1791 = vadd.f32 %v1777, %v1789
  %1793 = vset.pattern.permute.xlu0 0
  %1794 = vperm.xlu0 %1793, %v1706
  %v1795 = vpop.permute.xlu0 %1794
  %1798 = vset.pattern.permute.xlu0 0
  %1799 = vperm.xlu0 %1798, %v1707
  %v1800 = vpop.permute.xlu0 %1799
  %v1802 = vmul.f32 %v1795, %v1327
  %v1803 = vmul.f32 %v1800, %v1328
  %v1804 = vadd.f32 %v1790, %v1802
  %v1805 = vadd.f32 %v1791, %v1803
  %1807 = vset.pattern.permute.xlu0 0
  %1808 = vperm.xlu0 %1807, %v1708
  %v1809 = vpop.permute.xlu0 %1808
  %1812 = vset.pattern.permute.xlu0 0
  %1813 = vperm.xlu0 %1812, %v1709
  %v1814 = vpop.permute.xlu0 %1813
  %v1816 = vmul.f32 %v1809, %v1162
  %v1817 = vmul.f32 %v1814, %v1163
  %v1818 = vadd.f32 %v1804, %v1816
  %v1819 = vadd.f32 %v1805, %v1817
  %v1820 = vpack.c.bf16 %v1819, %v1818
  %v1822 = vunpack.c.l.b16 %v1820
  %v1823 = vunpack.c.h.b16 %v1820
  %v1824 = vpack.c.b16 %v1822, %v1822
  %v1825 = vpack.c.b16 %v1823, %v1823
  %vm1828 = vcmask 257024
  %1829 = vst.msk [vmem:[%s11] sm:$0xf] %vm1828, %v1824
  %1830 = vst.msk [vmem:[%s11 + $0x4] sm:$0xf] %vm1828, %v1825
  // Predicated region
  $region46: #{double_gru_forward.2} parent=0 // pred_check
    _
  $region47: #{double_gru_forward.2} parent=0 // pred_check_branch
    %1832 = sbr.rel (0) target = $region49
  $region48: #{double_gru_forward.2} parent=0 // pred_region
    _
  $region49: #{double_gru_forward.2} parent=0 // pred_fallthru
    _
  // Predicated region
  $region50: #{double_gru_forward.2} parent=0 // pred_check
    _
  $region51: #{double_gru_forward.2} parent=0 // pred_check_branch
    %1834 = sbr.rel (0) target = $region53
  $region52: #{double_gru_forward.2} parent=0 // pred_region
    _
  $region53: #{double_gru_forward.2} parent=0 // pred_fallthru
    _

</llo_original>
